<compile_context>
chip_gen: v5e
topology: v5e:2x2
jax: 0.10.0
libtpu: 0.0.40
codegen_flags: <defaults>
</compile_context>

<pallas_src>
import functools

import jax
import jax.numpy as jnp
from jax.experimental import pallas as pl
from jax.experimental.pallas import tpu as pltpu


_COUT_PAD = 128      # lane-dense output width
_NEG_SLOPE = 0.2     # LeakyReLU slope
_BN_EPS = 1e-5       # nn.BatchNorm2d default


def _round_up(x, m):
    return ((x + m - 1) // m) * m


@functools.lru_cache(maxsize=None)
def _tpu_kind():
    try:
        return jax.devices()[0].device_kind.lower()
    except Exception:
        return ""


def _k_chunk():
    # MXU contraction depth: 128 on v5e, 256 on v6e/v7x.
    return 128 if "v5" in _tpu_kind() else 256


def _grid_split(n):
    # v7x has 2 TensorCores/chip -> keep a 2-way parallel axis; single-TC
    # chips fold everything into one grid step (batch lives in the M rows).
    kind = _tpu_kind()
    g = 2 if ("v7" in kind or "7x" in kind) else 1
    if g > n or n % g != 0:
        g = 1
    return g


def _fused_conv_kernel(x_ref, w_ref, y_ref, *stats_refs, leaky, sigmoid,
                       want_stats, mb, mb_pad, k_chunk):
    """[LeakyReLU ->] K-stacked conv matmul [-> Sigmoid] (+ masked BN stats).

    x_ref    : (Mblk, Kpad)   bf16  tap-stacked conv patches (batch folded in M)
    w_ref    : (Kpad, 128)    bf16  tap-stacked weights, Cout padded to 128
    y_ref    : (Mblk, 128)    bf16/f32
    stats_ref: (1, 8, 128)    f32   row 0 = sum, row 1 = sum of squares
    """
    kpad = x_ref.shape[-1]
    acc = None
    for k0 in range(0, kpad, k_chunk):
        kc = min(k_chunk, kpad - k0)
        xc = x_ref[:, pl.ds(k0, kc)]
        if leaky:
            # f32 VPU math (v5e has no bf16 VALU); padding zeros stay zero.
            xf = xc.astype(jnp.float32)
            xc = jnp.where(xf > 0, xf, _NEG_SLOPE * xf).astype(jnp.bfloat16)
        part = jnp.dot(xc, w_ref[pl.ds(k0, kc), :],
                       preferred_element_type=jnp.float32)
        acc = part if acc is None else acc + part

    if sigmoid:
        acc = jax.nn.sigmoid(acc)
    y_ref[...] = acc.astype(y_ref.dtype)

    if want_stats:
        # BatchNorm statistics epilogue: masked per-channel sum / sum-of-squares
        # over the valid output rows (the M->Mb_pad padding rows are excluded).
        stats_ref = stats_refs[0]
        rows = jax.lax.broadcasted_iota(jnp.int32, (acc.shape[0], 1), 0)
        valid = ((rows % mb_pad) < mb).astype(jnp.float32)
        ym = acc * valid
        s = jnp.sum(ym, axis=0, keepdims=True)           # (1, 128)
        sq = jnp.sum(ym * acc, axis=0, keepdims=True)    # (1, 128)
        r8 = jax.lax.broadcasted_iota(jnp.int32, (8, acc.shape[-1]), 0)
        stats_ref[0] = (s * (r8 == 0).astype(jnp.float32)
                        + sq * (r8 == 1).astype(jnp.float32))


def _extract_patches(xp, stride):
    """4x4 conv patches of the (already padded) NHWC image, K ordered as
    (kh slowest, kw, Cin fastest) to match `_pack_weight`."""
    _, hp, wp, _ = xp.shape
    ho = (hp - 4) // stride + 1
    wo = (wp - 4) // stride + 1
    cols = []
    for kh in range(4):
        for kw in range(4):
            cols.append(xp[:, kh:kh + stride * (ho - 1) + 1:stride,
                           kw:kw + stride * (wo - 1) + 1:stride, :])
    return jnp.concatenate(cols, axis=-1), ho, wo


def _conv_layer(act, w_packed, cout, *, stride, scale=None, shift=None,
                leaky=True, sigmoid=False, want_stats=False):
    """nn.Conv2d(Cin, cout, 4, stride, 1, bias=False) with fused pre-affine
    (previous layer's BatchNorm), pre-LeakyReLU, optional Sigmoid, and optional
    BN statistics for the following BatchNorm.  `act` is NHWC."""
    N, H, W, Cin = act.shape

    # Previous layer's BN affine must be applied BEFORE conv zero padding
    # (shift != 0 would corrupt the pad if applied after padding).
    if scale is not None:
        act = act.astype(jnp.float32) * scale + shift
    act = act.astype(jnp.bfloat16)
    xp = jnp.pad(act, ((0, 0), (1, 1), (1, 1), (0, 0)))

    patches, Ho, Wo = _extract_patches(xp, stride)      # (N, Ho, Wo, 16*Cin)
    K = 16 * Cin
    Kpad = w_packed.shape[0]
    assert Kpad == _round_up(K, 128)
    Mb = Ho * Wo
    Mb_pad = _round_up(Mb, 8)

    lhs = patches.reshape(N, Mb, K)
    lhs = jnp.pad(lhs, ((0, 0), (0, Mb_pad - Mb), (0, Kpad - K)))
    lhs = lhs.reshape(N * Mb_pad, Kpad)                 # batch folded into M

    G = _grid_split(N)
    Mblk = (N // G) * Mb_pad
    out_dtype = jnp.float32 if sigmoid else jnp.bfloat16

    out_shape = [jax.ShapeDtypeStruct((N * Mb_pad, _COUT_PAD), out_dtype)]
    out_specs = [pl.BlockSpec((Mblk, _COUT_PAD), lambda g: (g, 0))]
    if want_stats:
        out_shape.append(jax.ShapeDtypeStruct((G, 8, _COUT_PAD), jnp.float32))
        out_specs.append(pl.BlockSpec((1, 8, _COUT_PAD), lambda g: (g, 0, 0)))

    kernel = functools.partial(
        _fused_conv_kernel, leaky=leaky, sigmoid=sigmoid, want_stats=want_stats,
        mb=Mb, mb_pad=Mb_pad, k_chunk=_k_chunk())

    res = pl.pallas_call(
        kernel,
        grid=(G,),
        in_specs=[pl.BlockSpec((Mblk, Kpad), lambda g: (g, 0)),
                  pl.BlockSpec((Kpad, _COUT_PAD), lambda g: (0, 0))],
        out_specs=tuple(out_specs),
        out_shape=tuple(out_shape),
        compiler_params=pltpu.CompilerParams(
            dimension_semantics=("parallel",)),
    )(lhs, w_packed)

    y = res[0].reshape(N, Mb_pad, _COUT_PAD)[:, :Mb, :cout]
    y = y.reshape(N, Ho, Wo, cout)
    if not want_stats:
        return y
    st = res[1]
    ch_sum = jnp.sum(st[:, 0, :cout], axis=0)
    ch_sq = jnp.sum(st[:, 1, :cout], axis=0)
    return y, (ch_sum, ch_sq, float(N * Mb))


def _bn_affine(ch_sum, ch_sq, count, gamma, beta, eps=_BN_EPS):
    """Training-mode BatchNorm2d (biased batch stats) as per-channel scale/shift."""
    mean = ch_sum / count
    var = jnp.maximum(ch_sq / count - mean * mean, 0.0)
    scale = gamma * jax.lax.rsqrt(var + eps)
    shift = beta - mean * scale
    return scale, shift


def _pack_weight(w_oihw):
    """(Cout, Cin, 4, 4) -> tap-stacked (Kpad, 128) bf16 matrix (one-time)."""
    cout, cin, kh, kw = w_oihw.shape
    assert (kh, kw) == (4, 4) and cout <= _COUT_PAD
    k = kh * kw * cin
    kpad = _round_up(k, 128)
    wt = jnp.transpose(w_oihw, (2, 3, 1, 0)).reshape(k, cout)
    wt = jnp.pad(wt, ((0, kpad - k), (0, _COUT_PAD - cout)))
    return wt.astype(jnp.bfloat16)


def init_params(key, nc, nf):
    ks = jax.random.split(key, 5)

    def w(k, co, ci):
        # DCGAN-style N(0, 0.02) init, deterministic via PRNGKey.
        return 0.02 * jax.random.normal(k, (co, ci, 4, 4), jnp.float32)

    return {
        "w1": w(ks[0], nf, nc),
        "w2": w(ks[1], nf * 2, nf),
        "g2": jnp.ones((nf * 2,), jnp.float32),
        "b2": jnp.zeros((nf * 2,), jnp.float32),
        "w3": w(ks[2], nf * 4, nf * 2),
        "g3": jnp.ones((nf * 4,), jnp.float32),
        "b3": jnp.zeros((nf * 4,), jnp.float32),
        "w4": w(ks[3], nf * 8, nf * 4),
        "g4": jnp.ones((nf * 8,), jnp.float32),
        "b4": jnp.zeros((nf * 8,), jnp.float32),
        "w5": w(ks[4], 1, nf * 8),
    }


def preprocess_params(params):
    """One-time weight relayout hoisted out of the jitted forward."""
    out = {k: v for k, v in params.items() if not k.startswith("w")}
    for name in ("w1", "w2", "w3", "w4", "w5"):
        out[name] = _pack_weight(params[name])
    return out


def discriminator_forward(packed, x_nchw, *, nf):
    x = jnp.transpose(x_nchw, (0, 2, 3, 1))                     # NCHW -> NHWC
    # layer1: Conv(nc, nf, 4, 2, 1)
    h = _conv_layer(x, packed["w1"], nf, stride=2, leaky=False)
    # layer2: LeakyReLU -> Conv(nf, 2nf, 4, 2, 1) -> BN (stats fused in kernel)
    h, st2 = _conv_layer(h, packed["w2"], 2 * nf, stride=2, leaky=True,
                         want_stats=True)
    sc2, sh2 = _bn_affine(*st2, packed["g2"], packed["b2"])
    # layer3: BN2-affine -> LeakyReLU -> Conv(2nf, 4nf, 4, 2, 1) -> BN
    h, st3 = _conv_layer(h, packed["w3"], 4 * nf, stride=2, scale=sc2,
                         shift=sh2, leaky=True, want_stats=True)
    sc3, sh3 = _bn_affine(*st3, packed["g3"], packed["b3"])
    # layer4: BN3-affine -> LeakyReLU -> Conv(4nf, 8nf, 4, 1, 1) -> BN
    h, st4 = _conv_layer(h, packed["w4"], 8 * nf, stride=1, scale=sc3,
                         shift=sh3, leaky=True, want_stats=True)
    sc4, sh4 = _bn_affine(*st4, packed["g4"], packed["b4"])
    # layer5: BN4-affine -> LeakyReLU -> Conv(8nf, 1, 4, 1, 1) -> Sigmoid
    h = _conv_layer(h, packed["w5"], 1, stride=1, scale=sc4, shift=sh4,
                    leaky=True, sigmoid=True)
    return jnp.transpose(h, (0, 3, 1, 2)).astype(jnp.float32)   # NHWC -> NCHW


if __name__ == "__main__":
    nc, nf = 3, 8
    N, H, W = 2, 32, 32   # 32 is the smallest spatial size this net supports
    key = jax.random.PRNGKey(0)
    kx, kp = jax.random.split(key)
    x = jax.random.normal(kx, (N, nc, H, W), jnp.float32)
    params = init_params(kp, nc, nf)
    packed = preprocess_params(params)        # one-time weight relayout (hoisted)

    fwd = jax.jit(functools.partial(discriminator_forward, nf=nf))
    out = jax.block_until_ready(fwd(packed, x))
    assert out.shape == (N, 1, 2, 2), out.shape
    assert bool(jnp.all(jnp.isfinite(out)))
    assert bool(jnp.all((out >= 0.0) & (out <= 1.0)))
    print("KERNEL_OK")
</pallas_src>

<mosaic_0001>
module attributes {stable_mosaic.version = 11 : i64} {
  func.func @_fused_conv_kernel(%arg0: i32, %arg1: memref<512x128xbf16, #tpu.memory_space<vmem>>, %arg2: memref<128x128xbf16, #tpu.memory_space<vmem>>, %arg3: memref<512x128xbf16, #tpu.memory_space<vmem>>) attributes {dimension_semantics = [#tpu.dimension_semantics<parallel>], iteration_bounds = array<i64: 1>, scalar_prefetch = 0 : i64, scratch_operands = 0 : i64, tpu.core_type = #tpu.core_type<tc>, window_params = [{transform_indices = @transform_0, window_bounds = array<i64: 512, 128>}, {pipeline_mode = #tpu.pipeline_mode<synchronous>, transform_indices = @transform_1, window_bounds = array<i64: 128, 128>}, {transform_indices = @transform_2, window_bounds = array<i64: 512, 128>}]} {
    %c0 = arith.constant 0 : index
    %c0_0 = arith.constant 0 : index
    %0 = vector.load %arg1[%c0, %c0_0] : memref<512x128xbf16, #tpu.memory_space<vmem>>, vector<512x128xbf16>
    %c0_1 = arith.constant 0 : index
    %c0_2 = arith.constant 0 : index
    %1 = vector.load %arg2[%c0_1, %c0_2] : memref<128x128xbf16, #tpu.memory_space<vmem>>, vector<128x128xbf16>
    %cst = arith.constant dense<0.000000e+00> : vector<512x128xf32>
    %2 = tpu.matmul %0, %1, %cst {dimension_numbers = #tpu.dot_dimension_numbers<[1], [0], [0], [1], [0, 0, 1, 1], [], []>} : vector<512x128xbf16>, vector<128x128xbf16>, vector<512x128xf32> -> vector<512x128xf32>
    %3 = arith.truncf %2 : vector<512x128xf32> to vector<512x128xbf16>
    %c0_3 = arith.constant 0 : index
    %c0_4 = arith.constant 0 : index
    %4 = vector.load %arg3[%c0_3, %c0_4] : memref<512x128xbf16, #tpu.memory_space<vmem>>, vector<512x128xbf16>
    tpu.vector_store %arg3[%c0_3, %c0_4], %3 {strides = array<i32>} : memref<512x128xbf16, #tpu.memory_space<vmem>>, vector<512x128xbf16>,
    return
  }
  func.func @transform_0(%arg0: i32) -> (i32, i32) {
    %c0_i32 = arith.constant 0 : i32
    %c0_i32_0 = arith.constant 0 : i32
    return %arg0, %c0_i32 : i32, i32
  }
  func.func @transform_1(%arg0: i32) -> (i32, i32) {
    %c0_i32 = arith.constant 0 : i32
    %c0_i32_0 = arith.constant 0 : i32
    %c0_i32_1 = arith.constant 0 : i32
    return %c0_i32, %c0_i32_0 : i32, i32
  }
  func.func @transform_2(%arg0: i32) -> (i32, i32) {
    %c0_i32 = arith.constant 0 : i32
    %c0_i32_0 = arith.constant 0 : i32
    return %arg0, %c0_i32 : i32, i32
  }
}

module attributes {stable_mosaic.version = 11 : i64} {
  func.func @_fused_conv_kernel(%arg0: i32, %arg1: memref<128x128xbf16, #tpu.memory_space<vmem>>, %arg2: memref<128x128xbf16, #tpu.memory_space<vmem>>, %arg3: memref<128x128xbf16, #tpu.memory_space<vmem>>, %arg4: memref<1x8x128xf32, #tpu.memory_space<vmem>>) attributes {dimension_semantics = [#tpu.dimension_semantics<parallel>], iteration_bounds = array<i64: 1>, scalar_prefetch = 0 : i64, scratch_operands = 0 : i64, tpu.core_type = #tpu.core_type<tc>, window_params = [{transform_indices = @transform_0, window_bounds = array<i64: 128, 128>}, {pipeline_mode = #tpu.pipeline_mode<synchronous>, transform_indices = @transform_1, window_bounds = array<i64: 128, 128>}, {transform_indices = @transform_2, window_bounds = array<i64: 128, 128>}, {transform_indices = @transform_3, window_bounds = array<i64: 1, 8, 128>}]} {
    %c0 = arith.constant 0 : index
    %c0_0 = arith.constant 0 : index
    %0 = vector.load %arg1[%c0, %c0_0] : memref<128x128xbf16, #tpu.memory_space<vmem>>, vector<128x128xbf16>
    %1 = arith.extf %0 : vector<128x128xbf16> to vector<128x128xf32>
    %cst = arith.constant 0.000000e+00 : f32
    %2 = vector.broadcast %cst : f32 to vector<128x128xf32>
    %3 = arith.cmpf ogt, %1, %2 : vector<128x128xf32>
    %cst_1 = arith.constant 2.000000e-01 : f32
    %4 = vector.broadcast %cst_1 : f32 to vector<128x128xf32>
    %5 = arith.mulf %4, %1 : vector<128x128xf32>
    %6 = arith.select %3, %1, %5 : vector<128x128xi1>, vector<128x128xf32>
    %7 = arith.truncf %6 : vector<128x128xf32> to vector<128x128xbf16>
    %c0_2 = arith.constant 0 : index
    %c0_3 = arith.constant 0 : index
    %8 = vector.load %arg2[%c0_2, %c0_3] : memref<128x128xbf16, #tpu.memory_space<vmem>>, vector<128x128xbf16>
    %cst_4 = arith.constant dense<0.000000e+00> : vector<128x128xf32>
    %9 = tpu.matmul %7, %8, %cst_4 {dimension_numbers = #tpu.dot_dimension_numbers<[1], [0], [0], [1], [0, 0, 1, 1], [], []>} : vector<128x128xbf16>, vector<128x128xbf16>, vector<128x128xf32> -> vector<128x128xf32>
    %10 = arith.truncf %9 : vector<128x128xf32> to vector<128x128xbf16>
    %c0_5 = arith.constant 0 : index
    %c0_6 = arith.constant 0 : index
    %11 = vector.load %arg3[%c0_5, %c0_6] : memref<128x128xbf16, #tpu.memory_space<vmem>>, vector<128x128xbf16>
    tpu.vector_store %arg3[%c0_5, %c0_6], %10 {strides = array<i32>} : memref<128x128xbf16, #tpu.memory_space<vmem>>, vector<128x128xbf16>,
    %12 = tpu.iota {dimensions = array<i32: 0>} : vector<128x1xi32>
    %c64_i32 = arith.constant 64 : i32
    %c0_i32 = arith.constant 0 : i32
    %13 = arith.cmpi eq, %c64_i32, %c0_i32 : i32
    %c1_i32 = arith.constant 1 : i32
    %14 = arith.select %13, %c1_i32, %c64_i32 : i32
    %15 = vector.broadcast %14 : i32 to vector<128x1xi32>
    %16 = arith.remsi %12, %15 : vector<128x1xi32>
    %c0_i32_7 = arith.constant 0 : i32
    %17 = vector.broadcast %c0_i32_7 : i32 to vector<128x1xi32>
    %18 = arith.cmpi ne, %16, %17 : vector<128x1xi32>
    %c0_i32_8 = arith.constant 0 : i32
    %19 = vector.broadcast %c0_i32_8 : i32 to vector<128x1xi32>
    %20 = arith.cmpi slt, %16, %19 : vector<128x1xi32>
    %c0_i32_9 = arith.constant 0 : i32
    %21 = arith.cmpi slt, %14, %c0_i32_9 : i32
    %22 = vector.broadcast %21 : i1 to vector<128x1xi1>
    %23 = vector.broadcast %22 : vector<128x1xi1> to vector<128x1xi1>
    %24 = arith.xori %20, %23 : vector<128x1xi1>
    %25 = arith.andi %24, %18 : vector<128x1xi1>
    %26 = vector.broadcast %14 : i32 to vector<128x1xi32>
    %27 = arith.addi %16, %26 : vector<128x1xi32>
    %28 = arith.select %25, %27, %16 : vector<128x1xi1>, vector<128x1xi32>
    %c64_i32_10 = arith.constant 64 : i32
    %29 = vector.broadcast %c64_i32_10 : i32 to vector<128x1xi32>
    %30 = arith.cmpi slt, %28, %29 : vector<128x1xi32>
    %31 = arith.extui %30 : vector<128x1xi1> to vector<128x1xi32>
    %32 = arith.sitofp %31 : vector<128x1xi32> to vector<128x1xf32>
    %33 = vector.broadcast %32 : vector<128x1xf32> to vector<128x128xf32>
    %34 = arith.mulf %9, %33 : vector<128x128xf32>
    %cst_11 = arith.constant dense<0.000000e+00> : vector<128xf32>
    %35 = vector.multi_reduction <add>, %34, %cst_11 [0] : vector<128x128xf32> to vector<128xf32>
    %36 = vector.shape_cast %35 : vector<128xf32> to vector<1x128xf32>
    %37 = arith.mulf %34, %9 : vector<128x128xf32>
    %cst_12 = arith.constant dense<0.000000e+00> : vector<128xf32>
    %38 = vector.multi_reduction <add>, %37, %cst_12 [0] : vector<128x128xf32> to vector<128xf32>
    %39 = vector.shape_cast %38 : vector<128xf32> to vector<1x128xf32>
    %40 = tpu.iota {dimensions = array<i32: 0>} : vector<8x128xi32>
    %c0_i32_13 = arith.constant 0 : i32
    %41 = vector.broadcast %c0_i32_13 : i32 to vector<8x128xi32>
    %42 = arith.cmpi eq, %40, %41 : vector<8x128xi32>
    %43 = arith.extui %42 : vector<8x128xi1> to vector<8x128xi32>
    %44 = arith.sitofp %43 : vector<8x128xi32> to vector<8x128xf32>
    %45 = vector.broadcast %36 : vector<1x128xf32> to vector<8x128xf32>
    %46 = arith.mulf %45, %44 : vector<8x128xf32>
    %c1_i32_14 = arith.constant 1 : i32
    %47 = vector.broadcast %c1_i32_14 : i32 to vector<8x128xi32>
    %48 = arith.cmpi eq, %40, %47 : vector<8x128xi32>
    %49 = arith.extui %48 : vector<8x128xi1> to vector<8x128xi32>
    %50 = arith.sitofp %49 : vector<8x128xi32> to vector<8x128xf32>
    %51 = vector.broadcast %39 : vector<1x128xf32> to vector<8x128xf32>
    %52 = arith.mulf %51, %50 : vector<8x128xf32>
    %53 = arith.addf %46, %52 : vector<8x128xf32>
    %c0_15 = arith.constant 0 : index
    %c0_16 = arith.constant 0 : index
    %c0_17 = arith.constant 0 : index
    %54 = vector.load %arg4[%c0_15, %c0_16, %c0_17] : memref<1x8x128xf32, #tpu.memory_space<vmem>>, vector<1x8x128xf32>
    %55 = vector.shape_cast %54 : vector<1x8x128xf32> to vector<8x128xf32>
    %56 = vector.shape_cast %53 : vector<8x128xf32> to vector<1x8x128xf32>
    tpu.vector_store %arg4[%c0_15, %c0_16, %c0_17], %56 {strides = array<i32>} : memref<1x8x128xf32, #tpu.memory_space<vmem>>, vector<1x8x128xf32>,
    return
  }
  func.func @transform_0(%arg0: i32) -> (i32, i32) {
    %c0_i32 = arith.constant 0 : i32
    %c0_i32_0 = arith.constant 0 : i32
    return %arg0, %c0_i32 : i32, i32
  }
  func.func @transform_1(%arg0: i32) -> (i32, i32) {
    %c0_i32 = arith.constant 0 : i32
    %c0_i32_0 = arith.constant 0 : i32
    %c0_i32_1 = arith.constant 0 : i32
    return %c0_i32, %c0_i32_0 : i32, i32
  }
  func.func @transform_2(%arg0: i32) -> (i32, i32) {
    %c0_i32 = arith.constant 0 : i32
    %c0_i32_0 = arith.constant 0 : i32
    return %arg0, %c0_i32 : i32, i32
  }
  func.func @transform_3(%arg0: i32) -> (i32, i32, i32) {
    %c0_i32 = arith.constant 0 : i32
    %c0_i32_0 = arith.constant 0 : i32
    %c0_i32_1 = arith.constant 0 : i32
    return %arg0, %c0_i32, %c0_i32_0 : i32, i32, i32
  }
}

module attributes {stable_mosaic.version = 11 : i64} {
  func.func @_fused_conv_kernel(%arg0: i32, %arg1: memref<32x256xbf16, #tpu.memory_space<vmem>>, %arg2: memref<256x128xbf16, #tpu.memory_space<vmem>>, %arg3: memref<32x128xbf16, #tpu.memory_space<vmem>>, %arg4: memref<1x8x128xf32, #tpu.memory_space<vmem>>) attributes {dimension_semantics = [#tpu.dimension_semantics<parallel>], iteration_bounds = array<i64: 1>, scalar_prefetch = 0 : i64, scratch_operands = 0 : i64, tpu.core_type = #tpu.core_type<tc>, window_params = [{transform_indices = @transform_0, window_bounds = array<i64: 32, 256>}, {pipeline_mode = #tpu.pipeline_mode<synchronous>, transform_indices = @transform_1, window_bounds = array<i64: 256, 128>}, {transform_indices = @transform_2, window_bounds = array<i64: 32, 128>}, {transform_indices = @transform_3, window_bounds = array<i64: 1, 8, 128>}]} {
    %c0 = arith.constant 0 : index
    %c0_0 = arith.constant 0 : index
    %0 = vector.load %arg1[%c0, %c0_0] : memref<32x256xbf16, #tpu.memory_space<vmem>>, vector<32x256xbf16>
    %1 = arith.extf %0 : vector<32x256xbf16> to vector<32x256xf32>
    %cst = arith.constant 0.000000e+00 : f32
    %2 = vector.broadcast %cst : f32 to vector<32x256xf32>
    %3 = arith.cmpf ogt, %1, %2 : vector<32x256xf32>
    %cst_1 = arith.constant 2.000000e-01 : f32
    %4 = vector.broadcast %cst_1 : f32 to vector<32x256xf32>
    %5 = arith.mulf %4, %1 : vector<32x256xf32>
    %6 = arith.select %3, %1, %5 : vector<32x256xi1>, vector<32x256xf32>
    %7 = arith.truncf %6 : vector<32x256xf32> to vector<32x256xbf16>
    %c0_2 = arith.constant 0 : index
    %c0_3 = arith.constant 0 : index
    %8 = vector.load %arg2[%c0_2, %c0_3] : memref<256x128xbf16, #tpu.memory_space<vmem>>, vector<256x128xbf16>
    %cst_4 = arith.constant dense<0.000000e+00> : vector<32x128xf32>
    %9 = tpu.matmul %7, %8, %cst_4 {dimension_numbers = #tpu.dot_dimension_numbers<[1], [0], [0], [1], [0, 0, 1, 1], [], []>} : vector<32x256xbf16>, vector<256x128xbf16>, vector<32x128xf32> -> vector<32x128xf32>
    %10 = arith.truncf %9 : vector<32x128xf32> to vector<32x128xbf16>
    %c0_5 = arith.constant 0 : index
    %c0_6 = arith.constant 0 : index
    %11 = vector.load %arg3[%c0_5, %c0_6] : memref<32x128xbf16, #tpu.memory_space<vmem>>, vector<32x128xbf16>
    tpu.vector_store %arg3[%c0_5, %c0_6], %10 {strides = array<i32>} : memref<32x128xbf16, #tpu.memory_space<vmem>>, vector<32x128xbf16>,
    %12 = tpu.iota {dimensions = array<i32: 0>} : vector<32x1xi32>
    %c16_i32 = arith.constant 16 : i32
    %c0_i32 = arith.constant 0 : i32
    %13 = arith.cmpi eq, %c16_i32, %c0_i32 : i32
    %c1_i32 = arith.constant 1 : i32
    %14 = arith.select %13, %c1_i32, %c16_i32 : i32
    %15 = vector.broadcast %14 : i32 to vector<32x1xi32>
    %16 = arith.remsi %12, %15 : vector<32x1xi32>
    %c0_i32_7 = arith.constant 0 : i32
    %17 = vector.broadcast %c0_i32_7 : i32 to vector<32x1xi32>
    %18 = arith.cmpi ne, %16, %17 : vector<32x1xi32>
    %c0_i32_8 = arith.constant 0 : i32
    %19 = vector.broadcast %c0_i32_8 : i32 to vector<32x1xi32>
    %20 = arith.cmpi slt, %16, %19 : vector<32x1xi32>
    %c0_i32_9 = arith.constant 0 : i32
    %21 = arith.cmpi slt, %14, %c0_i32_9 : i32
    %22 = vector.broadcast %21 : i1 to vector<32x1xi1>
    %23 = vector.broadcast %22 : vector<32x1xi1> to vector<32x1xi1>
    %24 = arith.xori %20, %23 : vector<32x1xi1>
    %25 = arith.andi %24, %18 : vector<32x1xi1>
    %26 = vector.broadcast %14 : i32 to vector<32x1xi32>
    %27 = arith.addi %16, %26 : vector<32x1xi32>
    %28 = arith.select %25, %27, %16 : vector<32x1xi1>, vector<32x1xi32>
    %c16_i32_10 = arith.constant 16 : i32
    %29 = vector.broadcast %c16_i32_10 : i32 to vector<32x1xi32>
    %30 = arith.cmpi slt, %28, %29 : vector<32x1xi32>
    %31 = arith.extui %30 : vector<32x1xi1> to vector<32x1xi32>
    %32 = arith.sitofp %31 : vector<32x1xi32> to vector<32x1xf32>
    %33 = vector.broadcast %32 : vector<32x1xf32> to vector<32x128xf32>
    %34 = arith.mulf %9, %33 : vector<32x128xf32>
    %cst_11 = arith.constant dense<0.000000e+00> : vector<128xf32>
    %35 = vector.multi_reduction <add>, %34, %cst_11 [0] : vector<32x128xf32> to vector<128xf32>
    %36 = vector.shape_cast %35 : vector<128xf32> to vector<1x128xf32>
    %37 = arith.mulf %34, %9 : vector<32x128xf32>
    %cst_12 = arith.constant dense<0.000000e+00> : vector<128xf32>
    %38 = vector.multi_reduction <add>, %37, %cst_12 [0] : vector<32x128xf32> to vector<128xf32>
    %39 = vector.shape_cast %38 : vector<128xf32> to vector<1x128xf32>
    %40 = tpu.iota {dimensions = array<i32: 0>} : vector<8x128xi32>
    %c0_i32_13 = arith.constant 0 : i32
    %41 = vector.broadcast %c0_i32_13 : i32 to vector<8x128xi32>
    %42 = arith.cmpi eq, %40, %41 : vector<8x128xi32>
    %43 = arith.extui %42 : vector<8x128xi1> to vector<8x128xi32>
    %44 = arith.sitofp %43 : vector<8x128xi32> to vector<8x128xf32>
    %45 = vector.broadcast %36 : vector<1x128xf32> to vector<8x128xf32>
    %46 = arith.mulf %45, %44 : vector<8x128xf32>
    %c1_i32_14 = arith.constant 1 : i32
    %47 = vector.broadcast %c1_i32_14 : i32 to vector<8x128xi32>
    %48 = arith.cmpi eq, %40, %47 : vector<8x128xi32>
    %49 = arith.extui %48 : vector<8x128xi1> to vector<8x128xi32>
    %50 = arith.sitofp %49 : vector<8x128xi32> to vector<8x128xf32>
    %51 = vector.broadcast %39 : vector<1x128xf32> to vector<8x128xf32>
    %52 = arith.mulf %51, %50 : vector<8x128xf32>
    %53 = arith.addf %46, %52 : vector<8x128xf32>
    %c0_15 = arith.constant 0 : index
    %c0_16 = arith.constant 0 : index
    %c0_17 = arith.constant 0 : index
    %54 = vector.load %arg4[%c0_15, %c0_16, %c0_17] : memref<1x8x128xf32, #tpu.memory_space<vmem>>, vector<1x8x128xf32>
    %55 = vector.shape_cast %54 : vector<1x8x128xf32> to vector<8x128xf32>
    %56 = vector.shape_cast %53 : vector<8x128xf32> to vector<1x8x128xf32>
    tpu.vector_store %arg4[%c0_15, %c0_16, %c0_17], %56 {strides = array<i32>} : memref<1x8x128xf32, #tpu.memory_space<vmem>>, vector<1x8x128xf32>,
    return
  }
  func.func @transform_0(%arg0: i32) -> (i32, i32) {
    %c0_i32 = arith.constant 0 : i32
    %c0_i32_0 = arith.constant 0 : i32
    return %arg0, %c0_i32 : i32, i32
  }
  func.func @transform_1(%arg0: i32) -> (i32, i32) {
    %c0_i32 = arith.constant 0 : i32
    %c0_i32_0 = arith.constant 0 : i32
    %c0_i32_1 = arith.constant 0 : i32
    return %c0_i32, %c0_i32_0 : i32, i32
  }
  func.func @transform_2(%arg0: i32) -> (i32, i32) {
    %c0_i32 = arith.constant 0 : i32
    %c0_i32_0 = arith.constant 0 : i32
    return %arg0, %c0_i32 : i32, i32
  }
  func.func @transform_3(%arg0: i32) -> (i32, i32, i32) {
    %c0_i32 = arith.constant 0 : i32
    %c0_i32_0 = arith.constant 0 : i32
    %c0_i32_1 = arith.constant 0 : i32
    return %arg0, %c0_i32, %c0_i32_0 : i32, i32, i32
  }
}

module attributes {stable_mosaic.version = 11 : i64} {
  func.func @_fused_conv_kernel(%arg0: i32, %arg1: memref<32x512xbf16, #tpu.memory_space<vmem>>, %arg2: memref<512x128xbf16, #tpu.memory_space<vmem>>, %arg3: memref<32x128xbf16, #tpu.memory_space<vmem>>, %arg4: memref<1x8x128xf32, #tpu.memory_space<vmem>>) attributes {dimension_semantics = [#tpu.dimension_semantics<parallel>], iteration_bounds = array<i64: 1>, scalar_prefetch = 0 : i64, scratch_operands = 0 : i64, tpu.core_type = #tpu.core_type<tc>, window_params = [{transform_indices = @transform_0, window_bounds = array<i64: 32, 512>}, {pipeline_mode = #tpu.pipeline_mode<synchronous>, transform_indices = @transform_1, window_bounds = array<i64: 512, 128>}, {transform_indices = @transform_2, window_bounds = array<i64: 32, 128>}, {transform_indices = @transform_3, window_bounds = array<i64: 1, 8, 128>}]} {
    %c0 = arith.constant 0 : index
    %c0_0 = arith.constant 0 : index
    %0 = vector.load %arg1[%c0, %c0_0] : memref<32x512xbf16, #tpu.memory_space<vmem>>, vector<32x256xbf16>
    %1 = arith.extf %0 : vector<32x256xbf16> to vector<32x256xf32>
    %cst = arith.constant 0.000000e+00 : f32
    %2 = vector.broadcast %cst : f32 to vector<32x256xf32>
    %3 = arith.cmpf ogt, %1, %2 : vector<32x256xf32>
    %cst_1 = arith.constant 2.000000e-01 : f32
    %4 = vector.broadcast %cst_1 : f32 to vector<32x256xf32>
    %5 = arith.mulf %4, %1 : vector<32x256xf32>
    %6 = arith.select %3, %1, %5 : vector<32x256xi1>, vector<32x256xf32>
    %7 = arith.truncf %6 : vector<32x256xf32> to vector<32x256xbf16>
    %c0_2 = arith.constant 0 : index
    %c0_3 = arith.constant 0 : index
    %8 = vector.load %arg2[%c0_2, %c0_3] : memref<512x128xbf16, #tpu.memory_space<vmem>>, vector<256x128xbf16>
    %cst_4 = arith.constant dense<0.000000e+00> : vector<32x128xf32>
    %9 = tpu.matmul %7, %8, %cst_4 {dimension_numbers = #tpu.dot_dimension_numbers<[1], [0], [0], [1], [0, 0, 1, 1], [], []>} : vector<32x256xbf16>, vector<256x128xbf16>, vector<32x128xf32> -> vector<32x128xf32>
    %c0_5 = arith.constant 0 : index
    %c256 = arith.constant 256 : index
    %10 = vector.load %arg1[%c0_5, %c256] : memref<32x512xbf16, #tpu.memory_space<vmem>>, vector<32x256xbf16>
    %11 = arith.extf %10 : vector<32x256xbf16> to vector<32x256xf32>
    %cst_6 = arith.constant 0.000000e+00 : f32
    %12 = vector.broadcast %cst_6 : f32 to vector<32x256xf32>
    %13 = arith.cmpf ogt, %11, %12 : vector<32x256xf32>
    %cst_7 = arith.constant 2.000000e-01 : f32
    %14 = vector.broadcast %cst_7 : f32 to vector<32x256xf32>
    %15 = arith.mulf %14, %11 : vector<32x256xf32>
    %16 = arith.select %13, %11, %15 : vector<32x256xi1>, vector<32x256xf32>
    %17 = arith.truncf %16 : vector<32x256xf32> to vector<32x256xbf16>
    %c256_8 = arith.constant 256 : index
    %c0_9 = arith.constant 0 : index
    %18 = vector.load %arg2[%c256_8, %c0_9] : memref<512x128xbf16, #tpu.memory_space<vmem>>, vector<256x128xbf16>
    %cst_10 = arith.constant dense<0.000000e+00> : vector<32x128xf32>
    %19 = tpu.matmul %17, %18, %cst_10 {dimension_numbers = #tpu.dot_dimension_numbers<[1], [0], [0], [1], [0, 0, 1, 1], [], []>} : vector<32x256xbf16>, vector<256x128xbf16>, vector<32x128xf32> -> vector<32x128xf32>
    %20 = arith.addf %9, %19 : vector<32x128xf32>
    %21 = arith.truncf %20 : vector<32x128xf32> to vector<32x128xbf16>
    %c0_11 = arith.constant 0 : index
    %c0_12 = arith.constant 0 : index
    %22 = vector.load %arg3[%c0_11, %c0_12] : memref<32x128xbf16, #tpu.memory_space<vmem>>, vector<32x128xbf16>
    tpu.vector_store %arg3[%c0_11, %c0_12], %21 {strides = array<i32>} : memref<32x128xbf16, #tpu.memory_space<vmem>>, vector<32x128xbf16>,
    %23 = tpu.iota {dimensions = array<i32: 0>} : vector<32x1xi32>
    %c16_i32 = arith.constant 16 : i32
    %c0_i32 = arith.constant 0 : i32
    %24 = arith.cmpi eq, %c16_i32, %c0_i32 : i32
    %c1_i32 = arith.constant 1 : i32
    %25 = arith.select %24, %c1_i32, %c16_i32 : i32
    %26 = vector.broadcast %25 : i32 to vector<32x1xi32>
    %27 = arith.remsi %23, %26 : vector<32x1xi32>
    %c0_i32_13 = arith.constant 0 : i32
    %28 = vector.broadcast %c0_i32_13 : i32 to vector<32x1xi32>
    %29 = arith.cmpi ne, %27, %28 : vector<32x1xi32>
    %c0_i32_14 = arith.constant 0 : i32
    %30 = vector.broadcast %c0_i32_14 : i32 to vector<32x1xi32>
    %31 = arith.cmpi slt, %27, %30 : vector<32x1xi32>
    %c0_i32_15 = arith.constant 0 : i32
    %32 = arith.cmpi slt, %25, %c0_i32_15 : i32
    %33 = vector.broadcast %32 : i1 to vector<32x1xi1>
    %34 = vector.broadcast %33 : vector<32x1xi1> to vector<32x1xi1>
    %35 = arith.xori %31, %34 : vector<32x1xi1>
    %36 = arith.andi %35, %29 : vector<32x1xi1>
    %37 = vector.broadcast %25 : i32 to vector<32x1xi32>
    %38 = arith.addi %27, %37 : vector<32x1xi32>
    %39 = arith.select %36, %38, %27 : vector<32x1xi1>, vector<32x1xi32>
    %c9_i32 = arith.constant 9 : i32
    %40 = vector.broadcast %c9_i32 : i32 to vector<32x1xi32>
    %41 = arith.cmpi slt, %39, %40 : vector<32x1xi32>
    %42 = arith.extui %41 : vector<32x1xi1> to vector<32x1xi32>
    %43 = arith.sitofp %42 : vector<32x1xi32> to vector<32x1xf32>
    %44 = vector.broadcast %43 : vector<32x1xf32> to vector<32x128xf32>
    %45 = arith.mulf %20, %44 : vector<32x128xf32>
    %cst_16 = arith.constant dense<0.000000e+00> : vector<128xf32>
    %46 = vector.multi_reduction <add>, %45, %cst_16 [0] : vector<32x128xf32> to vector<128xf32>
    %47 = vector.shape_cast %46 : vector<128xf32> to vector<1x128xf32>
    %48 = arith.mulf %45, %20 : vector<32x128xf32>
    %cst_17 = arith.constant dense<0.000000e+00> : vector<128xf32>
    %49 = vector.multi_reduction <add>, %48, %cst_17 [0] : vector<32x128xf32> to vector<128xf32>
    %50 = vector.shape_cast %49 : vector<128xf32> to vector<1x128xf32>
    %51 = tpu.iota {dimensions = array<i32: 0>} : vector<8x128xi32>
    %c0_i32_18 = arith.constant 0 : i32
    %52 = vector.broadcast %c0_i32_18 : i32 to vector<8x128xi32>
    %53 = arith.cmpi eq, %51, %52 : vector<8x128xi32>
    %54 = arith.extui %53 : vector<8x128xi1> to vector<8x128xi32>
    %55 = arith.sitofp %54 : vector<8x128xi32> to vector<8x128xf32>
    %56 = vector.broadcast %47 : vector<1x128xf32> to vector<8x128xf32>
    %57 = arith.mulf %56, %55 : vector<8x128xf32>
    %c1_i32_19 = arith.constant 1 : i32
    %58 = vector.broadcast %c1_i32_19 : i32 to vector<8x128xi32>
    %59 = arith.cmpi eq, %51, %58 : vector<8x128xi32>
    %60 = arith.extui %59 : vector<8x128xi1> to vector<8x128xi32>
    %61 = arith.sitofp %60 : vector<8x128xi32> to vector<8x128xf32>
    %62 = vector.broadcast %50 : vector<1x128xf32> to vector<8x128xf32>
    %63 = arith.mulf %62, %61 : vector<8x128xf32>
    %64 = arith.addf %57, %63 : vector<8x128xf32>
    %c0_20 = arith.constant 0 : index
    %c0_21 = arith.constant 0 : index
    %c0_22 = arith.constant 0 : index
    %65 = vector.load %arg4[%c0_20, %c0_21, %c0_22] : memref<1x8x128xf32, #tpu.memory_space<vmem>>, vector<1x8x128xf32>
    %66 = vector.shape_cast %65 : vector<1x8x128xf32> to vector<8x128xf32>
    %67 = vector.shape_cast %64 : vector<8x128xf32> to vector<1x8x128xf32>
    tpu.vector_store %arg4[%c0_20, %c0_21, %c0_22], %67 {strides = array<i32>} : memref<1x8x128xf32, #tpu.memory_space<vmem>>, vector<1x8x128xf32>,
    return
  }
  func.func @transform_0(%arg0: i32) -> (i32, i32) {
    %c0_i32 = arith.constant 0 : i32
    %c0_i32_0 = arith.constant 0 : i32
    return %arg0, %c0_i32 : i32, i32
  }
  func.func @transform_1(%arg0: i32) -> (i32, i32) {
    %c0_i32 = arith.constant 0 : i32
    %c0_i32_0 = arith.constant 0 : i32
    %c0_i32_1 = arith.constant 0 : i32
    return %c0_i32, %c0_i32_0 : i32, i32
  }
  func.func @transform_2(%arg0: i32) -> (i32, i32) {
    %c0_i32 = arith.constant 0 : i32
    %c0_i32_0 = arith.constant 0 : i32
    return %arg0, %c0_i32 : i32, i32
  }
  func.func @transform_3(%arg0: i32) -> (i32, i32, i32) {
    %c0_i32 = arith.constant 0 : i32
    %c0_i32_0 = arith.constant 0 : i32
    %c0_i32_1 = arith.constant 0 : i32
    return %arg0, %c0_i32, %c0_i32_0 : i32, i32, i32
  }
}

module attributes {stable_mosaic.version = 11 : i64} {
  func.func @_fused_conv_kernel(%arg0: i32, %arg1: memref<16x1024xbf16, #tpu.memory_space<vmem>>, %arg2: memref<1024x128xbf16, #tpu.memory_space<vmem>>, %arg3: memref<16x128xf32, #tpu.memory_space<vmem>>) attributes {dimension_semantics = [#tpu.dimension_semantics<parallel>], iteration_bounds = array<i64: 1>, scalar_prefetch = 0 : i64, scratch_operands = 0 : i64, tpu.core_type = #tpu.core_type<tc>, window_params = [{transform_indices = @transform_0, window_bounds = array<i64: 16, 1024>}, {pipeline_mode = #tpu.pipeline_mode<synchronous>, transform_indices = @transform_1, window_bounds = array<i64: 1024, 128>}, {transform_indices = @transform_2, window_bounds = array<i64: 16, 128>}]} {
    %c0 = arith.constant 0 : index
    %c0_0 = arith.constant 0 : index
    %0 = vector.load %arg1[%c0, %c0_0] : memref<16x1024xbf16, #tpu.memory_space<vmem>>, vector<16x256xbf16>
    %1 = arith.extf %0 : vector<16x256xbf16> to vector<16x256xf32>
    %cst = arith.constant 0.000000e+00 : f32
    %2 = vector.broadcast %cst : f32 to vector<16x256xf32>
    %3 = arith.cmpf ogt, %1, %2 : vector<16x256xf32>
    %cst_1 = arith.constant 2.000000e-01 : f32
    %4 = vector.broadcast %cst_1 : f32 to vector<16x256xf32>
    %5 = arith.mulf %4, %1 : vector<16x256xf32>
    %6 = arith.select %3, %1, %5 : vector<16x256xi1>, vector<16x256xf32>
    %7 = arith.truncf %6 : vector<16x256xf32> to vector<16x256xbf16>
    %c0_2 = arith.constant 0 : index
    %c0_3 = arith.constant 0 : index
    %8 = vector.load %arg2[%c0_2, %c0_3] : memref<1024x128xbf16, #tpu.memory_space<vmem>>, vector<256x128xbf16>
    %cst_4 = arith.constant dense<0.000000e+00> : vector<16x128xf32>
    %9 = tpu.matmul %7, %8, %cst_4 {dimension_numbers = #tpu.dot_dimension_numbers<[1], [0], [0], [1], [0, 0, 1, 1], [], []>} : vector<16x256xbf16>, vector<256x128xbf16>, vector<16x128xf32> -> vector<16x128xf32>
    %c0_5 = arith.constant 0 : index
    %c256 = arith.constant 256 : index
    %10 = vector.load %arg1[%c0_5, %c256] : memref<16x1024xbf16, #tpu.memory_space<vmem>>, vector<16x256xbf16>
    %11 = arith.extf %10 : vector<16x256xbf16> to vector<16x256xf32>
    %cst_6 = arith.constant 0.000000e+00 : f32
    %12 = vector.broadcast %cst_6 : f32 to vector<16x256xf32>
    %13 = arith.cmpf ogt, %11, %12 : vector<16x256xf32>
    %cst_7 = arith.constant 2.000000e-01 : f32
    %14 = vector.broadcast %cst_7 : f32 to vector<16x256xf32>
    %15 = arith.mulf %14, %11 : vector<16x256xf32>
    %16 = arith.select %13, %11, %15 : vector<16x256xi1>, vector<16x256xf32>
    %17 = arith.truncf %16 : vector<16x256xf32> to vector<16x256xbf16>
    %c256_8 = arith.constant 256 : index
    %c0_9 = arith.constant 0 : index
    %18 = vector.load %arg2[%c256_8, %c0_9] : memref<1024x128xbf16, #tpu.memory_space<vmem>>, vector<256x128xbf16>
    %cst_10 = arith.constant dense<0.000000e+00> : vector<16x128xf32>
    %19 = tpu.matmul %17, %18, %cst_10 {dimension_numbers = #tpu.dot_dimension_numbers<[1], [0], [0], [1], [0, 0, 1, 1], [], []>} : vector<16x256xbf16>, vector<256x128xbf16>, vector<16x128xf32> -> vector<16x128xf32>
    %20 = arith.addf %9, %19 : vector<16x128xf32>
    %c0_11 = arith.constant 0 : index
    %c512 = arith.constant 512 : index
    %21 = vector.load %arg1[%c0_11, %c512] : memref<16x1024xbf16, #tpu.memory_space<vmem>>, vector<16x256xbf16>
    %22 = arith.extf %21 : vector<16x256xbf16> to vector<16x256xf32>
    %cst_12 = arith.constant 0.000000e+00 : f32
    %23 = vector.broadcast %cst_12 : f32 to vector<16x256xf32>
    %24 = arith.cmpf ogt, %22, %23 : vector<16x256xf32>
    %cst_13 = arith.constant 2.000000e-01 : f32
    %25 = vector.broadcast %cst_13 : f32 to vector<16x256xf32>
    %26 = arith.mulf %25, %22 : vector<16x256xf32>
    %27 = arith.select %24, %22, %26 : vector<16x256xi1>, vector<16x256xf32>
    %28 = arith.truncf %27 : vector<16x256xf32> to vector<16x256xbf16>
    %c512_14 = arith.constant 512 : index
    %c0_15 = arith.constant 0 : index
    %29 = vector.load %arg2[%c512_14, %c0_15] : memref<1024x128xbf16, #tpu.memory_space<vmem>>, vector<256x128xbf16>
    %cst_16 = arith.constant dense<0.000000e+00> : vector<16x128xf32>
    %30 = tpu.matmul %28, %29, %cst_16 {dimension_numbers = #tpu.dot_dimension_numbers<[1], [0], [0], [1], [0, 0, 1, 1], [], []>} : vector<16x256xbf16>, vector<256x128xbf16>, vector<16x128xf32> -> vector<16x128xf32>
    %31 = arith.addf %20, %30 : vector<16x128xf32>
    %c0_17 = arith.constant 0 : index
    %c768 = arith.constant 768 : index
    %32 = vector.load %arg1[%c0_17, %c768] : memref<16x1024xbf16, #tpu.memory_space<vmem>>, vector<16x256xbf16>
    %33 = arith.extf %32 : vector<16x256xbf16> to vector<16x256xf32>
    %cst_18 = arith.constant 0.000000e+00 : f32
    %34 = vector.broadcast %cst_18 : f32 to vector<16x256xf32>
    %35 = arith.cmpf ogt, %33, %34 : vector<16x256xf32>
    %cst_19 = arith.constant 2.000000e-01 : f32
    %36 = vector.broadcast %cst_19 : f32 to vector<16x256xf32>
    %37 = arith.mulf %36, %33 : vector<16x256xf32>
    %38 = arith.select %35, %33, %37 : vector<16x256xi1>, vector<16x256xf32>
    %39 = arith.truncf %38 : vector<16x256xf32> to vector<16x256xbf16>
    %c768_20 = arith.constant 768 : index
    %c0_21 = arith.constant 0 : index
    %40 = vector.load %arg2[%c768_20, %c0_21] : memref<1024x128xbf16, #tpu.memory_space<vmem>>, vector<256x128xbf16>
    %cst_22 = arith.constant dense<0.000000e+00> : vector<16x128xf32>
    %41 = tpu.matmul %39, %40, %cst_22 {dimension_numbers = #tpu.dot_dimension_numbers<[1], [0], [0], [1], [0, 0, 1, 1], [], []>} : vector<16x256xbf16>, vector<256x128xbf16>, vector<16x128xf32> -> vector<16x128xf32>
    %42 = arith.addf %31, %41 : vector<16x128xf32>
    %43 = arith.negf %42 : vector<16x128xf32>
    %44 = math.exp %43 : vector<16x128xf32>
    %cst_23 = arith.constant 1.000000e+00 : f32
    %45 = vector.broadcast %cst_23 : f32 to vector<16x128xf32>
    %46 = arith.addf %45, %44 : vector<16x128xf32>
    %47 = arith.divf %45, %46 : vector<16x128xf32>
    %c0_24 = arith.constant 0 : index
    %c0_25 = arith.constant 0 : index
    %48 = vector.load %arg3[%c0_24, %c0_25] : memref<16x128xf32, #tpu.memory_space<vmem>>, vector<16x128xf32>
    tpu.vector_store %arg3[%c0_24, %c0_25], %47 {strides = array<i32>} : memref<16x128xf32, #tpu.memory_space<vmem>>, vector<16x128xf32>,
    return
  }
  func.func @transform_0(%arg0: i32) -> (i32, i32) {
    %c0_i32 = arith.constant 0 : i32
    %c0_i32_0 = arith.constant 0 : i32
    return %arg0, %c0_i32 : i32, i32
  }
  func.func @transform_1(%arg0: i32) -> (i32, i32) {
    %c0_i32 = arith.constant 0 : i32
    %c0_i32_0 = arith.constant 0 : i32
    %c0_i32_1 = arith.constant 0 : i32
    return %c0_i32, %c0_i32_0 : i32, i32
  }
  func.func @transform_2(%arg0: i32) -> (i32, i32) {
    %c0_i32 = arith.constant 0 : i32
    %c0_i32_0 = arith.constant 0 : i32
    return %arg0, %c0_i32 : i32, i32
  }
}

</mosaic_0001>

<llo_original>
// kernel: discriminator_forward.5
$region0: #{discriminator_forward.5}
  #allocation0 [shape = 'u32[]', space=smem, size = 0x4, offset = 0x4, fixed_abs, tag = 'smem constant byte address 0x4 - core index']
  #allocation1 [shape = 'u32[72,128]{1,0:T(1,128)}', space=vmem, size = 0x9000, scoped, tag = 'internal scratch']
  %s0 = inlined_call_operand.vmem [shape: bf16[512,128], index: 0, kind: input, shape index: {}]
  %s1 = inlined_call_operand.vmem [shape: bf16[128,128], index: 1, kind: input, shape index: {}]
  %s2 = inlined_call_operand.vmem [shape: bf16[512,128], index: 2, kind: output, shape index: {}]
  %s3 = sld [smem:[#allocation0]]
  $region18: #{discriminator_forward.5} parent=0
    _
  %s5 = ssub.s32 1, %s3
  %s6 = scalar_select 0, %s5, %s3
  // Predicated region
  $region2: #{discriminator_forward.5} parent=0 // pred_check
    _
  $region3: #{discriminator_forward.5} parent=0 // pred_check_branch
    %8 = sbr.rel (0) target = $region5
  $region4: #{discriminator_forward.5} parent=0 // pred_region
    _
  $region5: #{discriminator_forward.5} parent=0 // pred_fallthru
    _
  // Predicated region
  $region6: #{discriminator_forward.5} parent=0 // pred_check
    _
  $region7: #{discriminator_forward.5} parent=0 // pred_check_branch
    %10 = sbr.rel (0) target = $region9
  $region8: #{discriminator_forward.5} parent=0 // pred_region
    _
  $region9: #{discriminator_forward.5} parent=0 // pred_fallthru
    _
  %v11 = vld [vmem:[%s0] sm:$0xf]
  %v12 = vld [vmem:[%s0 + $0x4] sm:$0xf]
  %v13 = vld [vmem:[%s0 + $0x8] sm:$0xf]
  %v14 = vld [vmem:[%s0 + $0xc] sm:$0xf]
  %v15 = vld [vmem:[%s0 + $0x10] sm:$0xf]
  %v16 = vld [vmem:[%s0 + $0x14] sm:$0xf]
  %v17 = vld [vmem:[%s0 + $0x18] sm:$0xf]
  %v18 = vld [vmem:[%s0 + $0x1c] sm:$0xf]
  %v19 = vld [vmem:[%s0 + $0x20] sm:$0xf]
  %v20 = vld [vmem:[%s0 + $0x24] sm:$0xf]
  %v21 = vld [vmem:[%s0 + $0x28] sm:$0xf]
  %v22 = vld [vmem:[%s0 + $0x2c] sm:$0xf]
  %v23 = vld [vmem:[%s0 + $0x30] sm:$0xf]
  %v24 = vld [vmem:[%s0 + $0x34] sm:$0xf]
  %v25 = vld [vmem:[%s0 + $0x38] sm:$0xf]
  %v26 = vld [vmem:[%s0 + $0x3c] sm:$0xf]
  %v27 = vld [vmem:[%s0 + $0x40] sm:$0xf]
  %v28 = vld [vmem:[%s0 + $0x44] sm:$0xf]
  %v29 = vld [vmem:[%s0 + $0x48] sm:$0xf]
  %v30 = vld [vmem:[%s0 + $0x4c] sm:$0xf]
  %v31 = vld [vmem:[%s0 + $0x50] sm:$0xf]
  %v32 = vld [vmem:[%s0 + $0x54] sm:$0xf]
  %v33 = vld [vmem:[%s0 + $0x58] sm:$0xf]
  %v34 = vld [vmem:[%s0 + $0x5c] sm:$0xf]
  %v35 = vld [vmem:[%s0 + $0x60] sm:$0xf]
  %v36 = vld [vmem:[%s0 + $0x64] sm:$0xf]
  %v37 = vld [vmem:[%s0 + $0x68] sm:$0xf]
  %v38 = vld [vmem:[%s0 + $0x6c] sm:$0xf]
  %v39 = vld [vmem:[%s0 + $0x70] sm:$0xf]
  %v40 = vld [vmem:[%s0 + $0x74] sm:$0xf]
  %v41 = vld [vmem:[%s0 + $0x78] sm:$0xf]
  %v42 = vld [vmem:[%s0 + $0x7c] sm:$0xf]
  %v43 = vld [vmem:[%s0 + $0x80] sm:$0xf]
  %v44 = vld [vmem:[%s0 + $0x84] sm:$0xf]
  %v45 = vld [vmem:[%s0 + $0x88] sm:$0xf]
  %v46 = vld [vmem:[%s0 + $0x8c] sm:$0xf]
  %v47 = vld [vmem:[%s0 + $0x90] sm:$0xf]
  %v48 = vld [vmem:[%s0 + $0x94] sm:$0xf]
  %v49 = vld [vmem:[%s0 + $0x98] sm:$0xf]
  %v50 = vld [vmem:[%s0 + $0x9c] sm:$0xf]
  %v51 = vld [vmem:[%s0 + $0xa0] sm:$0xf]
  %v52 = vld [vmem:[%s0 + $0xa4] sm:$0xf]
  %v53 = vld [vmem:[%s0 + $0xa8] sm:$0xf]
  %v54 = vld [vmem:[%s0 + $0xac] sm:$0xf]
  %v55 = vld [vmem:[%s0 + $0xb0] sm:$0xf]
  %v56 = vld [vmem:[%s0 + $0xb4] sm:$0xf]
  %v57 = vld [vmem:[%s0 + $0xb8] sm:$0xf]
  %v58 = vld [vmem:[%s0 + $0xbc] sm:$0xf]
  %v59 = vld [vmem:[%s0 + $0xc0] sm:$0xf]
  %v60 = vld [vmem:[%s0 + $0xc4] sm:$0xf]
  %v61 = vld [vmem:[%s0 + $0xc8] sm:$0xf]
  %v62 = vld [vmem:[%s0 + $0xcc] sm:$0xf]
  %v63 = vld [vmem:[%s0 + $0xd0] sm:$0xf]
  %v64 = vld [vmem:[%s0 + $0xd4] sm:$0xf]
  %v65 = vld [vmem:[%s0 + $0xd8] sm:$0xf]
  %v66 = vld [vmem:[%s0 + $0xdc] sm:$0xf]
  %v67 = vld [vmem:[%s0 + $0xe0] sm:$0xf]
  %v68 = vld [vmem:[%s0 + $0xe4] sm:$0xf]
  %v69 = vld [vmem:[%s0 + $0xe8] sm:$0xf]
  %v70 = vld [vmem:[%s0 + $0xec] sm:$0xf]
  %v71 = vld [vmem:[%s0 + $0xf0] sm:$0xf]
  %v72 = vld [vmem:[%s0 + $0xf4] sm:$0xf]
  %v73 = vld [vmem:[%s0 + $0xf8] sm:$0xf]
  %v74 = vld [vmem:[%s0 + $0xfc] sm:$0xf]
  %v75 = vld [vmem:[%s1] sm:$0xf]
  %v76 = vld [vmem:[%s1 + $0x4] sm:$0xf]
  %v77 = vld [vmem:[%s1 + $0x8] sm:$0xf]
  %v78 = vld [vmem:[%s1 + $0xc] sm:$0xf]
  %v79 = vld [vmem:[%s1 + $0x10] sm:$0xf]
  %v80 = vld [vmem:[%s1 + $0x14] sm:$0xf]
  %v81 = vld [vmem:[%s1 + $0x18] sm:$0xf]
  %v82 = vld [vmem:[%s1 + $0x1c] sm:$0xf]
  %v83 = vld [vmem:[%s1 + $0x20] sm:$0xf]
  %v84 = vld [vmem:[%s1 + $0x24] sm:$0xf]
  %v85 = vld [vmem:[%s1 + $0x28] sm:$0xf]
  %v86 = vld [vmem:[%s1 + $0x2c] sm:$0xf]
  %v87 = vld [vmem:[%s1 + $0x30] sm:$0xf]
  %v88 = vld [vmem:[%s1 + $0x34] sm:$0xf]
  %v89 = vld [vmem:[%s1 + $0x38] sm:$0xf]
  %v90 = vld [vmem:[%s1 + $0x3c] sm:$0xf]
  %v155 = vunpack.c.l.b16 %v11
  %v156 = vunpack.c.l.b16 %v12
  %v157 = vunpack.c.l.b16 %v13
  %v158 = vunpack.c.l.b16 %v14
  %v159 = vunpack.c.l.b16 %v15
  %v160 = vunpack.c.l.b16 %v16
  %v161 = vunpack.c.l.b16 %v17
  %v162 = vunpack.c.l.b16 %v18
  %v163 = vunpack.c.l.b16 %v19
  %v164 = vunpack.c.l.b16 %v20
  %v165 = vunpack.c.l.b16 %v21
  %v166 = vunpack.c.l.b16 %v22
  %v167 = vunpack.c.l.b16 %v23
  %v168 = vunpack.c.l.b16 %v24
  %v169 = vunpack.c.l.b16 %v25
  %v170 = vunpack.c.l.b16 %v26
  %v171 = vunpack.c.l.b16 %v27
  %v172 = vunpack.c.l.b16 %v28
  %v173 = vunpack.c.l.b16 %v29
  %v174 = vunpack.c.l.b16 %v30
  %v175 = vunpack.c.l.b16 %v31
  %v176 = vunpack.c.l.b16 %v32
  %v177 = vunpack.c.l.b16 %v33
  %v178 = vunpack.c.l.b16 %v34
  %v179 = vunpack.c.l.b16 %v35
  %v180 = vunpack.c.l.b16 %v36
  %v181 = vunpack.c.l.b16 %v37
  %v182 = vunpack.c.l.b16 %v38
  %v183 = vunpack.c.l.b16 %v39
  %v184 = vunpack.c.l.b16 %v40
  %v185 = vunpack.c.l.b16 %v41
  %v186 = vunpack.c.l.b16 %v42
  %v187 = vunpack.c.l.b16 %v43
  %v188 = vunpack.c.l.b16 %v44
  %v189 = vunpack.c.l.b16 %v45
  %v190 = vunpack.c.l.b16 %v46
  %v191 = vunpack.c.l.b16 %v47
  %v192 = vunpack.c.l.b16 %v48
  %v193 = vunpack.c.l.b16 %v49
  %v194 = vunpack.c.l.b16 %v50
  %v195 = vunpack.c.l.b16 %v51
  %v196 = vunpack.c.l.b16 %v52
  %v197 = vunpack.c.l.b16 %v53
  %v198 = vunpack.c.l.b16 %v54
  %v199 = vunpack.c.l.b16 %v55
  %v200 = vunpack.c.l.b16 %v56
  %v201 = vunpack.c.l.b16 %v57
  %v202 = vunpack.c.l.b16 %v58
  %v203 = vunpack.c.l.b16 %v59
  %v204 = vunpack.c.l.b16 %v60
  %v205 = vunpack.c.l.b16 %v61
  %v206 = vunpack.c.l.b16 %v62
  %v207 = vunpack.c.l.b16 %v63
  %v208 = vunpack.c.l.b16 %v64
  %v209 = vunpack.c.l.b16 %v65
  %v210 = vunpack.c.l.b16 %v66
  %v211 = vunpack.c.l.b16 %v67
  %v212 = vunpack.c.l.b16 %v68
  %v213 = vunpack.c.l.b16 %v69
  %v214 = vunpack.c.l.b16 %v70
  %v215 = vunpack.c.l.b16 %v71
  %v216 = vunpack.c.l.b16 %v72
  %v217 = vunpack.c.l.b16 %v73
  %v218 = vunpack.c.l.b16 %v74
  %v219 = vpack.c.b16 %v156, %v155
  %v220 = vpack.c.b16 %v158, %v157
  %v221 = vpack.c.b16 %v160, %v159
  %v222 = vpack.c.b16 %v162, %v161
  %v223 = vpack.c.b16 %v164, %v163
  %v224 = vpack.c.b16 %v166, %v165
  %v225 = vpack.c.b16 %v168, %v167
  %v226 = vpack.c.b16 %v170, %v169
  %v227 = vpack.c.b16 %v172, %v171
  %v228 = vpack.c.b16 %v174, %v173
  %v229 = vpack.c.b16 %v176, %v175
  %v230 = vpack.c.b16 %v178, %v177
  %v231 = vpack.c.b16 %v180, %v179
  %v232 = vpack.c.b16 %v182, %v181
  %v233 = vpack.c.b16 %v184, %v183
  %v234 = vpack.c.b16 %v186, %v185
  %v235 = vpack.c.b16 %v188, %v187
  %v236 = vpack.c.b16 %v190, %v189
  %v237 = vpack.c.b16 %v192, %v191
  %v238 = vpack.c.b16 %v194, %v193
  %v239 = vpack.c.b16 %v196, %v195
  %v240 = vpack.c.b16 %v198, %v197
  %v241 = vpack.c.b16 %v200, %v199
  %v242 = vpack.c.b16 %v202, %v201
  %v243 = vpack.c.b16 %v204, %v203
  %v244 = vpack.c.b16 %v206, %v205
  %v245 = vpack.c.b16 %v208, %v207
  %v246 = vpack.c.b16 %v210, %v209
  %v247 = vpack.c.b16 %v212, %v211
  %v248 = vpack.c.b16 %v214, %v213
  %v249 = vpack.c.b16 %v216, %v215
  %v250 = vpack.c.b16 %v218, %v217
  %v299 = vunpack.c.l.b16 %v75
  %v300 = vunpack.c.l.b16 %v76
  %v301 = vunpack.c.l.b16 %v77
  %v302 = vunpack.c.l.b16 %v78
  %v303 = vunpack.c.l.b16 %v79
  %v304 = vunpack.c.l.b16 %v80
  %v305 = vunpack.c.l.b16 %v81
  %v306 = vunpack.c.l.b16 %v82
  %v307 = vunpack.c.l.b16 %v83
  %v308 = vunpack.c.l.b16 %v84
  %v309 = vunpack.c.l.b16 %v85
  %v310 = vunpack.c.l.b16 %v86
  %v311 = vunpack.c.l.b16 %v87
  %v312 = vunpack.c.l.b16 %v88
  %v313 = vunpack.c.l.b16 %v89
  %v314 = vunpack.c.l.b16 %v90
  %v315 = vpack.c.b16 %v300, %v299
  %v316 = vpack.c.b16 %v302, %v301
  %v317 = vpack.c.b16 %v304, %v303
  %v318 = vpack.c.b16 %v306, %v305
  %v319 = vpack.c.b16 %v308, %v307
  %v320 = vpack.c.b16 %v310, %v309
  %v321 = vpack.c.b16 %v312, %v311
  %v322 = vpack.c.b16 %v314, %v313
  %331 = vmatpush.bf16.msra.mxu0 %v322
  %332 = vmatpush.bf16.msra.mxu0 %v321
  %333 = vmatpush.bf16.msra.mxu0 %v320
  %334 = vmatpush.bf16.msra.mxu0 %v319
  %335 = vmatpush.bf16.msra.mxu0 %v318
  %336 = vmatpush.bf16.msra.mxu0 %v317
  %337 = vmatpush.bf16.msra.mxu0 %v316
  %338 = vmatpush.bf16.msra.mxu0 %v315
  %339 = vmatmul.bf16.gmra.mxu0 %v219
  %v340 = vpop.f32.mrf.mxu0
  %v341 = vadd.f32 0.0, %v340
  %v342 = vpop.f32.mrf.mxu0
  %v343 = vadd.f32 0.0, %v342
  %344 = vmatmul.bf16.gmra.mxu0 %v220
  %v345 = vpop.f32.mrf.mxu0
  %v346 = vadd.f32 0.0, %v345
  %v347 = vpop.f32.mrf.mxu0
  %v348 = vadd.f32 0.0, %v347
  %349 = vmatmul.bf16.gmra.mxu0 %v221
  %v350 = vpop.f32.mrf.mxu0
  %v351 = vadd.f32 0.0, %v350
  %v352 = vpop.f32.mrf.mxu0
  %v353 = vadd.f32 0.0, %v352
  %354 = vmatmul.bf16.gmra.mxu0 %v222
  %v355 = vpop.f32.mrf.mxu0
  %v356 = vadd.f32 0.0, %v355
  %v357 = vpop.f32.mrf.mxu0
  %v358 = vadd.f32 0.0, %v357
  %359 = vmatmul.bf16.gmra.mxu0 %v223
  %v360 = vpop.f32.mrf.mxu0
  %v361 = vadd.f32 0.0, %v360
  %v362 = vpop.f32.mrf.mxu0
  %v363 = vadd.f32 0.0, %v362
  %364 = vmatmul.bf16.gmra.mxu0 %v224
  %v365 = vpop.f32.mrf.mxu0
  %v366 = vadd.f32 0.0, %v365
  %v367 = vpop.f32.mrf.mxu0
  %v368 = vadd.f32 0.0, %v367
  %369 = vmatmul.bf16.gmra.mxu0 %v225
  %v370 = vpop.f32.mrf.mxu0
  %v371 = vadd.f32 0.0, %v370
  %v372 = vpop.f32.mrf.mxu0
  %v373 = vadd.f32 0.0, %v372
  %374 = vmatmul.bf16.gmra.mxu0 %v226
  %v375 = vpop.f32.mrf.mxu0
  %v376 = vadd.f32 0.0, %v375
  %v377 = vpop.f32.mrf.mxu0
  %v378 = vadd.f32 0.0, %v377
  %379 = vmatmul.bf16.gmra.mxu0 %v227
  %v380 = vpop.f32.mrf.mxu0
  %v381 = vadd.f32 0.0, %v380
  %v382 = vpop.f32.mrf.mxu0
  %v383 = vadd.f32 0.0, %v382
  %384 = vmatmul.bf16.gmra.mxu0 %v228
  %v385 = vpop.f32.mrf.mxu0
  %v386 = vadd.f32 0.0, %v385
  %v387 = vpop.f32.mrf.mxu0
  %v388 = vadd.f32 0.0, %v387
  %389 = vmatmul.bf16.gmra.mxu0 %v229
  %v390 = vpop.f32.mrf.mxu0
  %v391 = vadd.f32 0.0, %v390
  %v392 = vpop.f32.mrf.mxu0
  %v393 = vadd.f32 0.0, %v392
  %394 = vmatmul.bf16.gmra.mxu0 %v230
  %v395 = vpop.f32.mrf.mxu0
  %v396 = vadd.f32 0.0, %v395
  %v397 = vpop.f32.mrf.mxu0
  %v398 = vadd.f32 0.0, %v397
  %399 = vmatmul.bf16.gmra.mxu0 %v231
  %v400 = vpop.f32.mrf.mxu0
  %v401 = vadd.f32 0.0, %v400
  %v402 = vpop.f32.mrf.mxu0
  %v403 = vadd.f32 0.0, %v402
  %404 = vmatmul.bf16.gmra.mxu0 %v232
  %v405 = vpop.f32.mrf.mxu0
  %v406 = vadd.f32 0.0, %v405
  %v407 = vpop.f32.mrf.mxu0
  %v408 = vadd.f32 0.0, %v407
  %409 = vmatmul.bf16.gmra.mxu0 %v233
  %v410 = vpop.f32.mrf.mxu0
  %v411 = vadd.f32 0.0, %v410
  %v412 = vpop.f32.mrf.mxu0
  %v413 = vadd.f32 0.0, %v412
  %414 = vmatmul.bf16.gmra.mxu0 %v234
  %v415 = vpop.f32.mrf.mxu0
  %v416 = vadd.f32 0.0, %v415
  %v417 = vpop.f32.mrf.mxu0
  %v418 = vadd.f32 0.0, %v417
  %419 = vmatmul.bf16.gmra.mxu0 %v235
  %v420 = vpop.f32.mrf.mxu0
  %v421 = vadd.f32 0.0, %v420
  %v422 = vpop.f32.mrf.mxu0
  %v423 = vadd.f32 0.0, %v422
  %424 = vmatmul.bf16.gmra.mxu0 %v236
  %v425 = vpop.f32.mrf.mxu0
  %v426 = vadd.f32 0.0, %v425
  %v427 = vpop.f32.mrf.mxu0
  %v428 = vadd.f32 0.0, %v427
  %429 = vmatmul.bf16.gmra.mxu0 %v237
  %v430 = vpop.f32.mrf.mxu0
  %v431 = vadd.f32 0.0, %v430
  %v432 = vpop.f32.mrf.mxu0
  %v433 = vadd.f32 0.0, %v432
  %434 = vmatmul.bf16.gmra.mxu0 %v238
  %v435 = vpop.f32.mrf.mxu0
  %v436 = vadd.f32 0.0, %v435
  %v437 = vpop.f32.mrf.mxu0
  %v438 = vadd.f32 0.0, %v437
  %439 = vmatmul.bf16.gmra.mxu0 %v239
  %v440 = vpop.f32.mrf.mxu0
  %v441 = vadd.f32 0.0, %v440
  %v442 = vpop.f32.mrf.mxu0
  %v443 = vadd.f32 0.0, %v442
  %444 = vmatmul.bf16.gmra.mxu0 %v240
  %v445 = vpop.f32.mrf.mxu0
  %v446 = vadd.f32 0.0, %v445
  %v447 = vpop.f32.mrf.mxu0
  %v448 = vadd.f32 0.0, %v447
  %449 = vmatmul.bf16.gmra.mxu0 %v241
  %v450 = vpop.f32.mrf.mxu0
  %v451 = vadd.f32 0.0, %v450
  %v452 = vpop.f32.mrf.mxu0
  %v453 = vadd.f32 0.0, %v452
  %454 = vmatmul.bf16.gmra.mxu0 %v242
  %v455 = vpop.f32.mrf.mxu0
  %v456 = vadd.f32 0.0, %v455
  %v457 = vpop.f32.mrf.mxu0
  %v458 = vadd.f32 0.0, %v457
  %459 = vmatmul.bf16.gmra.mxu0 %v243
  %v460 = vpop.f32.mrf.mxu0
  %v461 = vadd.f32 0.0, %v460
  %v462 = vpop.f32.mrf.mxu0
  %v463 = vadd.f32 0.0, %v462
  %464 = vmatmul.bf16.gmra.mxu0 %v244
  %v465 = vpop.f32.mrf.mxu0
  %v466 = vadd.f32 0.0, %v465
  %v467 = vpop.f32.mrf.mxu0
  %v468 = vadd.f32 0.0, %v467
  %469 = vmatmul.bf16.gmra.mxu0 %v245
  %v470 = vpop.f32.mrf.mxu0
  %v471 = vadd.f32 0.0, %v470
  %v472 = vpop.f32.mrf.mxu0
  %v473 = vadd.f32 0.0, %v472
  %474 = vmatmul.bf16.gmra.mxu0 %v246
  %v475 = vpop.f32.mrf.mxu0
  %v476 = vadd.f32 0.0, %v475
  %v477 = vpop.f32.mrf.mxu0
  %v478 = vadd.f32 0.0, %v477
  %479 = vmatmul.bf16.gmra.mxu0 %v247
  %v480 = vpop.f32.mrf.mxu0
  %v481 = vadd.f32 0.0, %v480
  %v482 = vpop.f32.mrf.mxu0
  %v483 = vadd.f32 0.0, %v482
  %484 = vmatmul.bf16.gmra.mxu0 %v248
  %v485 = vpop.f32.mrf.mxu0
  %v486 = vadd.f32 0.0, %v485
  %v487 = vpop.f32.mrf.mxu0
  %v488 = vadd.f32 0.0, %v487
  %489 = vmatmul.bf16.gmra.mxu0 %v249
  %v490 = vpop.f32.mrf.mxu0
  %v491 = vadd.f32 0.0, %v490
  %v492 = vpop.f32.mrf.mxu0
  %v493 = vadd.f32 0.0, %v492
  %494 = vmatmul.bf16.gmra.mxu0 %v250
  %v495 = vpop.f32.mrf.mxu0
  %v496 = vadd.f32 0.0, %v495
  %v497 = vpop.f32.mrf.mxu0
  %v498 = vadd.f32 0.0, %v497
  %499 = vdwg.mxu0
  %v500 = vpack.c.bf16 %v341, %v341
  %v501 = vpack.c.bf16 %v343, %v343
  %v502 = vpack.c.bf16 %v346, %v346
  %v503 = vpack.c.bf16 %v348, %v348
  %v504 = vpack.c.bf16 %v351, %v351
  %v505 = vpack.c.bf16 %v353, %v353
  %v506 = vpack.c.bf16 %v356, %v356
  %v507 = vpack.c.bf16 %v358, %v358
  %v508 = vpack.c.bf16 %v361, %v361
  %v509 = vpack.c.bf16 %v363, %v363
  %v510 = vpack.c.bf16 %v366, %v366
  %v511 = vpack.c.bf16 %v368, %v368
  %v512 = vpack.c.bf16 %v371, %v371
  %v513 = vpack.c.bf16 %v373, %v373
  %v514 = vpack.c.bf16 %v376, %v376
  %v515 = vpack.c.bf16 %v378, %v378
  %v516 = vpack.c.bf16 %v381, %v381
  %v517 = vpack.c.bf16 %v383, %v383
  %v518 = vpack.c.bf16 %v386, %v386
  %v519 = vpack.c.bf16 %v388, %v388
  %v520 = vpack.c.bf16 %v391, %v391
  %v521 = vpack.c.bf16 %v393, %v393
  %v522 = vpack.c.bf16 %v396, %v396
  %v523 = vpack.c.bf16 %v398, %v398
  %v524 = vpack.c.bf16 %v401, %v401
  %v525 = vpack.c.bf16 %v403, %v403
  %v526 = vpack.c.bf16 %v406, %v406
  %v527 = vpack.c.bf16 %v408, %v408
  %v528 = vpack.c.bf16 %v411, %v411
  %v529 = vpack.c.bf16 %v413, %v413
  %v530 = vpack.c.bf16 %v416, %v416
  %v531 = vpack.c.bf16 %v418, %v418
  %v532 = vpack.c.bf16 %v421, %v421
  %v533 = vpack.c.bf16 %v423, %v423
  %v534 = vpack.c.bf16 %v426, %v426
  %v535 = vpack.c.bf16 %v428, %v428
  %v536 = vpack.c.bf16 %v431, %v431
  %v537 = vpack.c.bf16 %v433, %v433
  %v538 = vpack.c.bf16 %v436, %v436
  %v539 = vpack.c.bf16 %v438, %v438
  %v540 = vpack.c.bf16 %v441, %v441
  %v541 = vpack.c.bf16 %v443, %v443
  %v542 = vpack.c.bf16 %v446, %v446
  %v543 = vpack.c.bf16 %v448, %v448
  %v544 = vpack.c.bf16 %v451, %v451
  %v545 = vpack.c.bf16 %v453, %v453
  %v546 = vpack.c.bf16 %v456, %v456
  %v547 = vpack.c.bf16 %v458, %v458
  %v548 = vpack.c.bf16 %v461, %v461
  %v549 = vpack.c.bf16 %v463, %v463
  %v550 = vpack.c.bf16 %v466, %v466
  %v551 = vpack.c.bf16 %v468, %v468
  %v552 = vpack.c.bf16 %v471, %v471
  %v553 = vpack.c.bf16 %v473, %v473
  %v554 = vpack.c.bf16 %v476, %v476
  %v555 = vpack.c.bf16 %v478, %v478
  %v556 = vpack.c.bf16 %v481, %v481
  %v557 = vpack.c.bf16 %v483, %v483
  %v558 = vpack.c.bf16 %v486, %v486
  %v559 = vpack.c.bf16 %v488, %v488
  %v560 = vpack.c.bf16 %v491, %v491
  %v561 = vpack.c.bf16 %v493, %v493
  %v562 = vpack.c.bf16 %v496, %v496
  %v563 = vpack.c.bf16 %v498, %v498
  %564 = vst [vmem:[%s2] sm:$0xf] %v500
  %565 = vst [vmem:[%s2 + $0x4] sm:$0xf] %v501
  %566 = vst [vmem:[%s2 + $0x8] sm:$0xf] %v502
  %567 = vst [vmem:[%s2 + $0xc] sm:$0xf] %v503
  %568 = vst [vmem:[%s2 + $0x10] sm:$0xf] %v504
  %569 = vst [vmem:[%s2 + $0x14] sm:$0xf] %v505
  %570 = vst [vmem:[%s2 + $0x18] sm:$0xf] %v506
  %571 = vst [vmem:[%s2 + $0x1c] sm:$0xf] %v507
  %572 = vst [vmem:[%s2 + $0x20] sm:$0xf] %v508
  %573 = vst [vmem:[%s2 + $0x24] sm:$0xf] %v509
  %574 = vst [vmem:[%s2 + $0x28] sm:$0xf] %v510
  %575 = vst [vmem:[%s2 + $0x2c] sm:$0xf] %v511
  %576 = vst [vmem:[%s2 + $0x30] sm:$0xf] %v512
  %577 = vst [vmem:[%s2 + $0x34] sm:$0xf] %v513
  %578 = vst [vmem:[%s2 + $0x38] sm:$0xf] %v514
  %579 = vst [vmem:[%s2 + $0x3c] sm:$0xf] %v515
  %580 = vst [vmem:[%s2 + $0x40] sm:$0xf] %v516
  %581 = vst [vmem:[%s2 + $0x44] sm:$0xf] %v517
  %582 = vst [vmem:[%s2 + $0x48] sm:$0xf] %v518
  %583 = vst [vmem:[%s2 + $0x4c] sm:$0xf] %v519
  %584 = vst [vmem:[%s2 + $0x50] sm:$0xf] %v520
  %585 = vst [vmem:[%s2 + $0x54] sm:$0xf] %v521
  %586 = vst [vmem:[%s2 + $0x58] sm:$0xf] %v522
  %587 = vst [vmem:[%s2 + $0x5c] sm:$0xf] %v523
  %588 = vst [vmem:[%s2 + $0x60] sm:$0xf] %v524
  %589 = vst [vmem:[%s2 + $0x64] sm:$0xf] %v525
  %590 = vst [vmem:[%s2 + $0x68] sm:$0xf] %v526
  %591 = vst [vmem:[%s2 + $0x6c] sm:$0xf] %v527
  %592 = vst [vmem:[%s2 + $0x70] sm:$0xf] %v528
  %593 = vst [vmem:[%s2 + $0x74] sm:$0xf] %v529
  %594 = vst [vmem:[%s2 + $0x78] sm:$0xf] %v530
  %595 = vst [vmem:[%s2 + $0x7c] sm:$0xf] %v531
  %596 = vst [vmem:[%s2 + $0x80] sm:$0xf] %v532
  %597 = vst [vmem:[%s2 + $0x84] sm:$0xf] %v533
  %598 = vst [vmem:[%s2 + $0x88] sm:$0xf] %v534
  %599 = vst [vmem:[%s2 + $0x8c] sm:$0xf] %v535
  %600 = vst [vmem:[%s2 + $0x90] sm:$0xf] %v536
  %601 = vst [vmem:[%s2 + $0x94] sm:$0xf] %v537
  %602 = vst [vmem:[%s2 + $0x98] sm:$0xf] %v538
  %603 = vst [vmem:[%s2 + $0x9c] sm:$0xf] %v539
  %604 = vst [vmem:[%s2 + $0xa0] sm:$0xf] %v540
  %605 = vst [vmem:[%s2 + $0xa4] sm:$0xf] %v541
  %606 = vst [vmem:[%s2 + $0xa8] sm:$0xf] %v542
  %607 = vst [vmem:[%s2 + $0xac] sm:$0xf] %v543
  %608 = vst [vmem:[%s2 + $0xb0] sm:$0xf] %v544
  %609 = vst [vmem:[%s2 + $0xb4] sm:$0xf] %v545
  %610 = vst [vmem:[%s2 + $0xb8] sm:$0xf] %v546
  %611 = vst [vmem:[%s2 + $0xbc] sm:$0xf] %v547
  %612 = vst [vmem:[%s2 + $0xc0] sm:$0xf] %v548
  %613 = vst [vmem:[%s2 + $0xc4] sm:$0xf] %v549
  %614 = vst [vmem:[%s2 + $0xc8] sm:$0xf] %v550
  %615 = vst [vmem:[%s2 + $0xcc] sm:$0xf] %v551
  %616 = vst [vmem:[%s2 + $0xd0] sm:$0xf] %v552
  %617 = vst [vmem:[%s2 + $0xd4] sm:$0xf] %v553
  %618 = vst [vmem:[%s2 + $0xd8] sm:$0xf] %v554
  %619 = vst [vmem:[%s2 + $0xdc] sm:$0xf] %v555
  %620 = vst [vmem:[%s2 + $0xe0] sm:$0xf] %v556
  %621 = vst [vmem:[%s2 + $0xe4] sm:$0xf] %v557
  %622 = vst [vmem:[%s2 + $0xe8] sm:$0xf] %v558
  %623 = vst [vmem:[%s2 + $0xec] sm:$0xf] %v559
  %624 = vst [vmem:[%s2 + $0xf0] sm:$0xf] %v560
  %625 = vst [vmem:[%s2 + $0xf4] sm:$0xf] %v561
  %626 = vst [vmem:[%s2 + $0xf8] sm:$0xf] %v562
  %627 = vst [vmem:[%s2 + $0xfc] sm:$0xf] %v563
  // Predicated region
  $region10: #{discriminator_forward.5} parent=0 // pred_check
    _
  $region11: #{discriminator_forward.5} parent=0 // pred_check_branch
    %629 = sbr.rel (0) target = $region13
  $region12: #{discriminator_forward.5} parent=0 // pred_region
    _
  $region13: #{discriminator_forward.5} parent=0 // pred_fallthru
    _
  // Predicated region
  $region14: #{discriminator_forward.5} parent=0 // pred_check
    _
  $region15: #{discriminator_forward.5} parent=0 // pred_check_branch
    %631 = sbr.rel (0) target = $region17
  $region16: #{discriminator_forward.5} parent=0 // pred_region
    _
  $region17: #{discriminator_forward.5} parent=0 // pred_fallthru
    _

// kernel: discriminator_forward.6
$region0: #{discriminator_forward.6}
  #allocation0 [shape = 'u32[]', space=smem, size = 0x4, offset = 0x4, fixed_abs, tag = 'smem constant byte address 0x4 - core index']
  #allocation1 [shape = 'u32[72,128]{1,0:T(1,128)}', space=vmem, size = 0x9000, scoped, tag = 'internal scratch']
  %s0 = inlined_call_operand.vmem [shape: bf16[128,128], index: 0, kind: input, shape index: {}]
  %s1 = inlined_call_operand.vmem [shape: bf16[128,128], index: 1, kind: input, shape index: {}]
  %s2 = inlined_call_operand.vmem [shape: bf16[128,128], index: 2, kind: output, shape index: {0}]
  %s3 = inlined_call_operand.vmem [shape: f32[1,8,128], index: 3, kind: output, shape index: {1}]
  %4 = xla_tuple %s2, %s3
  %s5 = sld [smem:[#allocation0]]
  $region26: #{discriminator_forward.6} parent=0
    _
  %s7 = ssub.s32 1, %s5
  %s8 = scalar_select 0, %s7, %s5
  // Predicated region
  $region2: #{discriminator_forward.6} parent=0 // pred_check
    _
  $region3: #{discriminator_forward.6} parent=0 // pred_check_branch
    %10 = sbr.rel (0) target = $region5
  $region4: #{discriminator_forward.6} parent=0 // pred_region
    _
  $region5: #{discriminator_forward.6} parent=0 // pred_fallthru
    _
  // Predicated region
  $region6: #{discriminator_forward.6} parent=0 // pred_check
    _
  $region7: #{discriminator_forward.6} parent=0 // pred_check_branch
    %12 = sbr.rel (0) target = $region9
  $region8: #{discriminator_forward.6} parent=0 // pred_region
    _
  $region9: #{discriminator_forward.6} parent=0 // pred_fallthru
    _
  %v13 = vld [vmem:[%s0] sm:$0xf]
  %v14 = vld [vmem:[%s0 + $0x4] sm:$0xf]
  %v15 = vld [vmem:[%s0 + $0x8] sm:$0xf]
  %v16 = vld [vmem:[%s0 + $0xc] sm:$0xf]
  %v17 = vld [vmem:[%s0 + $0x10] sm:$0xf]
  %v18 = vld [vmem:[%s0 + $0x14] sm:$0xf]
  %v19 = vld [vmem:[%s0 + $0x18] sm:$0xf]
  %v20 = vld [vmem:[%s0 + $0x1c] sm:$0xf]
  %v21 = vld [vmem:[%s0 + $0x20] sm:$0xf]
  %v22 = vld [vmem:[%s0 + $0x24] sm:$0xf]
  %v23 = vld [vmem:[%s0 + $0x28] sm:$0xf]
  %v24 = vld [vmem:[%s0 + $0x2c] sm:$0xf]
  %v25 = vld [vmem:[%s0 + $0x30] sm:$0xf]
  %v26 = vld [vmem:[%s0 + $0x34] sm:$0xf]
  %v27 = vld [vmem:[%s0 + $0x38] sm:$0xf]
  %v28 = vld [vmem:[%s0 + $0x3c] sm:$0xf]
  %v29 = vunpack.c.l.bf16 %v13
  %v30 = vunpack.c.l.bf16 %v14
  %v31 = vunpack.c.l.bf16 %v15
  %v32 = vunpack.c.l.bf16 %v16
  %v33 = vunpack.c.l.bf16 %v17
  %v34 = vunpack.c.l.bf16 %v18
  %v35 = vunpack.c.l.bf16 %v19
  %v36 = vunpack.c.l.bf16 %v20
  %v37 = vunpack.c.l.bf16 %v21
  %v38 = vunpack.c.l.bf16 %v22
  %v39 = vunpack.c.l.bf16 %v23
  %v40 = vunpack.c.l.bf16 %v24
  %v41 = vunpack.c.l.bf16 %v25
  %v42 = vunpack.c.l.bf16 %v26
  %v43 = vunpack.c.l.bf16 %v27
  %v44 = vunpack.c.l.bf16 %v28
  %vm45 = vcmp.gt.f32.partialorder %v29, 0.0
  %vm46 = vcmp.gt.f32.partialorder %v30, 0.0
  %vm47 = vcmp.gt.f32.partialorder %v31, 0.0
  %vm48 = vcmp.gt.f32.partialorder %v32, 0.0
  %vm49 = vcmp.gt.f32.partialorder %v33, 0.0
  %vm50 = vcmp.gt.f32.partialorder %v34, 0.0
  %vm51 = vcmp.gt.f32.partialorder %v35, 0.0
  %vm52 = vcmp.gt.f32.partialorder %v36, 0.0
  %vm53 = vcmp.gt.f32.partialorder %v37, 0.0
  %vm54 = vcmp.gt.f32.partialorder %v38, 0.0
  %vm55 = vcmp.gt.f32.partialorder %v39, 0.0
  %vm56 = vcmp.gt.f32.partialorder %v40, 0.0
  %vm57 = vcmp.gt.f32.partialorder %v41, 0.0
  %vm58 = vcmp.gt.f32.partialorder %v42, 0.0
  %vm59 = vcmp.gt.f32.partialorder %v43, 0.0
  %vm60 = vcmp.gt.f32.partialorder %v44, 0.0
  %v61 = vmul.f32 %v29, 0.2
  %v62 = vmul.f32 %v30, 0.2
  %v63 = vmul.f32 %v31, 0.2
  %v64 = vmul.f32 %v32, 0.2
  %v65 = vmul.f32 %v33, 0.2
  %v66 = vmul.f32 %v34, 0.2
  %v67 = vmul.f32 %v35, 0.2
  %v68 = vmul.f32 %v36, 0.2
  %v69 = vmul.f32 %v37, 0.2
  %v70 = vmul.f32 %v38, 0.2
  %v71 = vmul.f32 %v39, 0.2
  %v72 = vmul.f32 %v40, 0.2
  %v73 = vmul.f32 %v41, 0.2
  %v74 = vmul.f32 %v42, 0.2
  %v75 = vmul.f32 %v43, 0.2
  %v76 = vmul.f32 %v44, 0.2
  %v77 = vsel %vm45, %v29, %v61
  %v78 = vsel %vm46, %v30, %v62
  %v79 = vsel %vm47, %v31, %v63
  %v80 = vsel %vm48, %v32, %v64
  %v81 = vsel %vm49, %v33, %v65
  %v82 = vsel %vm50, %v34, %v66
  %v83 = vsel %vm51, %v35, %v67
  %v84 = vsel %vm52, %v36, %v68
  %v85 = vsel %vm53, %v37, %v69
  %v86 = vsel %vm54, %v38, %v70
  %v87 = vsel %vm55, %v39, %v71
  %v88 = vsel %vm56, %v40, %v72
  %v89 = vsel %vm57, %v41, %v73
  %v90 = vsel %vm58, %v42, %v74
  %v91 = vsel %vm59, %v43, %v75
  %v92 = vsel %vm60, %v44, %v76
  %v93 = vpack.c.bf16 %v78, %v77
  %v94 = vpack.c.bf16 %v80, %v79
  %v95 = vpack.c.bf16 %v82, %v81
  %v96 = vpack.c.bf16 %v84, %v83
  %v97 = vpack.c.bf16 %v86, %v85
  %v98 = vpack.c.bf16 %v88, %v87
  %v99 = vpack.c.bf16 %v90, %v89
  %v100 = vpack.c.bf16 %v92, %v91
  %v101 = vld [vmem:[%s1] sm:$0xf]
  %v102 = vld [vmem:[%s1 + $0x4] sm:$0xf]
  %v103 = vld [vmem:[%s1 + $0x8] sm:$0xf]
  %v104 = vld [vmem:[%s1 + $0xc] sm:$0xf]
  %v105 = vld [vmem:[%s1 + $0x10] sm:$0xf]
  %v106 = vld [vmem:[%s1 + $0x14] sm:$0xf]
  %v107 = vld [vmem:[%s1 + $0x18] sm:$0xf]
  %v108 = vld [vmem:[%s1 + $0x1c] sm:$0xf]
  %v109 = vld [vmem:[%s1 + $0x20] sm:$0xf]
  %v110 = vld [vmem:[%s1 + $0x24] sm:$0xf]
  %v111 = vld [vmem:[%s1 + $0x28] sm:$0xf]
  %v112 = vld [vmem:[%s1 + $0x2c] sm:$0xf]
  %v113 = vld [vmem:[%s1 + $0x30] sm:$0xf]
  %v114 = vld [vmem:[%s1 + $0x34] sm:$0xf]
  %v115 = vld [vmem:[%s1 + $0x38] sm:$0xf]
  %v116 = vld [vmem:[%s1 + $0x3c] sm:$0xf]
  %v133 = vunpack.c.l.b16 %v101
  %v134 = vunpack.c.l.b16 %v102
  %v135 = vunpack.c.l.b16 %v103
  %v136 = vunpack.c.l.b16 %v104
  %v137 = vunpack.c.l.b16 %v105
  %v138 = vunpack.c.l.b16 %v106
  %v139 = vunpack.c.l.b16 %v107
  %v140 = vunpack.c.l.b16 %v108
  %v141 = vunpack.c.l.b16 %v109
  %v142 = vunpack.c.l.b16 %v110
  %v143 = vunpack.c.l.b16 %v111
  %v144 = vunpack.c.l.b16 %v112
  %v145 = vunpack.c.l.b16 %v113
  %v146 = vunpack.c.l.b16 %v114
  %v147 = vunpack.c.l.b16 %v115
  %v148 = vunpack.c.l.b16 %v116
  %v149 = vpack.c.b16 %v134, %v133
  %v150 = vpack.c.b16 %v136, %v135
  %v151 = vpack.c.b16 %v138, %v137
  %v152 = vpack.c.b16 %v140, %v139
  %v153 = vpack.c.b16 %v142, %v141
  %v154 = vpack.c.b16 %v144, %v143
  %v155 = vpack.c.b16 %v146, %v145
  %v156 = vpack.c.b16 %v148, %v147
  %165 = vmatpush.bf16.msra.mxu0 %v156
  %166 = vmatpush.bf16.msra.mxu0 %v155
  %167 = vmatpush.bf16.msra.mxu0 %v154
  %168 = vmatpush.bf16.msra.mxu0 %v153
  %169 = vmatpush.bf16.msra.mxu0 %v152
  %170 = vmatpush.bf16.msra.mxu0 %v151
  %171 = vmatpush.bf16.msra.mxu0 %v150
  %172 = vmatpush.bf16.msra.mxu0 %v149
  %173 = vmatmul.bf16.gmra.mxu0 %v93
  %v174 = vpop.f32.mrf.mxu0
  %v175 = vadd.f32 0.0, %v174
  %v176 = vpop.f32.mrf.mxu0
  %v177 = vadd.f32 0.0, %v176
  %178 = vmatmul.bf16.gmra.mxu0 %v94
  %v179 = vpop.f32.mrf.mxu0
  %v180 = vadd.f32 0.0, %v179
  %v181 = vpop.f32.mrf.mxu0
  %v182 = vadd.f32 0.0, %v181
  %183 = vmatmul.bf16.gmra.mxu0 %v95
  %v184 = vpop.f32.mrf.mxu0
  %v185 = vadd.f32 0.0, %v184
  %v186 = vpop.f32.mrf.mxu0
  %v187 = vadd.f32 0.0, %v186
  %188 = vmatmul.bf16.gmra.mxu0 %v96
  %v189 = vpop.f32.mrf.mxu0
  %v190 = vadd.f32 0.0, %v189
  %v191 = vpop.f32.mrf.mxu0
  %v192 = vadd.f32 0.0, %v191
  %193 = vmatmul.bf16.gmra.mxu0 %v97
  %v194 = vpop.f32.mrf.mxu0
  %v195 = vadd.f32 0.0, %v194
  %v196 = vpop.f32.mrf.mxu0
  %v197 = vadd.f32 0.0, %v196
  %198 = vmatmul.bf16.gmra.mxu0 %v98
  %v199 = vpop.f32.mrf.mxu0
  %v200 = vadd.f32 0.0, %v199
  %v201 = vpop.f32.mrf.mxu0
  %v202 = vadd.f32 0.0, %v201
  %203 = vmatmul.bf16.gmra.mxu0 %v99
  %v204 = vpop.f32.mrf.mxu0
  %v205 = vadd.f32 0.0, %v204
  %v206 = vpop.f32.mrf.mxu0
  %v207 = vadd.f32 0.0, %v206
  %208 = vmatmul.bf16.gmra.mxu0 %v100
  %v209 = vpop.f32.mrf.mxu0
  %v210 = vadd.f32 0.0, %v209
  %v211 = vpop.f32.mrf.mxu0
  %v212 = vadd.f32 0.0, %v211
  %213 = vdwg.mxu0
  %v214 = vpack.c.bf16 %v175, %v175
  %v215 = vpack.c.bf16 %v177, %v177
  %v216 = vpack.c.bf16 %v180, %v180
  %v217 = vpack.c.bf16 %v182, %v182
  %v218 = vpack.c.bf16 %v185, %v185
  %v219 = vpack.c.bf16 %v187, %v187
  %v220 = vpack.c.bf16 %v190, %v190
  %v221 = vpack.c.bf16 %v192, %v192
  %v222 = vpack.c.bf16 %v195, %v195
  %v223 = vpack.c.bf16 %v197, %v197
  %v224 = vpack.c.bf16 %v200, %v200
  %v225 = vpack.c.bf16 %v202, %v202
  %v226 = vpack.c.bf16 %v205, %v205
  %v227 = vpack.c.bf16 %v207, %v207
  %v228 = vpack.c.bf16 %v210, %v210
  %v229 = vpack.c.bf16 %v212, %v212
  %230 = vst [vmem:[%s2] sm:$0xf] %v214
  %231 = vst [vmem:[%s2 + $0x4] sm:$0xf] %v215
  %232 = vst [vmem:[%s2 + $0x8] sm:$0xf] %v216
  %233 = vst [vmem:[%s2 + $0xc] sm:$0xf] %v217
  %234 = vst [vmem:[%s2 + $0x10] sm:$0xf] %v218
  %235 = vst [vmem:[%s2 + $0x14] sm:$0xf] %v219
  %236 = vst [vmem:[%s2 + $0x18] sm:$0xf] %v220
  %237 = vst [vmem:[%s2 + $0x1c] sm:$0xf] %v221
  %238 = vst [vmem:[%s2 + $0x20] sm:$0xf] %v222
  %239 = vst [vmem:[%s2 + $0x24] sm:$0xf] %v223
  %240 = vst [vmem:[%s2 + $0x28] sm:$0xf] %v224
  %241 = vst [vmem:[%s2 + $0x2c] sm:$0xf] %v225
  %242 = vst [vmem:[%s2 + $0x30] sm:$0xf] %v226
  %243 = vst [vmem:[%s2 + $0x34] sm:$0xf] %v227
  %244 = vst [vmem:[%s2 + $0x38] sm:$0xf] %v228
  %245 = vst [vmem:[%s2 + $0x3c] sm:$0xf] %v229
  %v246 = vlaneseq
  %v247 = vshrl.u32 %v246, 7
  %v248 = vadd.s32 %v247, 8
  %v249 = vadd.s32 %v247, 16
  %v250 = vadd.s32 %v247, 24
  %v251 = vadd.s32 %v247, 32
  %v252 = vadd.s32 %v247, 40
  %v253 = vadd.s32 %v247, 48
  %v254 = vadd.s32 %v247, 56
  %v255 = vadd.s32 %v247, 64
  %v256 = vadd.s32 %v247, 72
  %v257 = vadd.s32 %v247, 80
  %v258 = vadd.s32 %v247, 88
  %v259 = vadd.s32 %v247, 96
  %v260 = vadd.s32 %v247, 104
  %v261 = vadd.s32 %v247, 112
  %v262 = vadd.s32 %v247, 120
  %vm263 = vcmp.lt.s32.totalorder %v247, 0
  %v264 = vsub.s32 0, %v247
  %v265 = vsel %vm263, %v264, %v247
  %v266 = vshrl.u32 %v265, 6
  %v267 = vand.u32 %v265, 63
  %v268 = vsub.s32 0, %v267
  %v269 = vsel %vm263, %v268, %v267
  %vm270 = vcmp.lt.s32.totalorder %v248, 0
  %v271 = vsub.s32 0, %v248
  %v272 = vsel %vm270, %v271, %v248
  %v273 = vshrl.u32 %v272, 6
  %v274 = vand.u32 %v272, 63
  %v275 = vsub.s32 0, %v274
  %v276 = vsel %vm270, %v275, %v274
  %vm277 = vcmp.lt.s32.totalorder %v249, 0
  %v278 = vsub.s32 0, %v249
  %v279 = vsel %vm277, %v278, %v249
  %v280 = vshrl.u32 %v279, 6
  %v281 = vand.u32 %v279, 63
  %v282 = vsub.s32 0, %v281
  %v283 = vsel %vm277, %v282, %v281
  %vm284 = vcmp.lt.s32.totalorder %v250, 0
  %v285 = vsub.s32 0, %v250
  %v286 = vsel %vm284, %v285, %v250
  %v287 = vshrl.u32 %v286, 6
  %v288 = vand.u32 %v286, 63
  %v289 = vsub.s32 0, %v288
  %v290 = vsel %vm284, %v289, %v288
  %vm291 = vcmp.lt.s32.totalorder %v251, 0
  %v292 = vsub.s32 0, %v251
  %v293 = vsel %vm291, %v292, %v251
  %v294 = vshrl.u32 %v293, 6
  %v295 = vand.u32 %v293, 63
  %v296 = vsub.s32 0, %v295
  %v297 = vsel %vm291, %v296, %v295
  %vm298 = vcmp.lt.s32.totalorder %v252, 0
  %v299 = vsub.s32 0, %v252
  %v300 = vsel %vm298, %v299, %v252
  %v301 = vshrl.u32 %v300, 6
  %v302 = vand.u32 %v300, 63
  %v303 = vsub.s32 0, %v302
  %v304 = vsel %vm298, %v303, %v302
  %vm305 = vcmp.lt.s32.totalorder %v253, 0
  %v306 = vsub.s32 0, %v253
  %v307 = vsel %vm305, %v306, %v253
  %v308 = vshrl.u32 %v307, 6
  %v309 = vand.u32 %v307, 63
  %v310 = vsub.s32 0, %v309
  %v311 = vsel %vm305, %v310, %v309
  %vm312 = vcmp.lt.s32.totalorder %v254, 0
  %v313 = vsub.s32 0, %v254
  %v314 = vsel %vm312, %v313, %v254
  %v315 = vshrl.u32 %v314, 6
  %v316 = vand.u32 %v314, 63
  %v317 = vsub.s32 0, %v316
  %v318 = vsel %vm312, %v317, %v316
  %vm319 = vcmp.lt.s32.totalorder %v255, 0
  %v320 = vsub.s32 0, %v255
  %v321 = vsel %vm319, %v320, %v255
  %v322 = vshrl.u32 %v321, 6
  %v323 = vand.u32 %v321, 63
  %v324 = vsub.s32 0, %v323
  %v325 = vsel %vm319, %v324, %v323
  %vm326 = vcmp.lt.s32.totalorder %v256, 0
  %v327 = vsub.s32 0, %v256
  %v328 = vsel %vm326, %v327, %v256
  %v329 = vshrl.u32 %v328, 6
  %v330 = vand.u32 %v328, 63
  %v331 = vsub.s32 0, %v330
  %v332 = vsel %vm326, %v331, %v330
  %vm333 = vcmp.lt.s32.totalorder %v257, 0
  %v334 = vsub.s32 0, %v257
  %v335 = vsel %vm333, %v334, %v257
  %v336 = vshrl.u32 %v335, 6
  %v337 = vand.u32 %v335, 63
  %v338 = vsub.s32 0, %v337
  %v339 = vsel %vm333, %v338, %v337
  %vm340 = vcmp.lt.s32.totalorder %v258, 0
  %v341 = vsub.s32 0, %v258
  %v342 = vsel %vm340, %v341, %v258
  %v343 = vshrl.u32 %v342, 6
  %v344 = vand.u32 %v342, 63
  %v345 = vsub.s32 0, %v344
  %v346 = vsel %vm340, %v345, %v344
  %vm347 = vcmp.lt.s32.totalorder %v259, 0
  %v348 = vsub.s32 0, %v259
  %v349 = vsel %vm347, %v348, %v259
  %v350 = vshrl.u32 %v349, 6
  %v351 = vand.u32 %v349, 63
  %v352 = vsub.s32 0, %v351
  %v353 = vsel %vm347, %v352, %v351
  %vm354 = vcmp.lt.s32.totalorder %v260, 0
  %v355 = vsub.s32 0, %v260
  %v356 = vsel %vm354, %v355, %v260
  %v357 = vshrl.u32 %v356, 6
  %v358 = vand.u32 %v356, 63
  %v359 = vsub.s32 0, %v358
  %v360 = vsel %vm354, %v359, %v358
  %vm361 = vcmp.lt.s32.totalorder %v261, 0
  %v362 = vsub.s32 0, %v261
  %v363 = vsel %vm361, %v362, %v261
  %v364 = vshrl.u32 %v363, 6
  %v365 = vand.u32 %v363, 63
  %v366 = vsub.s32 0, %v365
  %v367 = vsel %vm361, %v366, %v365
  %vm368 = vcmp.lt.s32.totalorder %v262, 0
  %v369 = vsub.s32 0, %v262
  %v370 = vsel %vm368, %v369, %v262
  %v371 = vshrl.u32 %v370, 6
  %v372 = vand.u32 %v370, 63
  %v373 = vsub.s32 0, %v372
  %v374 = vsel %vm368, %v373, %v372
  %vm375 = vcmp.ne.s32.totalorder %v269, 0
  %vm376 = vcmp.ne.s32.totalorder %v276, 0
  %vm377 = vcmp.ne.s32.totalorder %v283, 0
  %vm378 = vcmp.ne.s32.totalorder %v290, 0
  %vm379 = vcmp.ne.s32.totalorder %v297, 0
  %vm380 = vcmp.ne.s32.totalorder %v304, 0
  %vm381 = vcmp.ne.s32.totalorder %v311, 0
  %vm382 = vcmp.ne.s32.totalorder %v318, 0
  %vm383 = vcmp.ne.s32.totalorder %v325, 0
  %vm384 = vcmp.ne.s32.totalorder %v332, 0
  %vm385 = vcmp.ne.s32.totalorder %v339, 0
  %vm386 = vcmp.ne.s32.totalorder %v346, 0
  %vm387 = vcmp.ne.s32.totalorder %v353, 0
  %vm388 = vcmp.ne.s32.totalorder %v360, 0
  %vm389 = vcmp.ne.s32.totalorder %v367, 0
  %vm390 = vcmp.ne.s32.totalorder %v374, 0
  %vm391 = vcmp.lt.s32.totalorder %v269, 0
  %vm392 = vcmp.lt.s32.totalorder %v276, 0
  %vm393 = vcmp.lt.s32.totalorder %v283, 0
  %vm394 = vcmp.lt.s32.totalorder %v290, 0
  %vm395 = vcmp.lt.s32.totalorder %v297, 0
  %vm396 = vcmp.lt.s32.totalorder %v304, 0
  %vm397 = vcmp.lt.s32.totalorder %v311, 0
  %vm398 = vcmp.lt.s32.totalorder %v318, 0
  %vm399 = vcmp.lt.s32.totalorder %v325, 0
  %vm400 = vcmp.lt.s32.totalorder %v332, 0
  %vm401 = vcmp.lt.s32.totalorder %v339, 0
  %vm402 = vcmp.lt.s32.totalorder %v346, 0
  %vm403 = vcmp.lt.s32.totalorder %v353, 0
  %vm404 = vcmp.lt.s32.totalorder %v360, 0
  %vm405 = vcmp.lt.s32.totalorder %v367, 0
  %vm406 = vcmp.lt.s32.totalorder %v374, 0
  %vm407 = vmand %vm391, %vm375
  %vm408 = vmand %vm392, %vm376
  %vm409 = vmand %vm393, %vm377
  %vm410 = vmand %vm394, %vm378
  %vm411 = vmand %vm395, %vm379
  %vm412 = vmand %vm396, %vm380
  %vm413 = vmand %vm397, %vm381
  %vm414 = vmand %vm398, %vm382
  %vm415 = vmand %vm399, %vm383
  %vm416 = vmand %vm400, %vm384
  %vm417 = vmand %vm401, %vm385
  %vm418 = vmand %vm402, %vm386
  %vm419 = vmand %vm403, %vm387
  %vm420 = vmand %vm404, %vm388
  %vm421 = vmand %vm405, %vm389
  %vm422 = vmand %vm406, %vm390
  %v423 = vadd.s32 %v269, 64
  %v424 = vadd.s32 %v276, 64
  %v425 = vadd.s32 %v283, 64
  %v426 = vadd.s32 %v290, 64
  %v427 = vadd.s32 %v297, 64
  %v428 = vadd.s32 %v304, 64
  %v429 = vadd.s32 %v311, 64
  %v430 = vadd.s32 %v318, 64
  %v431 = vadd.s32 %v325, 64
  %v432 = vadd.s32 %v332, 64
  %v433 = vadd.s32 %v339, 64
  %v434 = vadd.s32 %v346, 64
  %v435 = vadd.s32 %v353, 64
  %v436 = vadd.s32 %v360, 64
  %v437 = vadd.s32 %v367, 64
  %v438 = vadd.s32 %v374, 64
  %v439 = vsel %vm407, %v423, %v269
  %v440 = vsel %vm408, %v424, %v276
  %v441 = vsel %vm409, %v425, %v283
  %v442 = vsel %vm410, %v426, %v290
  %v443 = vsel %vm411, %v427, %v297
  %v444 = vsel %vm412, %v428, %v304
  %v445 = vsel %vm413, %v429, %v311
  %v446 = vsel %vm414, %v430, %v318
  %v447 = vsel %vm415, %v431, %v325
  %v448 = vsel %vm416, %v432, %v332
  %v449 = vsel %vm417, %v433, %v339
  %v450 = vsel %vm418, %v434, %v346
  %v451 = vsel %vm419, %v435, %v353
  %v452 = vsel %vm420, %v436, %v360
  %v453 = vsel %vm421, %v437, %v367
  %v454 = vsel %vm422, %v438, %v374
  %vm455 = vcmp.lt.s32.totalorder %v439, 64
  %vm456 = vcmp.lt.s32.totalorder %v440, 64
  %vm457 = vcmp.lt.s32.totalorder %v441, 64
  %vm458 = vcmp.lt.s32.totalorder %v442, 64
  %vm459 = vcmp.lt.s32.totalorder %v443, 64
  %vm460 = vcmp.lt.s32.totalorder %v444, 64
  %vm461 = vcmp.lt.s32.totalorder %v445, 64
  %vm462 = vcmp.lt.s32.totalorder %v446, 64
  %vm463 = vcmp.lt.s32.totalorder %v447, 64
  %vm464 = vcmp.lt.s32.totalorder %v448, 64
  %vm465 = vcmp.lt.s32.totalorder %v449, 64
  %vm466 = vcmp.lt.s32.totalorder %v450, 64
  %vm467 = vcmp.lt.s32.totalorder %v451, 64
  %vm468 = vcmp.lt.s32.totalorder %v452, 64
  %vm469 = vcmp.lt.s32.totalorder %v453, 64
  %vm470 = vcmp.lt.s32.totalorder %v454, 64
  %v471 = vsel %vm455, 1, 0
  %v472 = vsel %vm456, 1, 0
  %v473 = vsel %vm457, 1, 0
  %v474 = vsel %vm458, 1, 0
  %v475 = vsel %vm459, 1, 0
  %v476 = vsel %vm460, 1, 0
  %v477 = vsel %vm461, 1, 0
  %v478 = vsel %vm462, 1, 0
  %v479 = vsel %vm463, 1, 0
  %v480 = vsel %vm464, 1, 0
  %v481 = vsel %vm465, 1, 0
  %v482 = vsel %vm466, 1, 0
  %v483 = vsel %vm467, 1, 0
  %v484 = vsel %vm468, 1, 0
  %v485 = vsel %vm469, 1, 0
  %v486 = vsel %vm470, 1, 0
  %v487 = vcvt.s32.f32 %v471
  %v488 = vcvt.s32.f32 %v472
  %v489 = vcvt.s32.f32 %v473
  %v490 = vcvt.s32.f32 %v474
  %v491 = vcvt.s32.f32 %v475
  %v492 = vcvt.s32.f32 %v476
  %v493 = vcvt.s32.f32 %v477
  %v494 = vcvt.s32.f32 %v478
  %v495 = vcvt.s32.f32 %v479
  %v496 = vcvt.s32.f32 %v480
  %v497 = vcvt.s32.f32 %v481
  %v498 = vcvt.s32.f32 %v482
  %v499 = vcvt.s32.f32 %v483
  %v500 = vcvt.s32.f32 %v484
  %v501 = vcvt.s32.f32 %v485
  %v502 = vcvt.s32.f32 %v486
  %v503 = vmul.f32 %v175, %v487
  %v504 = vmul.f32 %v177, %v488
  %v505 = vmul.f32 %v180, %v489
  %v506 = vmul.f32 %v182, %v490
  %v507 = vmul.f32 %v185, %v491
  %v508 = vmul.f32 %v187, %v492
  %v509 = vmul.f32 %v190, %v493
  %v510 = vmul.f32 %v192, %v494
  %v511 = vmul.f32 %v195, %v495
  %v512 = vmul.f32 %v197, %v496
  %v513 = vmul.f32 %v200, %v497
  %v514 = vmul.f32 %v202, %v498
  %v515 = vmul.f32 %v205, %v499
  %v516 = vmul.f32 %v207, %v500
  %v517 = vmul.f32 %v210, %v501
  %v518 = vmul.f32 %v212, %v502
  %v519 = vadd.f32 %v503, %v504
  %v520 = vadd.f32 %v519, %v505
  %v521 = vadd.f32 %v520, %v506
  %v522 = vadd.f32 %v521, %v507
  %v523 = vadd.f32 %v522, %v508
  %v524 = vadd.f32 %v523, %v509
  %v525 = vadd.f32 %v524, %v510
  %v526 = vadd.f32 %v525, %v511
  %v527 = vadd.f32 %v526, %v512
  %v528 = vadd.f32 %v527, %v513
  %v529 = vadd.f32 %v528, %v514
  %v530 = vadd.f32 %v529, %v515
  %v531 = vadd.f32 %v530, %v516
  %v532 = vadd.f32 %v531, %v517
  %v533 = vadd.f32 %v532, %v518
  %v534 = vrot.slane %v533, 4
  %v535 = vadd.f32 %v533, %v534
  %v536 = vrot.slane %v535, 2
  %v537 = vadd.f32 %v535, %v536
  %v538 = vrot.slane %v537, 1
  %v539 = vadd.f32 %v537, %v538
  %v540 = vmul.f32 %v503, %v175
  %v541 = vmul.f32 %v504, %v177
  %v542 = vmul.f32 %v505, %v180
  %v543 = vmul.f32 %v506, %v182
  %v544 = vmul.f32 %v507, %v185
  %v545 = vmul.f32 %v508, %v187
  %v546 = vmul.f32 %v509, %v190
  %v547 = vmul.f32 %v510, %v192
  %v548 = vmul.f32 %v511, %v195
  %v549 = vmul.f32 %v512, %v197
  %v550 = vmul.f32 %v513, %v200
  %v551 = vmul.f32 %v514, %v202
  %v552 = vmul.f32 %v515, %v205
  %v553 = vmul.f32 %v516, %v207
  %v554 = vmul.f32 %v517, %v210
  %v555 = vmul.f32 %v518, %v212
  %v556 = vadd.f32 %v540, %v541
  %v557 = vadd.f32 %v556, %v542
  %v558 = vadd.f32 %v557, %v543
  %v559 = vadd.f32 %v558, %v544
  %v560 = vadd.f32 %v559, %v545
  %v561 = vadd.f32 %v560, %v546
  %v562 = vadd.f32 %v561, %v547
  %v563 = vadd.f32 %v562, %v548
  %v564 = vadd.f32 %v563, %v549
  %v565 = vadd.f32 %v564, %v550
  %v566 = vadd.f32 %v565, %v551
  %v567 = vadd.f32 %v566, %v552
  %v568 = vadd.f32 %v567, %v553
  %v569 = vadd.f32 %v568, %v554
  %v570 = vadd.f32 %v569, %v555
  %v571 = vrot.slane %v570, 4
  %v572 = vadd.f32 %v570, %v571
  %v573 = vrot.slane %v572, 2
  %v574 = vadd.f32 %v572, %v573
  %v575 = vrot.slane %v574, 1
  %v576 = vadd.f32 %v574, %v575
  %vm577 = vcmp.eq.s32.totalorder %v247, 0
  %v578 = vsel %vm577, 1, 0
  %v579 = vcvt.s32.f32 %v578
  %v580 = vmul.f32 %v539, %v579
  %vm581 = vcmp.eq.s32.totalorder %v247, 1
  %v582 = vsel %vm581, 1, 0
  %v583 = vcvt.s32.f32 %v582
  %v584 = vmul.f32 %v576, %v583
  %v585 = vadd.f32 %v580, %v584
  %586 = vst [vmem:[%s3] sm:$0xff] %v585
  // Predicated region
  $region10: #{discriminator_forward.6} parent=0 // pred_check
    _
  $region11: #{discriminator_forward.6} parent=0 // pred_check_branch
    %588 = sbr.rel (0) target = $region13
  $region12: #{discriminator_forward.6} parent=0 // pred_region
    _
  $region13: #{discriminator_forward.6} parent=0 // pred_fallthru
    _
  // Predicated region
  $region14: #{discriminator_forward.6} parent=0 // pred_check
    _
  $region15: #{discriminator_forward.6} parent=0 // pred_check_branch
    %590 = sbr.rel (0) target = $region17
  $region16: #{discriminator_forward.6} parent=0 // pred_region
    _
  $region17: #{discriminator_forward.6} parent=0 // pred_fallthru
    _
  // Predicated region
  $region18: #{discriminator_forward.6} parent=0 // pred_check
    _
  $region19: #{discriminator_forward.6} parent=0 // pred_check_branch
    %592 = sbr.rel (0) target = $region21
  $region20: #{discriminator_forward.6} parent=0 // pred_region
    _
  $region21: #{discriminator_forward.6} parent=0 // pred_fallthru
    _
  // Predicated region
  $region22: #{discriminator_forward.6} parent=0 // pred_check
    _
  $region23: #{discriminator_forward.6} parent=0 // pred_check_branch
    %594 = sbr.rel (0) target = $region25
  $region24: #{discriminator_forward.6} parent=0 // pred_region
    _
  $region25: #{discriminator_forward.6} parent=0 // pred_fallthru
    _

// kernel: discriminator_forward.7
$region0: #{discriminator_forward.7}
  #allocation0 [shape = 'u32[]', space=smem, size = 0x4, offset = 0x4, fixed_abs, tag = 'smem constant byte address 0x4 - core index']
  #allocation1 [shape = 'u32[72,128]{1,0:T(1,128)}', space=vmem, size = 0x9000, scoped, tag = 'internal scratch']
  %s0 = inlined_call_operand.vmem [shape: bf16[32,256], index: 0, kind: input, shape index: {}]
  %s1 = inlined_call_operand.vmem [shape: bf16[256,128], index: 1, kind: input, shape index: {}]
  %s2 = inlined_call_operand.vmem [shape: bf16[32,128], index: 2, kind: output, shape index: {0}]
  %s3 = inlined_call_operand.vmem [shape: f32[1,8,128], index: 3, kind: output, shape index: {1}]
  %4 = xla_tuple %s2, %s3
  %s5 = sld [smem:[#allocation0]]
  $region26: #{discriminator_forward.7} parent=0
    _
  %s7 = ssub.s32 1, %s5
  %s8 = scalar_select 0, %s7, %s5
  // Predicated region
  $region2: #{discriminator_forward.7} parent=0 // pred_check
    _
  $region3: #{discriminator_forward.7} parent=0 // pred_check_branch
    %10 = sbr.rel (0) target = $region5
  $region4: #{discriminator_forward.7} parent=0 // pred_region
    _
  $region5: #{discriminator_forward.7} parent=0 // pred_fallthru
    _
  // Predicated region
  $region6: #{discriminator_forward.7} parent=0 // pred_check
    _
  $region7: #{discriminator_forward.7} parent=0 // pred_check_branch
    %12 = sbr.rel (0) target = $region9
  $region8: #{discriminator_forward.7} parent=0 // pred_region
    _
  $region9: #{discriminator_forward.7} parent=0 // pred_fallthru
    _
  %v13 = vld [vmem:[%s0] sm:$0xff]
  %v14 = vld [vmem:[%s0 + $0x8] sm:$0xff]
  %v15 = vld [vmem:[%s0 + $0x10] sm:$0xff]
  %v16 = vld [vmem:[%s0 + $0x18] sm:$0xff]
  %v17 = vunpack.c.l.bf16 %v13
  %v18 = vunpack.c.h.bf16 %v13
  %v19 = vunpack.c.l.bf16 %v14
  %v20 = vunpack.c.h.bf16 %v14
  %v21 = vunpack.c.l.bf16 %v15
  %v22 = vunpack.c.h.bf16 %v15
  %v23 = vunpack.c.l.bf16 %v16
  %v24 = vunpack.c.h.bf16 %v16
  %vm25 = vcmp.gt.f32.partialorder %v17, 0.0
  %vm26 = vcmp.gt.f32.partialorder %v18, 0.0
  %vm27 = vcmp.gt.f32.partialorder %v19, 0.0
  %vm28 = vcmp.gt.f32.partialorder %v20, 0.0
  %vm29 = vcmp.gt.f32.partialorder %v21, 0.0
  %vm30 = vcmp.gt.f32.partialorder %v22, 0.0
  %vm31 = vcmp.gt.f32.partialorder %v23, 0.0
  %vm32 = vcmp.gt.f32.partialorder %v24, 0.0
  %v33 = vmul.f32 %v17, 0.2
  %v34 = vmul.f32 %v18, 0.2
  %v35 = vmul.f32 %v19, 0.2
  %v36 = vmul.f32 %v20, 0.2
  %v37 = vmul.f32 %v21, 0.2
  %v38 = vmul.f32 %v22, 0.2
  %v39 = vmul.f32 %v23, 0.2
  %v40 = vmul.f32 %v24, 0.2
  %v41 = vsel %vm25, %v17, %v33
  %v42 = vsel %vm26, %v18, %v34
  %v43 = vsel %vm27, %v19, %v35
  %v44 = vsel %vm28, %v20, %v36
  %v45 = vsel %vm29, %v21, %v37
  %v46 = vsel %vm30, %v22, %v38
  %v47 = vsel %vm31, %v23, %v39
  %v48 = vsel %vm32, %v24, %v40
  %v49 = vpack.c.bf16 %v43, %v41
  %v50 = vpack.c.bf16 %v44, %v42
  %v51 = vpack.c.bf16 %v47, %v45
  %v52 = vpack.c.bf16 %v48, %v46
  %v53 = vld [vmem:[%s1] sm:$0xf]
  %v54 = vld [vmem:[%s1 + $0x4] sm:$0xf]
  %v55 = vld [vmem:[%s1 + $0x8] sm:$0xf]
  %v56 = vld [vmem:[%s1 + $0xc] sm:$0xf]
  %v57 = vld [vmem:[%s1 + $0x10] sm:$0xf]
  %v58 = vld [vmem:[%s1 + $0x14] sm:$0xf]
  %v59 = vld [vmem:[%s1 + $0x18] sm:$0xf]
  %v60 = vld [vmem:[%s1 + $0x1c] sm:$0xf]
  %v61 = vld [vmem:[%s1 + $0x20] sm:$0xf]
  %v62 = vld [vmem:[%s1 + $0x24] sm:$0xf]
  %v63 = vld [vmem:[%s1 + $0x28] sm:$0xf]
  %v64 = vld [vmem:[%s1 + $0x2c] sm:$0xf]
  %v65 = vld [vmem:[%s1 + $0x30] sm:$0xf]
  %v66 = vld [vmem:[%s1 + $0x34] sm:$0xf]
  %v67 = vld [vmem:[%s1 + $0x38] sm:$0xf]
  %v68 = vld [vmem:[%s1 + $0x3c] sm:$0xf]
  %v69 = vld [vmem:[%s1 + $0x40] sm:$0xf]
  %v70 = vld [vmem:[%s1 + $0x44] sm:$0xf]
  %v71 = vld [vmem:[%s1 + $0x48] sm:$0xf]
  %v72 = vld [vmem:[%s1 + $0x4c] sm:$0xf]
  %v73 = vld [vmem:[%s1 + $0x50] sm:$0xf]
  %v74 = vld [vmem:[%s1 + $0x54] sm:$0xf]
  %v75 = vld [vmem:[%s1 + $0x58] sm:$0xf]
  %v76 = vld [vmem:[%s1 + $0x5c] sm:$0xf]
  %v77 = vld [vmem:[%s1 + $0x60] sm:$0xf]
  %v78 = vld [vmem:[%s1 + $0x64] sm:$0xf]
  %v79 = vld [vmem:[%s1 + $0x68] sm:$0xf]
  %v80 = vld [vmem:[%s1 + $0x6c] sm:$0xf]
  %v81 = vld [vmem:[%s1 + $0x70] sm:$0xf]
  %v82 = vld [vmem:[%s1 + $0x74] sm:$0xf]
  %v83 = vld [vmem:[%s1 + $0x78] sm:$0xf]
  %v84 = vld [vmem:[%s1 + $0x7c] sm:$0xf]
  %v117 = vunpack.c.l.b16 %v53
  %v118 = vunpack.c.l.b16 %v54
  %v119 = vunpack.c.l.b16 %v55
  %v120 = vunpack.c.l.b16 %v56
  %v121 = vunpack.c.l.b16 %v57
  %v122 = vunpack.c.l.b16 %v58
  %v123 = vunpack.c.l.b16 %v59
  %v124 = vunpack.c.l.b16 %v60
  %v125 = vunpack.c.l.b16 %v61
  %v126 = vunpack.c.l.b16 %v62
  %v127 = vunpack.c.l.b16 %v63
  %v128 = vunpack.c.l.b16 %v64
  %v129 = vunpack.c.l.b16 %v65
  %v130 = vunpack.c.l.b16 %v66
  %v131 = vunpack.c.l.b16 %v67
  %v132 = vunpack.c.l.b16 %v68
  %v133 = vunpack.c.l.b16 %v69
  %v134 = vunpack.c.l.b16 %v70
  %v135 = vunpack.c.l.b16 %v71
  %v136 = vunpack.c.l.b16 %v72
  %v137 = vunpack.c.l.b16 %v73
  %v138 = vunpack.c.l.b16 %v74
  %v139 = vunpack.c.l.b16 %v75
  %v140 = vunpack.c.l.b16 %v76
  %v141 = vunpack.c.l.b16 %v77
  %v142 = vunpack.c.l.b16 %v78
  %v143 = vunpack.c.l.b16 %v79
  %v144 = vunpack.c.l.b16 %v80
  %v145 = vunpack.c.l.b16 %v81
  %v146 = vunpack.c.l.b16 %v82
  %v147 = vunpack.c.l.b16 %v83
  %v148 = vunpack.c.l.b16 %v84
  %v149 = vpack.c.b16 %v118, %v117
  %v150 = vpack.c.b16 %v120, %v119
  %v151 = vpack.c.b16 %v122, %v121
  %v152 = vpack.c.b16 %v124, %v123
  %v153 = vpack.c.b16 %v126, %v125
  %v154 = vpack.c.b16 %v128, %v127
  %v155 = vpack.c.b16 %v130, %v129
  %v156 = vpack.c.b16 %v132, %v131
  %v157 = vpack.c.b16 %v134, %v133
  %v158 = vpack.c.b16 %v136, %v135
  %v159 = vpack.c.b16 %v138, %v137
  %v160 = vpack.c.b16 %v140, %v139
  %v161 = vpack.c.b16 %v142, %v141
  %v162 = vpack.c.b16 %v144, %v143
  %v163 = vpack.c.b16 %v146, %v145
  %v164 = vpack.c.b16 %v148, %v147
  %181 = vmatpush.bf16.msra.mxu0 %v156
  %182 = vmatpush.bf16.msra.mxu0 %v155
  %183 = vmatpush.bf16.msra.mxu0 %v154
  %184 = vmatpush.bf16.msra.mxu0 %v153
  %185 = vmatpush.bf16.msra.mxu0 %v152
  %186 = vmatpush.bf16.msra.mxu0 %v151
  %187 = vmatpush.bf16.msra.mxu0 %v150
  %188 = vmatpush.bf16.msra.mxu0 %v149
  %189 = vmatmul.bf16.gmra.mxu0 %v49
  %v190 = vpop.f32.mrf.mxu0
  %v191 = vadd.f32 0.0, %v190
  %v192 = vpop.f32.mrf.mxu0
  %v193 = vadd.f32 0.0, %v192
  %194 = vmatmul.bf16.gmra.mxu0 %v51
  %v195 = vpop.f32.mrf.mxu0
  %v196 = vadd.f32 0.0, %v195
  %v197 = vpop.f32.mrf.mxu0
  %v198 = vadd.f32 0.0, %v197
  %199 = vdwg.mxu0
  %200 = vmatpush.bf16.msra.mxu0 %v164
  %201 = vmatpush.bf16.msra.mxu0 %v163
  %202 = vmatpush.bf16.msra.mxu0 %v162
  %203 = vmatpush.bf16.msra.mxu0 %v161
  %204 = vmatpush.bf16.msra.mxu0 %v160
  %205 = vmatpush.bf16.msra.mxu0 %v159
  %206 = vmatpush.bf16.msra.mxu0 %v158
  %207 = vmatpush.bf16.msra.mxu0 %v157
  %208 = vmatmul.bf16.gmra.mxu0 %v50
  %v209 = vpop.f32.mrf.mxu0
  %v210 = vadd.f32 %v191, %v209
  %v211 = vpop.f32.mrf.mxu0
  %v212 = vadd.f32 %v193, %v211
  %213 = vmatmul.bf16.gmra.mxu0 %v52
  %v214 = vpop.f32.mrf.mxu0
  %v215 = vadd.f32 %v196, %v214
  %v216 = vpop.f32.mrf.mxu0
  %v217 = vadd.f32 %v198, %v216
  %218 = vdwg.mxu0
  %v219 = vpack.c.bf16 %v210, %v210
  %v220 = vpack.c.bf16 %v212, %v212
  %v221 = vpack.c.bf16 %v215, %v215
  %v222 = vpack.c.bf16 %v217, %v217
  %223 = vst [vmem:[%s2] sm:$0xf] %v219
  %224 = vst [vmem:[%s2 + $0x4] sm:$0xf] %v220
  %225 = vst [vmem:[%s2 + $0x8] sm:$0xf] %v221
  %226 = vst [vmem:[%s2 + $0xc] sm:$0xf] %v222
  %v227 = vlaneseq
  %v228 = vshrl.u32 %v227, 7
  %v229 = vadd.s32 %v228, 8
  %v230 = vadd.s32 %v228, 16
  %v231 = vadd.s32 %v228, 24
  %vm232 = vcmp.lt.s32.totalorder %v228, 0
  %v233 = vsub.s32 0, %v228
  %v234 = vsel %vm232, %v233, %v228
  %v235 = vshrl.u32 %v234, 4
  %v236 = vand.u32 %v234, 15
  %v237 = vsub.s32 0, %v236
  %v238 = vsel %vm232, %v237, %v236
  %vm239 = vcmp.lt.s32.totalorder %v229, 0
  %v240 = vsub.s32 0, %v229
  %v241 = vsel %vm239, %v240, %v229
  %v242 = vshrl.u32 %v241, 4
  %v243 = vand.u32 %v241, 15
  %v244 = vsub.s32 0, %v243
  %v245 = vsel %vm239, %v244, %v243
  %vm246 = vcmp.lt.s32.totalorder %v230, 0
  %v247 = vsub.s32 0, %v230
  %v248 = vsel %vm246, %v247, %v230
  %v249 = vshrl.u32 %v248, 4
  %v250 = vand.u32 %v248, 15
  %v251 = vsub.s32 0, %v250
  %v252 = vsel %vm246, %v251, %v250
  %vm253 = vcmp.lt.s32.totalorder %v231, 0
  %v254 = vsub.s32 0, %v231
  %v255 = vsel %vm253, %v254, %v231
  %v256 = vshrl.u32 %v255, 4
  %v257 = vand.u32 %v255, 15
  %v258 = vsub.s32 0, %v257
  %v259 = vsel %vm253, %v258, %v257
  %vm260 = vcmp.ne.s32.totalorder %v238, 0
  %vm261 = vcmp.ne.s32.totalorder %v245, 0
  %vm262 = vcmp.ne.s32.totalorder %v252, 0
  %vm263 = vcmp.ne.s32.totalorder %v259, 0
  %vm264 = vcmp.lt.s32.totalorder %v238, 0
  %vm265 = vcmp.lt.s32.totalorder %v245, 0
  %vm266 = vcmp.lt.s32.totalorder %v252, 0
  %vm267 = vcmp.lt.s32.totalorder %v259, 0
  %vm268 = vmand %vm264, %vm260
  %vm269 = vmand %vm265, %vm261
  %vm270 = vmand %vm266, %vm262
  %vm271 = vmand %vm267, %vm263
  %v272 = vadd.s32 %v238, 16
  %v273 = vadd.s32 %v245, 16
  %v274 = vadd.s32 %v252, 16
  %v275 = vadd.s32 %v259, 16
  %v276 = vsel %vm268, %v272, %v238
  %v277 = vsel %vm269, %v273, %v245
  %v278 = vsel %vm270, %v274, %v252
  %v279 = vsel %vm271, %v275, %v259
  %vm280 = vcmp.lt.s32.totalorder %v276, 16
  %vm281 = vcmp.lt.s32.totalorder %v277, 16
  %vm282 = vcmp.lt.s32.totalorder %v278, 16
  %vm283 = vcmp.lt.s32.totalorder %v279, 16
  %v284 = vsel %vm280, 1, 0
  %v285 = vsel %vm281, 1, 0
  %v286 = vsel %vm282, 1, 0
  %v287 = vsel %vm283, 1, 0
  %v288 = vcvt.s32.f32 %v284
  %v289 = vcvt.s32.f32 %v285
  %v290 = vcvt.s32.f32 %v286
  %v291 = vcvt.s32.f32 %v287
  %v292 = vmul.f32 %v210, %v288
  %v293 = vmul.f32 %v212, %v289
  %v294 = vmul.f32 %v215, %v290
  %v295 = vmul.f32 %v217, %v291
  %v296 = vadd.f32 %v292, %v293
  %v297 = vadd.f32 %v296, %v294
  %v298 = vadd.f32 %v297, %v295
  %v299 = vrot.slane %v298, 4
  %v300 = vadd.f32 %v298, %v299
  %v301 = vrot.slane %v300, 2
  %v302 = vadd.f32 %v300, %v301
  %v303 = vrot.slane %v302, 1
  %v304 = vadd.f32 %v302, %v303
  %v305 = vmul.f32 %v292, %v210
  %v306 = vmul.f32 %v293, %v212
  %v307 = vmul.f32 %v294, %v215
  %v308 = vmul.f32 %v295, %v217
  %v309 = vadd.f32 %v305, %v306
  %v310 = vadd.f32 %v309, %v307
  %v311 = vadd.f32 %v310, %v308
  %v312 = vrot.slane %v311, 4
  %v313 = vadd.f32 %v311, %v312
  %v314 = vrot.slane %v313, 2
  %v315 = vadd.f32 %v313, %v314
  %v316 = vrot.slane %v315, 1
  %v317 = vadd.f32 %v315, %v316
  %vm318 = vcmp.eq.s32.totalorder %v228, 0
  %v319 = vsel %vm318, 1, 0
  %v320 = vcvt.s32.f32 %v319
  %v321 = vmul.f32 %v304, %v320
  %vm322 = vcmp.eq.s32.totalorder %v228, 1
  %v323 = vsel %vm322, 1, 0
  %v324 = vcvt.s32.f32 %v323
  %v325 = vmul.f32 %v317, %v324
  %v326 = vadd.f32 %v321, %v325
  %327 = vst [vmem:[%s3] sm:$0xff] %v326
  // Predicated region
  $region10: #{discriminator_forward.7} parent=0 // pred_check
    _
  $region11: #{discriminator_forward.7} parent=0 // pred_check_branch
    %329 = sbr.rel (0) target = $region13
  $region12: #{discriminator_forward.7} parent=0 // pred_region
    _
  $region13: #{discriminator_forward.7} parent=0 // pred_fallthru
    _
  // Predicated region
  $region14: #{discriminator_forward.7} parent=0 // pred_check
    _
  $region15: #{discriminator_forward.7} parent=0 // pred_check_branch
    %331 = sbr.rel (0) target = $region17
  $region16: #{discriminator_forward.7} parent=0 // pred_region
    _
  $region17: #{discriminator_forward.7} parent=0 // pred_fallthru
    _
  // Predicated region
  $region18: #{discriminator_forward.7} parent=0 // pred_check
    _
  $region19: #{discriminator_forward.7} parent=0 // pred_check_branch
    %333 = sbr.rel (0) target = $region21
  $region20: #{discriminator_forward.7} parent=0 // pred_region
    _
  $region21: #{discriminator_forward.7} parent=0 // pred_fallthru
    _
  // Predicated region
  $region22: #{discriminator_forward.7} parent=0 // pred_check
    _
  $region23: #{discriminator_forward.7} parent=0 // pred_check_branch
    %335 = sbr.rel (0) target = $region25
  $region24: #{discriminator_forward.7} parent=0 // pred_region
    _
  $region25: #{discriminator_forward.7} parent=0 // pred_fallthru
    _

// kernel: discriminator_forward.8
$region0: #{discriminator_forward.8}
  #allocation0 [shape = 'u32[]', space=smem, size = 0x4, offset = 0x4, fixed_abs, tag = 'smem constant byte address 0x4 - core index']
  #allocation1 [shape = 'u32[72,128]{1,0:T(1,128)}', space=vmem, size = 0x9000, scoped, tag = 'internal scratch']
  %s0 = inlined_call_operand.vmem [shape: bf16[32,512], index: 0, kind: input, shape index: {}]
  %s1 = inlined_call_operand.vmem [shape: bf16[512,128], index: 1, kind: input, shape index: {}]
  %s2 = inlined_call_operand.vmem [shape: bf16[32,128], index: 2, kind: output, shape index: {0}]
  %s3 = inlined_call_operand.vmem [shape: f32[1,8,128], index: 3, kind: output, shape index: {1}]
  %4 = xla_tuple %s2, %s3
  %s5 = sld [smem:[#allocation0]]
  $region26: #{discriminator_forward.8} parent=0
    _
  %s7 = ssub.s32 1, %s5
  %s8 = scalar_select 0, %s7, %s5
  // Predicated region
  $region2: #{discriminator_forward.8} parent=0 // pred_check
    _
  $region3: #{discriminator_forward.8} parent=0 // pred_check_branch
    %10 = sbr.rel (0) target = $region5
  $region4: #{discriminator_forward.8} parent=0 // pred_region
    _
  $region5: #{discriminator_forward.8} parent=0 // pred_fallthru
    _
  // Predicated region
  $region6: #{discriminator_forward.8} parent=0 // pred_check
    _
  $region7: #{discriminator_forward.8} parent=0 // pred_check_branch
    %12 = sbr.rel (0) target = $region9
  $region8: #{discriminator_forward.8} parent=0 // pred_region
    _
  $region9: #{discriminator_forward.8} parent=0 // pred_fallthru
    _
  %v13 = vld [vmem:[%s0] sm:$0xff]
  %v14 = vld [vmem:[%s0 + $0x10] sm:$0xff]
  %v15 = vld [vmem:[%s0 + $0x20] sm:$0xff]
  %v16 = vld [vmem:[%s0 + $0x30] sm:$0xff]
  %v17 = vunpack.c.l.bf16 %v13
  %v18 = vunpack.c.h.bf16 %v13
  %v19 = vunpack.c.l.bf16 %v14
  %v20 = vunpack.c.h.bf16 %v14
  %v21 = vunpack.c.l.bf16 %v15
  %v22 = vunpack.c.h.bf16 %v15
  %v23 = vunpack.c.l.bf16 %v16
  %v24 = vunpack.c.h.bf16 %v16
  %vm25 = vcmp.gt.f32.partialorder %v17, 0.0
  %vm26 = vcmp.gt.f32.partialorder %v18, 0.0
  %vm27 = vcmp.gt.f32.partialorder %v19, 0.0
  %vm28 = vcmp.gt.f32.partialorder %v20, 0.0
  %vm29 = vcmp.gt.f32.partialorder %v21, 0.0
  %vm30 = vcmp.gt.f32.partialorder %v22, 0.0
  %vm31 = vcmp.gt.f32.partialorder %v23, 0.0
  %vm32 = vcmp.gt.f32.partialorder %v24, 0.0
  %v33 = vmul.f32 %v17, 0.2
  %v34 = vmul.f32 %v18, 0.2
  %v35 = vmul.f32 %v19, 0.2
  %v36 = vmul.f32 %v20, 0.2
  %v37 = vmul.f32 %v21, 0.2
  %v38 = vmul.f32 %v22, 0.2
  %v39 = vmul.f32 %v23, 0.2
  %v40 = vmul.f32 %v24, 0.2
  %v41 = vsel %vm25, %v17, %v33
  %v42 = vsel %vm26, %v18, %v34
  %v43 = vsel %vm27, %v19, %v35
  %v44 = vsel %vm28, %v20, %v36
  %v45 = vsel %vm29, %v21, %v37
  %v46 = vsel %vm30, %v22, %v38
  %v47 = vsel %vm31, %v23, %v39
  %v48 = vsel %vm32, %v24, %v40
  %v49 = vpack.c.bf16 %v43, %v41
  %v50 = vpack.c.bf16 %v44, %v42
  %v51 = vpack.c.bf16 %v47, %v45
  %v52 = vpack.c.bf16 %v48, %v46
  %v53 = vld [vmem:[%s1] sm:$0xf]
  %v54 = vld [vmem:[%s1 + $0x4] sm:$0xf]
  %v55 = vld [vmem:[%s1 + $0x8] sm:$0xf]
  %v56 = vld [vmem:[%s1 + $0xc] sm:$0xf]
  %v57 = vld [vmem:[%s1 + $0x10] sm:$0xf]
  %v58 = vld [vmem:[%s1 + $0x14] sm:$0xf]
  %v59 = vld [vmem:[%s1 + $0x18] sm:$0xf]
  %v60 = vld [vmem:[%s1 + $0x1c] sm:$0xf]
  %v61 = vld [vmem:[%s1 + $0x20] sm:$0xf]
  %v62 = vld [vmem:[%s1 + $0x24] sm:$0xf]
  %v63 = vld [vmem:[%s1 + $0x28] sm:$0xf]
  %v64 = vld [vmem:[%s1 + $0x2c] sm:$0xf]
  %v65 = vld [vmem:[%s1 + $0x30] sm:$0xf]
  %v66 = vld [vmem:[%s1 + $0x34] sm:$0xf]
  %v67 = vld [vmem:[%s1 + $0x38] sm:$0xf]
  %v68 = vld [vmem:[%s1 + $0x3c] sm:$0xf]
  %v69 = vld [vmem:[%s1 + $0x40] sm:$0xf]
  %v70 = vld [vmem:[%s1 + $0x44] sm:$0xf]
  %v71 = vld [vmem:[%s1 + $0x48] sm:$0xf]
  %v72 = vld [vmem:[%s1 + $0x4c] sm:$0xf]
  %v73 = vld [vmem:[%s1 + $0x50] sm:$0xf]
  %v74 = vld [vmem:[%s1 + $0x54] sm:$0xf]
  %v75 = vld [vmem:[%s1 + $0x58] sm:$0xf]
  %v76 = vld [vmem:[%s1 + $0x5c] sm:$0xf]
  %v77 = vld [vmem:[%s1 + $0x60] sm:$0xf]
  %v78 = vld [vmem:[%s1 + $0x64] sm:$0xf]
  %v79 = vld [vmem:[%s1 + $0x68] sm:$0xf]
  %v80 = vld [vmem:[%s1 + $0x6c] sm:$0xf]
  %v81 = vld [vmem:[%s1 + $0x70] sm:$0xf]
  %v82 = vld [vmem:[%s1 + $0x74] sm:$0xf]
  %v83 = vld [vmem:[%s1 + $0x78] sm:$0xf]
  %v84 = vld [vmem:[%s1 + $0x7c] sm:$0xf]
  %v85 = vld [vmem:[%s0 + $0x8] sm:$0xff]
  %v86 = vld [vmem:[%s0 + $0x18] sm:$0xff]
  %v87 = vld [vmem:[%s0 + $0x28] sm:$0xff]
  %v88 = vld [vmem:[%s0 + $0x38] sm:$0xff]
  %v89 = vunpack.c.l.bf16 %v85
  %v90 = vunpack.c.h.bf16 %v85
  %v91 = vunpack.c.l.bf16 %v86
  %v92 = vunpack.c.h.bf16 %v86
  %v93 = vunpack.c.l.bf16 %v87
  %v94 = vunpack.c.h.bf16 %v87
  %v95 = vunpack.c.l.bf16 %v88
  %v96 = vunpack.c.h.bf16 %v88
  %vm97 = vcmp.gt.f32.partialorder %v89, 0.0
  %vm98 = vcmp.gt.f32.partialorder %v90, 0.0
  %vm99 = vcmp.gt.f32.partialorder %v91, 0.0
  %vm100 = vcmp.gt.f32.partialorder %v92, 0.0
  %vm101 = vcmp.gt.f32.partialorder %v93, 0.0
  %vm102 = vcmp.gt.f32.partialorder %v94, 0.0
  %vm103 = vcmp.gt.f32.partialorder %v95, 0.0
  %vm104 = vcmp.gt.f32.partialorder %v96, 0.0
  %v105 = vmul.f32 %v89, 0.2
  %v106 = vmul.f32 %v90, 0.2
  %v107 = vmul.f32 %v91, 0.2
  %v108 = vmul.f32 %v92, 0.2
  %v109 = vmul.f32 %v93, 0.2
  %v110 = vmul.f32 %v94, 0.2
  %v111 = vmul.f32 %v95, 0.2
  %v112 = vmul.f32 %v96, 0.2
  %v113 = vsel %vm97, %v89, %v105
  %v114 = vsel %vm98, %v90, %v106
  %v115 = vsel %vm99, %v91, %v107
  %v116 = vsel %vm100, %v92, %v108
  %v117 = vsel %vm101, %v93, %v109
  %v118 = vsel %vm102, %v94, %v110
  %v119 = vsel %vm103, %v95, %v111
  %v120 = vsel %vm104, %v96, %v112
  %v121 = vpack.c.bf16 %v115, %v113
  %v122 = vpack.c.bf16 %v116, %v114
  %v123 = vpack.c.bf16 %v119, %v117
  %v124 = vpack.c.bf16 %v120, %v118
  %v125 = vld [vmem:[%s1 + $0x80] sm:$0xf]
  %v126 = vld [vmem:[%s1 + $0x84] sm:$0xf]
  %v127 = vld [vmem:[%s1 + $0x88] sm:$0xf]
  %v128 = vld [vmem:[%s1 + $0x8c] sm:$0xf]
  %v129 = vld [vmem:[%s1 + $0x90] sm:$0xf]
  %v130 = vld [vmem:[%s1 + $0x94] sm:$0xf]
  %v131 = vld [vmem:[%s1 + $0x98] sm:$0xf]
  %v132 = vld [vmem:[%s1 + $0x9c] sm:$0xf]
  %v133 = vld [vmem:[%s1 + $0xa0] sm:$0xf]
  %v134 = vld [vmem:[%s1 + $0xa4] sm:$0xf]
  %v135 = vld [vmem:[%s1 + $0xa8] sm:$0xf]
  %v136 = vld [vmem:[%s1 + $0xac] sm:$0xf]
  %v137 = vld [vmem:[%s1 + $0xb0] sm:$0xf]
  %v138 = vld [vmem:[%s1 + $0xb4] sm:$0xf]
  %v139 = vld [vmem:[%s1 + $0xb8] sm:$0xf]
  %v140 = vld [vmem:[%s1 + $0xbc] sm:$0xf]
  %v141 = vld [vmem:[%s1 + $0xc0] sm:$0xf]
  %v142 = vld [vmem:[%s1 + $0xc4] sm:$0xf]
  %v143 = vld [vmem:[%s1 + $0xc8] sm:$0xf]
  %v144 = vld [vmem:[%s1 + $0xcc] sm:$0xf]
  %v145 = vld [vmem:[%s1 + $0xd0] sm:$0xf]
  %v146 = vld [vmem:[%s1 + $0xd4] sm:$0xf]
  %v147 = vld [vmem:[%s1 + $0xd8] sm:$0xf]
  %v148 = vld [vmem:[%s1 + $0xdc] sm:$0xf]
  %v149 = vld [vmem:[%s1 + $0xe0] sm:$0xf]
  %v150 = vld [vmem:[%s1 + $0xe4] sm:$0xf]
  %v151 = vld [vmem:[%s1 + $0xe8] sm:$0xf]
  %v152 = vld [vmem:[%s1 + $0xec] sm:$0xf]
  %v153 = vld [vmem:[%s1 + $0xf0] sm:$0xf]
  %v154 = vld [vmem:[%s1 + $0xf4] sm:$0xf]
  %v155 = vld [vmem:[%s1 + $0xf8] sm:$0xf]
  %v156 = vld [vmem:[%s1 + $0xfc] sm:$0xf]
  %v189 = vunpack.c.l.b16 %v125
  %v190 = vunpack.c.l.b16 %v126
  %v191 = vunpack.c.l.b16 %v127
  %v192 = vunpack.c.l.b16 %v128
  %v193 = vunpack.c.l.b16 %v129
  %v194 = vunpack.c.l.b16 %v130
  %v195 = vunpack.c.l.b16 %v131
  %v196 = vunpack.c.l.b16 %v132
  %v197 = vunpack.c.l.b16 %v133
  %v198 = vunpack.c.l.b16 %v134
  %v199 = vunpack.c.l.b16 %v135
  %v200 = vunpack.c.l.b16 %v136
  %v201 = vunpack.c.l.b16 %v137
  %v202 = vunpack.c.l.b16 %v138
  %v203 = vunpack.c.l.b16 %v139
  %v204 = vunpack.c.l.b16 %v140
  %v205 = vunpack.c.l.b16 %v141
  %v206 = vunpack.c.l.b16 %v142
  %v207 = vunpack.c.l.b16 %v143
  %v208 = vunpack.c.l.b16 %v144
  %v209 = vunpack.c.l.b16 %v145
  %v210 = vunpack.c.l.b16 %v146
  %v211 = vunpack.c.l.b16 %v147
  %v212 = vunpack.c.l.b16 %v148
  %v213 = vunpack.c.l.b16 %v149
  %v214 = vunpack.c.l.b16 %v150
  %v215 = vunpack.c.l.b16 %v151
  %v216 = vunpack.c.l.b16 %v152
  %v217 = vunpack.c.l.b16 %v153
  %v218 = vunpack.c.l.b16 %v154
  %v219 = vunpack.c.l.b16 %v155
  %v220 = vunpack.c.l.b16 %v156
  %v221 = vpack.c.b16 %v190, %v189
  %v222 = vpack.c.b16 %v192, %v191
  %v223 = vpack.c.b16 %v194, %v193
  %v224 = vpack.c.b16 %v196, %v195
  %v225 = vpack.c.b16 %v198, %v197
  %v226 = vpack.c.b16 %v200, %v199
  %v227 = vpack.c.b16 %v202, %v201
  %v228 = vpack.c.b16 %v204, %v203
  %v229 = vpack.c.b16 %v206, %v205
  %v230 = vpack.c.b16 %v208, %v207
  %v231 = vpack.c.b16 %v210, %v209
  %v232 = vpack.c.b16 %v212, %v211
  %v233 = vpack.c.b16 %v214, %v213
  %v234 = vpack.c.b16 %v216, %v215
  %v235 = vpack.c.b16 %v218, %v217
  %v236 = vpack.c.b16 %v220, %v219
  %253 = vmatpush.bf16.msra.mxu0 %v228
  %254 = vmatpush.bf16.msra.mxu0 %v227
  %255 = vmatpush.bf16.msra.mxu0 %v226
  %256 = vmatpush.bf16.msra.mxu0 %v225
  %257 = vmatpush.bf16.msra.mxu0 %v224
  %258 = vmatpush.bf16.msra.mxu0 %v223
  %259 = vmatpush.bf16.msra.mxu0 %v222
  %260 = vmatpush.bf16.msra.mxu0 %v221
  %261 = vmatmul.bf16.gmra.mxu0 %v121
  %v262 = vpop.f32.mrf.mxu0
  %v263 = vadd.f32 0.0, %v262
  %v264 = vpop.f32.mrf.mxu0
  %v265 = vadd.f32 0.0, %v264
  %266 = vmatmul.bf16.gmra.mxu0 %v123
  %v267 = vpop.f32.mrf.mxu0
  %v268 = vadd.f32 0.0, %v267
  %v269 = vpop.f32.mrf.mxu0
  %v270 = vadd.f32 0.0, %v269
  %271 = vdwg.mxu0
  %272 = vmatpush.bf16.msra.mxu0 %v236
  %273 = vmatpush.bf16.msra.mxu0 %v235
  %274 = vmatpush.bf16.msra.mxu0 %v234
  %275 = vmatpush.bf16.msra.mxu0 %v233
  %276 = vmatpush.bf16.msra.mxu0 %v232
  %277 = vmatpush.bf16.msra.mxu0 %v231
  %278 = vmatpush.bf16.msra.mxu0 %v230
  %279 = vmatpush.bf16.msra.mxu0 %v229
  %280 = vmatmul.bf16.gmra.mxu0 %v122
  %v281 = vpop.f32.mrf.mxu0
  %v282 = vadd.f32 %v263, %v281
  %v283 = vpop.f32.mrf.mxu0
  %v284 = vadd.f32 %v265, %v283
  %285 = vmatmul.bf16.gmra.mxu0 %v124
  %v286 = vpop.f32.mrf.mxu0
  %v287 = vadd.f32 %v268, %v286
  %v288 = vpop.f32.mrf.mxu0
  %v289 = vadd.f32 %v270, %v288
  %290 = vdwg.mxu0
  %v323 = vunpack.c.l.b16 %v53
  %v324 = vunpack.c.l.b16 %v54
  %v325 = vunpack.c.l.b16 %v55
  %v326 = vunpack.c.l.b16 %v56
  %v327 = vunpack.c.l.b16 %v57
  %v328 = vunpack.c.l.b16 %v58
  %v329 = vunpack.c.l.b16 %v59
  %v330 = vunpack.c.l.b16 %v60
  %v331 = vunpack.c.l.b16 %v61
  %v332 = vunpack.c.l.b16 %v62
  %v333 = vunpack.c.l.b16 %v63
  %v334 = vunpack.c.l.b16 %v64
  %v335 = vunpack.c.l.b16 %v65
  %v336 = vunpack.c.l.b16 %v66
  %v337 = vunpack.c.l.b16 %v67
  %v338 = vunpack.c.l.b16 %v68
  %v339 = vunpack.c.l.b16 %v69
  %v340 = vunpack.c.l.b16 %v70
  %v341 = vunpack.c.l.b16 %v71
  %v342 = vunpack.c.l.b16 %v72
  %v343 = vunpack.c.l.b16 %v73
  %v344 = vunpack.c.l.b16 %v74
  %v345 = vunpack.c.l.b16 %v75
  %v346 = vunpack.c.l.b16 %v76
  %v347 = vunpack.c.l.b16 %v77
  %v348 = vunpack.c.l.b16 %v78
  %v349 = vunpack.c.l.b16 %v79
  %v350 = vunpack.c.l.b16 %v80
  %v351 = vunpack.c.l.b16 %v81
  %v352 = vunpack.c.l.b16 %v82
  %v353 = vunpack.c.l.b16 %v83
  %v354 = vunpack.c.l.b16 %v84
  %v355 = vpack.c.b16 %v324, %v323
  %v356 = vpack.c.b16 %v326, %v325
  %v357 = vpack.c.b16 %v328, %v327
  %v358 = vpack.c.b16 %v330, %v329
  %v359 = vpack.c.b16 %v332, %v331
  %v360 = vpack.c.b16 %v334, %v333
  %v361 = vpack.c.b16 %v336, %v335
  %v362 = vpack.c.b16 %v338, %v337
  %v363 = vpack.c.b16 %v340, %v339
  %v364 = vpack.c.b16 %v342, %v341
  %v365 = vpack.c.b16 %v344, %v343
  %v366 = vpack.c.b16 %v346, %v345
  %v367 = vpack.c.b16 %v348, %v347
  %v368 = vpack.c.b16 %v350, %v349
  %v369 = vpack.c.b16 %v352, %v351
  %v370 = vpack.c.b16 %v354, %v353
  %387 = vmatpush.bf16.msra.mxu0 %v362
  %388 = vmatpush.bf16.msra.mxu0 %v361
  %389 = vmatpush.bf16.msra.mxu0 %v360
  %390 = vmatpush.bf16.msra.mxu0 %v359
  %391 = vmatpush.bf16.msra.mxu0 %v358
  %392 = vmatpush.bf16.msra.mxu0 %v357
  %393 = vmatpush.bf16.msra.mxu0 %v356
  %394 = vmatpush.bf16.msra.mxu0 %v355
  %395 = vmatmul.bf16.gmra.mxu0 %v49
  %v396 = vpop.f32.mrf.mxu0
  %v397 = vadd.f32 %v282, %v396
  %v398 = vpop.f32.mrf.mxu0
  %v399 = vadd.f32 %v284, %v398
  %400 = vmatmul.bf16.gmra.mxu0 %v51
  %v401 = vpop.f32.mrf.mxu0
  %v402 = vadd.f32 %v287, %v401
  %v403 = vpop.f32.mrf.mxu0
  %v404 = vadd.f32 %v289, %v403
  %405 = vdwg.mxu0
  %406 = vmatpush.bf16.msra.mxu0 %v370
  %407 = vmatpush.bf16.msra.mxu0 %v369
  %408 = vmatpush.bf16.msra.mxu0 %v368
  %409 = vmatpush.bf16.msra.mxu0 %v367
  %410 = vmatpush.bf16.msra.mxu0 %v366
  %411 = vmatpush.bf16.msra.mxu0 %v365
  %412 = vmatpush.bf16.msra.mxu0 %v364
  %413 = vmatpush.bf16.msra.mxu0 %v363
  %414 = vmatmul.bf16.gmra.mxu0 %v50
  %v415 = vpop.f32.mrf.mxu0
  %v416 = vadd.f32 %v397, %v415
  %v417 = vpop.f32.mrf.mxu0
  %v418 = vadd.f32 %v399, %v417
  %419 = vmatmul.bf16.gmra.mxu0 %v52
  %v420 = vpop.f32.mrf.mxu0
  %v421 = vadd.f32 %v402, %v420
  %v422 = vpop.f32.mrf.mxu0
  %v423 = vadd.f32 %v404, %v422
  %424 = vdwg.mxu0
  %v425 = vpack.c.bf16 %v416, %v416
  %v426 = vpack.c.bf16 %v418, %v418
  %v427 = vpack.c.bf16 %v421, %v421
  %v428 = vpack.c.bf16 %v423, %v423
  %429 = vst [vmem:[%s2] sm:$0xf] %v425
  %430 = vst [vmem:[%s2 + $0x4] sm:$0xf] %v426
  %431 = vst [vmem:[%s2 + $0x8] sm:$0xf] %v427
  %432 = vst [vmem:[%s2 + $0xc] sm:$0xf] %v428
  %v433 = vlaneseq
  %v434 = vshrl.u32 %v433, 7
  %v435 = vadd.s32 %v434, 8
  %v436 = vadd.s32 %v434, 16
  %v437 = vadd.s32 %v434, 24
  %vm438 = vcmp.lt.s32.totalorder %v434, 0
  %v439 = vsub.s32 0, %v434
  %v440 = vsel %vm438, %v439, %v434
  %v441 = vshrl.u32 %v440, 4
  %v442 = vand.u32 %v440, 15
  %v443 = vsub.s32 0, %v442
  %v444 = vsel %vm438, %v443, %v442
  %vm445 = vcmp.lt.s32.totalorder %v435, 0
  %v446 = vsub.s32 0, %v435
  %v447 = vsel %vm445, %v446, %v435
  %v448 = vshrl.u32 %v447, 4
  %v449 = vand.u32 %v447, 15
  %v450 = vsub.s32 0, %v449
  %v451 = vsel %vm445, %v450, %v449
  %vm452 = vcmp.lt.s32.totalorder %v436, 0
  %v453 = vsub.s32 0, %v436
  %v454 = vsel %vm452, %v453, %v436
  %v455 = vshrl.u32 %v454, 4
  %v456 = vand.u32 %v454, 15
  %v457 = vsub.s32 0, %v456
  %v458 = vsel %vm452, %v457, %v456
  %vm459 = vcmp.lt.s32.totalorder %v437, 0
  %v460 = vsub.s32 0, %v437
  %v461 = vsel %vm459, %v460, %v437
  %v462 = vshrl.u32 %v461, 4
  %v463 = vand.u32 %v461, 15
  %v464 = vsub.s32 0, %v463
  %v465 = vsel %vm459, %v464, %v463
  %vm466 = vcmp.ne.s32.totalorder %v444, 0
  %vm467 = vcmp.ne.s32.totalorder %v451, 0
  %vm468 = vcmp.ne.s32.totalorder %v458, 0
  %vm469 = vcmp.ne.s32.totalorder %v465, 0
  %vm470 = vcmp.lt.s32.totalorder %v444, 0
  %vm471 = vcmp.lt.s32.totalorder %v451, 0
  %vm472 = vcmp.lt.s32.totalorder %v458, 0
  %vm473 = vcmp.lt.s32.totalorder %v465, 0
  %vm474 = vmand %vm470, %vm466
  %vm475 = vmand %vm471, %vm467
  %vm476 = vmand %vm472, %vm468
  %vm477 = vmand %vm473, %vm469
  %v478 = vadd.s32 %v444, 16
  %v479 = vadd.s32 %v451, 16
  %v480 = vadd.s32 %v458, 16
  %v481 = vadd.s32 %v465, 16
  %v482 = vsel %vm474, %v478, %v444
  %v483 = vsel %vm475, %v479, %v451
  %v484 = vsel %vm476, %v480, %v458
  %v485 = vsel %vm477, %v481, %v465
  %vm486 = vcmp.lt.s32.totalorder %v482, 9
  %vm487 = vcmp.lt.s32.totalorder %v483, 9
  %vm488 = vcmp.lt.s32.totalorder %v484, 9
  %vm489 = vcmp.lt.s32.totalorder %v485, 9
  %v490 = vsel %vm486, 1, 0
  %v491 = vsel %vm487, 1, 0
  %v492 = vsel %vm488, 1, 0
  %v493 = vsel %vm489, 1, 0
  %v494 = vcvt.s32.f32 %v490
  %v495 = vcvt.s32.f32 %v491
  %v496 = vcvt.s32.f32 %v492
  %v497 = vcvt.s32.f32 %v493
  %v498 = vmul.f32 %v416, %v494
  %v499 = vmul.f32 %v418, %v495
  %v500 = vmul.f32 %v421, %v496
  %v501 = vmul.f32 %v423, %v497
  %v502 = vadd.f32 %v498, %v499
  %v503 = vadd.f32 %v502, %v500
  %v504 = vadd.f32 %v503, %v501
  %v505 = vrot.slane %v504, 4
  %v506 = vadd.f32 %v504, %v505
  %v507 = vrot.slane %v506, 2
  %v508 = vadd.f32 %v506, %v507
  %v509 = vrot.slane %v508, 1
  %v510 = vadd.f32 %v508, %v509
  %v511 = vmul.f32 %v498, %v416
  %v512 = vmul.f32 %v499, %v418
  %v513 = vmul.f32 %v500, %v421
  %v514 = vmul.f32 %v501, %v423
  %v515 = vadd.f32 %v511, %v512
  %v516 = vadd.f32 %v515, %v513
  %v517 = vadd.f32 %v516, %v514
  %v518 = vrot.slane %v517, 4
  %v519 = vadd.f32 %v517, %v518
  %v520 = vrot.slane %v519, 2
  %v521 = vadd.f32 %v519, %v520
  %v522 = vrot.slane %v521, 1
  %v523 = vadd.f32 %v521, %v522
  %vm524 = vcmp.eq.s32.totalorder %v434, 0
  %v525 = vsel %vm524, 1, 0
  %v526 = vcvt.s32.f32 %v525
  %v527 = vmul.f32 %v510, %v526
  %vm528 = vcmp.eq.s32.totalorder %v434, 1
  %v529 = vsel %vm528, 1, 0
  %v530 = vcvt.s32.f32 %v529
  %v531 = vmul.f32 %v523, %v530
  %v532 = vadd.f32 %v527, %v531
  %533 = vst [vmem:[%s3] sm:$0xff] %v532
  // Predicated region
  $region10: #{discriminator_forward.8} parent=0 // pred_check
    _
  $region11: #{discriminator_forward.8} parent=0 // pred_check_branch
    %535 = sbr.rel (0) target = $region13
  $region12: #{discriminator_forward.8} parent=0 // pred_region
    _
  $region13: #{discriminator_forward.8} parent=0 // pred_fallthru
    _
  // Predicated region
  $region14: #{discriminator_forward.8} parent=0 // pred_check
    _
  $region15: #{discriminator_forward.8} parent=0 // pred_check_branch
    %537 = sbr.rel (0) target = $region17
  $region16: #{discriminator_forward.8} parent=0 // pred_region
    _
  $region17: #{discriminator_forward.8} parent=0 // pred_fallthru
    _
  // Predicated region
  $region18: #{discriminator_forward.8} parent=0 // pred_check
    _
  $region19: #{discriminator_forward.8} parent=0 // pred_check_branch
    %539 = sbr.rel (0) target = $region21
  $region20: #{discriminator_forward.8} parent=0 // pred_region
    _
  $region21: #{discriminator_forward.8} parent=0 // pred_fallthru
    _
  // Predicated region
  $region22: #{discriminator_forward.8} parent=0 // pred_check
    _
  $region23: #{discriminator_forward.8} parent=0 // pred_check_branch
    %541 = sbr.rel (0) target = $region25
  $region24: #{discriminator_forward.8} parent=0 // pred_region
    _
  $region25: #{discriminator_forward.8} parent=0 // pred_fallthru
    _

// kernel: discriminator_forward.9
$region0: #{discriminator_forward.9}
  #allocation0 [shape = 'u32[]', space=smem, size = 0x4, offset = 0x4, fixed_abs, tag = 'smem constant byte address 0x4 - core index']
  #allocation1 [shape = 'u32[72,128]{1,0:T(1,128)}', space=vmem, size = 0x9000, scoped, tag = 'internal scratch']
  %s0 = inlined_call_operand.vmem [shape: bf16[16,1024], index: 0, kind: input, shape index: {}]
  %s1 = inlined_call_operand.vmem [shape: bf16[1024,128], index: 1, kind: input, shape index: {}]
  %s2 = inlined_call_operand.vmem [shape: f32[16,128], index: 2, kind: output, shape index: {}]
  %s3 = sld [smem:[#allocation0]]
  $region18: #{discriminator_forward.9} parent=0
    _
  %s5 = ssub.s32 1, %s3
  %s6 = scalar_select 0, %s5, %s3
  // Predicated region
  $region2: #{discriminator_forward.9} parent=0 // pred_check
    _
  $region3: #{discriminator_forward.9} parent=0 // pred_check_branch
    %8 = sbr.rel (0) target = $region5
  $region4: #{discriminator_forward.9} parent=0 // pred_region
    _
  $region5: #{discriminator_forward.9} parent=0 // pred_fallthru
    _
  // Predicated region
  $region6: #{discriminator_forward.9} parent=0 // pred_check
    _
  $region7: #{discriminator_forward.9} parent=0 // pred_check_branch
    %10 = sbr.rel (0) target = $region9
  $region8: #{discriminator_forward.9} parent=0 // pred_region
    _
  $region9: #{discriminator_forward.9} parent=0 // pred_fallthru
    _
  %v11 = vld [vmem:[%s0] sm:$0xff]
  %v12 = vld [vmem:[%s0 + $0x20] sm:$0xff]
  %v13 = vunpack.c.l.bf16 %v11
  %v14 = vunpack.c.h.bf16 %v11
  %v15 = vunpack.c.l.bf16 %v12
  %v16 = vunpack.c.h.bf16 %v12
  %vm17 = vcmp.gt.f32.partialorder %v13, 0.0
  %vm18 = vcmp.gt.f32.partialorder %v14, 0.0
  %vm19 = vcmp.gt.f32.partialorder %v15, 0.0
  %vm20 = vcmp.gt.f32.partialorder %v16, 0.0
  %v21 = vmul.f32 %v13, 0.2
  %v22 = vmul.f32 %v14, 0.2
  %v23 = vmul.f32 %v15, 0.2
  %v24 = vmul.f32 %v16, 0.2
  %v25 = vsel %vm17, %v13, %v21
  %v26 = vsel %vm18, %v14, %v22
  %v27 = vsel %vm19, %v15, %v23
  %v28 = vsel %vm20, %v16, %v24
  %v29 = vpack.c.bf16 %v27, %v25
  %v30 = vpack.c.bf16 %v28, %v26
  %v31 = vld [vmem:[%s1] sm:$0xf]
  %v32 = vld [vmem:[%s1 + $0x4] sm:$0xf]
  %v33 = vld [vmem:[%s1 + $0x8] sm:$0xf]
  %v34 = vld [vmem:[%s1 + $0xc] sm:$0xf]
  %v35 = vld [vmem:[%s1 + $0x10] sm:$0xf]
  %v36 = vld [vmem:[%s1 + $0x14] sm:$0xf]
  %v37 = vld [vmem:[%s1 + $0x18] sm:$0xf]
  %v38 = vld [vmem:[%s1 + $0x1c] sm:$0xf]
  %v39 = vld [vmem:[%s1 + $0x20] sm:$0xf]
  %v40 = vld [vmem:[%s1 + $0x24] sm:$0xf]
  %v41 = vld [vmem:[%s1 + $0x28] sm:$0xf]
  %v42 = vld [vmem:[%s1 + $0x2c] sm:$0xf]
  %v43 = vld [vmem:[%s1 + $0x30] sm:$0xf]
  %v44 = vld [vmem:[%s1 + $0x34] sm:$0xf]
  %v45 = vld [vmem:[%s1 + $0x38] sm:$0xf]
  %v46 = vld [vmem:[%s1 + $0x3c] sm:$0xf]
  %v47 = vld [vmem:[%s1 + $0x40] sm:$0xf]
  %v48 = vld [vmem:[%s1 + $0x44] sm:$0xf]
  %v49 = vld [vmem:[%s1 + $0x48] sm:$0xf]
  %v50 = vld [vmem:[%s1 + $0x4c] sm:$0xf]
  %v51 = vld [vmem:[%s1 + $0x50] sm:$0xf]
  %v52 = vld [vmem:[%s1 + $0x54] sm:$0xf]
  %v53 = vld [vmem:[%s1 + $0x58] sm:$0xf]
  %v54 = vld [vmem:[%s1 + $0x5c] sm:$0xf]
  %v55 = vld [vmem:[%s1 + $0x60] sm:$0xf]
  %v56 = vld [vmem:[%s1 + $0x64] sm:$0xf]
  %v57 = vld [vmem:[%s1 + $0x68] sm:$0xf]
  %v58 = vld [vmem:[%s1 + $0x6c] sm:$0xf]
  %v59 = vld [vmem:[%s1 + $0x70] sm:$0xf]
  %v60 = vld [vmem:[%s1 + $0x74] sm:$0xf]
  %v61 = vld [vmem:[%s1 + $0x78] sm:$0xf]
  %v62 = vld [vmem:[%s1 + $0x7c] sm:$0xf]
  %v63 = vld [vmem:[%s0 + $0x8] sm:$0xff]
  %v64 = vld [vmem:[%s0 + $0x28] sm:$0xff]
  %v65 = vunpack.c.l.bf16 %v63
  %v66 = vunpack.c.h.bf16 %v63
  %v67 = vunpack.c.l.bf16 %v64
  %v68 = vunpack.c.h.bf16 %v64
  %vm69 = vcmp.gt.f32.partialorder %v65, 0.0
  %vm70 = vcmp.gt.f32.partialorder %v66, 0.0
  %vm71 = vcmp.gt.f32.partialorder %v67, 0.0
  %vm72 = vcmp.gt.f32.partialorder %v68, 0.0
  %v73 = vmul.f32 %v65, 0.2
  %v74 = vmul.f32 %v66, 0.2
  %v75 = vmul.f32 %v67, 0.2
  %v76 = vmul.f32 %v68, 0.2
  %v77 = vsel %vm69, %v65, %v73
  %v78 = vsel %vm70, %v66, %v74
  %v79 = vsel %vm71, %v67, %v75
  %v80 = vsel %vm72, %v68, %v76
  %v81 = vpack.c.bf16 %v79, %v77
  %v82 = vpack.c.bf16 %v80, %v78
  %v83 = vld [vmem:[%s1 + $0x80] sm:$0xf]
  %v84 = vld [vmem:[%s1 + $0x84] sm:$0xf]
  %v85 = vld [vmem:[%s1 + $0x88] sm:$0xf]
  %v86 = vld [vmem:[%s1 + $0x8c] sm:$0xf]
  %v87 = vld [vmem:[%s1 + $0x90] sm:$0xf]
  %v88 = vld [vmem:[%s1 + $0x94] sm:$0xf]
  %v89 = vld [vmem:[%s1 + $0x98] sm:$0xf]
  %v90 = vld [vmem:[%s1 + $0x9c] sm:$0xf]
  %v91 = vld [vmem:[%s1 + $0xa0] sm:$0xf]
  %v92 = vld [vmem:[%s1 + $0xa4] sm:$0xf]
  %v93 = vld [vmem:[%s1 + $0xa8] sm:$0xf]
  %v94 = vld [vmem:[%s1 + $0xac] sm:$0xf]
  %v95 = vld [vmem:[%s1 + $0xb0] sm:$0xf]
  %v96 = vld [vmem:[%s1 + $0xb4] sm:$0xf]
  %v97 = vld [vmem:[%s1 + $0xb8] sm:$0xf]
  %v98 = vld [vmem:[%s1 + $0xbc] sm:$0xf]
  %v99 = vld [vmem:[%s1 + $0xc0] sm:$0xf]
  %v100 = vld [vmem:[%s1 + $0xc4] sm:$0xf]
  %v101 = vld [vmem:[%s1 + $0xc8] sm:$0xf]
  %v102 = vld [vmem:[%s1 + $0xcc] sm:$0xf]
  %v103 = vld [vmem:[%s1 + $0xd0] sm:$0xf]
  %v104 = vld [vmem:[%s1 + $0xd4] sm:$0xf]
  %v105 = vld [vmem:[%s1 + $0xd8] sm:$0xf]
  %v106 = vld [vmem:[%s1 + $0xdc] sm:$0xf]
  %v107 = vld [vmem:[%s1 + $0xe0] sm:$0xf]
  %v108 = vld [vmem:[%s1 + $0xe4] sm:$0xf]
  %v109 = vld [vmem:[%s1 + $0xe8] sm:$0xf]
  %v110 = vld [vmem:[%s1 + $0xec] sm:$0xf]
  %v111 = vld [vmem:[%s1 + $0xf0] sm:$0xf]
  %v112 = vld [vmem:[%s1 + $0xf4] sm:$0xf]
  %v113 = vld [vmem:[%s1 + $0xf8] sm:$0xf]
  %v114 = vld [vmem:[%s1 + $0xfc] sm:$0xf]
  %v147 = vunpack.c.l.b16 %v83
  %v148 = vunpack.c.l.b16 %v84
  %v149 = vunpack.c.l.b16 %v85
  %v150 = vunpack.c.l.b16 %v86
  %v151 = vunpack.c.l.b16 %v87
  %v152 = vunpack.c.l.b16 %v88
  %v153 = vunpack.c.l.b16 %v89
  %v154 = vunpack.c.l.b16 %v90
  %v155 = vunpack.c.l.b16 %v91
  %v156 = vunpack.c.l.b16 %v92
  %v157 = vunpack.c.l.b16 %v93
  %v158 = vunpack.c.l.b16 %v94
  %v159 = vunpack.c.l.b16 %v95
  %v160 = vunpack.c.l.b16 %v96
  %v161 = vunpack.c.l.b16 %v97
  %v162 = vunpack.c.l.b16 %v98
  %v163 = vunpack.c.l.b16 %v99
  %v164 = vunpack.c.l.b16 %v100
  %v165 = vunpack.c.l.b16 %v101
  %v166 = vunpack.c.l.b16 %v102
  %v167 = vunpack.c.l.b16 %v103
  %v168 = vunpack.c.l.b16 %v104
  %v169 = vunpack.c.l.b16 %v105
  %v170 = vunpack.c.l.b16 %v106
  %v171 = vunpack.c.l.b16 %v107
  %v172 = vunpack.c.l.b16 %v108
  %v173 = vunpack.c.l.b16 %v109
  %v174 = vunpack.c.l.b16 %v110
  %v175 = vunpack.c.l.b16 %v111
  %v176 = vunpack.c.l.b16 %v112
  %v177 = vunpack.c.l.b16 %v113
  %v178 = vunpack.c.l.b16 %v114
  %v179 = vpack.c.b16 %v148, %v147
  %v180 = vpack.c.b16 %v150, %v149
  %v181 = vpack.c.b16 %v152, %v151
  %v182 = vpack.c.b16 %v154, %v153
  %v183 = vpack.c.b16 %v156, %v155
  %v184 = vpack.c.b16 %v158, %v157
  %v185 = vpack.c.b16 %v160, %v159
  %v186 = vpack.c.b16 %v162, %v161
  %v187 = vpack.c.b16 %v164, %v163
  %v188 = vpack.c.b16 %v166, %v165
  %v189 = vpack.c.b16 %v168, %v167
  %v190 = vpack.c.b16 %v170, %v169
  %v191 = vpack.c.b16 %v172, %v171
  %v192 = vpack.c.b16 %v174, %v173
  %v193 = vpack.c.b16 %v176, %v175
  %v194 = vpack.c.b16 %v178, %v177
  %211 = vmatpush.bf16.msra.mxu0 %v186
  %212 = vmatpush.bf16.msra.mxu0 %v185
  %213 = vmatpush.bf16.msra.mxu0 %v184
  %214 = vmatpush.bf16.msra.mxu0 %v183
  %215 = vmatpush.bf16.msra.mxu0 %v182
  %216 = vmatpush.bf16.msra.mxu0 %v181
  %217 = vmatpush.bf16.msra.mxu0 %v180
  %218 = vmatpush.bf16.msra.mxu0 %v179
  %219 = vmatmul.bf16.gmra.mxu0 %v81
  %v220 = vpop.f32.mrf.mxu0
  %v221 = vadd.f32 0.0, %v220
  %v222 = vpop.f32.mrf.mxu0
  %v223 = vadd.f32 0.0, %v222
  %224 = vdwg.mxu0
  %225 = vmatpush.bf16.msra.mxu0 %v194
  %226 = vmatpush.bf16.msra.mxu0 %v193
  %227 = vmatpush.bf16.msra.mxu0 %v192
  %228 = vmatpush.bf16.msra.mxu0 %v191
  %229 = vmatpush.bf16.msra.mxu0 %v190
  %230 = vmatpush.bf16.msra.mxu0 %v189
  %231 = vmatpush.bf16.msra.mxu0 %v188
  %232 = vmatpush.bf16.msra.mxu0 %v187
  %233 = vmatmul.bf16.gmra.mxu0 %v82
  %v234 = vpop.f32.mrf.mxu0
  %v235 = vadd.f32 %v221, %v234
  %v236 = vpop.f32.mrf.mxu0
  %v237 = vadd.f32 %v223, %v236
  %238 = vdwg.mxu0
  %v271 = vunpack.c.l.b16 %v31
  %v272 = vunpack.c.l.b16 %v32
  %v273 = vunpack.c.l.b16 %v33
  %v274 = vunpack.c.l.b16 %v34
  %v275 = vunpack.c.l.b16 %v35
  %v276 = vunpack.c.l.b16 %v36
  %v277 = vunpack.c.l.b16 %v37
  %v278 = vunpack.c.l.b16 %v38
  %v279 = vunpack.c.l.b16 %v39
  %v280 = vunpack.c.l.b16 %v40
  %v281 = vunpack.c.l.b16 %v41
  %v282 = vunpack.c.l.b16 %v42
  %v283 = vunpack.c.l.b16 %v43
  %v284 = vunpack.c.l.b16 %v44
  %v285 = vunpack.c.l.b16 %v45
  %v286 = vunpack.c.l.b16 %v46
  %v287 = vunpack.c.l.b16 %v47
  %v288 = vunpack.c.l.b16 %v48
  %v289 = vunpack.c.l.b16 %v49
  %v290 = vunpack.c.l.b16 %v50
  %v291 = vunpack.c.l.b16 %v51
  %v292 = vunpack.c.l.b16 %v52
  %v293 = vunpack.c.l.b16 %v53
  %v294 = vunpack.c.l.b16 %v54
  %v295 = vunpack.c.l.b16 %v55
  %v296 = vunpack.c.l.b16 %v56
  %v297 = vunpack.c.l.b16 %v57
  %v298 = vunpack.c.l.b16 %v58
  %v299 = vunpack.c.l.b16 %v59
  %v300 = vunpack.c.l.b16 %v60
  %v301 = vunpack.c.l.b16 %v61
  %v302 = vunpack.c.l.b16 %v62
  %v303 = vpack.c.b16 %v272, %v271
  %v304 = vpack.c.b16 %v274, %v273
  %v305 = vpack.c.b16 %v276, %v275
  %v306 = vpack.c.b16 %v278, %v277
  %v307 = vpack.c.b16 %v280, %v279
  %v308 = vpack.c.b16 %v282, %v281
  %v309 = vpack.c.b16 %v284, %v283
  %v310 = vpack.c.b16 %v286, %v285
  %v311 = vpack.c.b16 %v288, %v287
  %v312 = vpack.c.b16 %v290, %v289
  %v313 = vpack.c.b16 %v292, %v291
  %v314 = vpack.c.b16 %v294, %v293
  %v315 = vpack.c.b16 %v296, %v295
  %v316 = vpack.c.b16 %v298, %v297
  %v317 = vpack.c.b16 %v300, %v299
  %v318 = vpack.c.b16 %v302, %v301
  %335 = vmatpush.bf16.msra.mxu0 %v310
  %336 = vmatpush.bf16.msra.mxu0 %v309
  %337 = vmatpush.bf16.msra.mxu0 %v308
  %338 = vmatpush.bf16.msra.mxu0 %v307
  %339 = vmatpush.bf16.msra.mxu0 %v306
  %340 = vmatpush.bf16.msra.mxu0 %v305
  %341 = vmatpush.bf16.msra.mxu0 %v304
  %342 = vmatpush.bf16.msra.mxu0 %v303
  %343 = vmatmul.bf16.gmra.mxu0 %v29
  %v344 = vpop.f32.mrf.mxu0
  %v345 = vadd.f32 %v235, %v344
  %v346 = vpop.f32.mrf.mxu0
  %v347 = vadd.f32 %v237, %v346
  %348 = vdwg.mxu0
  %349 = vmatpush.bf16.msra.mxu0 %v318
  %350 = vmatpush.bf16.msra.mxu0 %v317
  %351 = vmatpush.bf16.msra.mxu0 %v316
  %352 = vmatpush.bf16.msra.mxu0 %v315
  %353 = vmatpush.bf16.msra.mxu0 %v314
  %354 = vmatpush.bf16.msra.mxu0 %v313
  %355 = vmatpush.bf16.msra.mxu0 %v312
  %356 = vmatpush.bf16.msra.mxu0 %v311
  %357 = vmatmul.bf16.gmra.mxu0 %v30
  %v358 = vpop.f32.mrf.mxu0
  %v359 = vadd.f32 %v345, %v358
  %v360 = vpop.f32.mrf.mxu0
  %v361 = vadd.f32 %v347, %v360
  %362 = vdwg.mxu0
  %v363 = vld [vmem:[%s0 + $0x10] sm:$0xff]
  %v364 = vld [vmem:[%s0 + $0x30] sm:$0xff]
  %v365 = vunpack.c.l.bf16 %v363
  %v366 = vunpack.c.h.bf16 %v363
  %v367 = vunpack.c.l.bf16 %v364
  %v368 = vunpack.c.h.bf16 %v364
  %vm369 = vcmp.gt.f32.partialorder %v365, 0.0
  %vm370 = vcmp.gt.f32.partialorder %v366, 0.0
  %vm371 = vcmp.gt.f32.partialorder %v367, 0.0
  %vm372 = vcmp.gt.f32.partialorder %v368, 0.0
  %v373 = vmul.f32 %v365, 0.2
  %v374 = vmul.f32 %v366, 0.2
  %v375 = vmul.f32 %v367, 0.2
  %v376 = vmul.f32 %v368, 0.2
  %v377 = vsel %vm369, %v365, %v373
  %v378 = vsel %vm370, %v366, %v374
  %v379 = vsel %vm371, %v367, %v375
  %v380 = vsel %vm372, %v368, %v376
  %v381 = vpack.c.bf16 %v379, %v377
  %v382 = vpack.c.bf16 %v380, %v378
  %v383 = vld [vmem:[%s1 + $0x100] sm:$0xf]
  %v384 = vld [vmem:[%s1 + $0x104] sm:$0xf]
  %v385 = vld [vmem:[%s1 + $0x108] sm:$0xf]
  %v386 = vld [vmem:[%s1 + $0x10c] sm:$0xf]
  %v387 = vld [vmem:[%s1 + $0x110] sm:$0xf]
  %v388 = vld [vmem:[%s1 + $0x114] sm:$0xf]
  %v389 = vld [vmem:[%s1 + $0x118] sm:$0xf]
  %v390 = vld [vmem:[%s1 + $0x11c] sm:$0xf]
  %v391 = vld [vmem:[%s1 + $0x120] sm:$0xf]
  %v392 = vld [vmem:[%s1 + $0x124] sm:$0xf]
  %v393 = vld [vmem:[%s1 + $0x128] sm:$0xf]
  %v394 = vld [vmem:[%s1 + $0x12c] sm:$0xf]
  %v395 = vld [vmem:[%s1 + $0x130] sm:$0xf]
  %v396 = vld [vmem:[%s1 + $0x134] sm:$0xf]
  %v397 = vld [vmem:[%s1 + $0x138] sm:$0xf]
  %v398 = vld [vmem:[%s1 + $0x13c] sm:$0xf]
  %v399 = vld [vmem:[%s1 + $0x140] sm:$0xf]
  %v400 = vld [vmem:[%s1 + $0x144] sm:$0xf]
  %v401 = vld [vmem:[%s1 + $0x148] sm:$0xf]
  %v402 = vld [vmem:[%s1 + $0x14c] sm:$0xf]
  %v403 = vld [vmem:[%s1 + $0x150] sm:$0xf]
  %v404 = vld [vmem:[%s1 + $0x154] sm:$0xf]
  %v405 = vld [vmem:[%s1 + $0x158] sm:$0xf]
  %v406 = vld [vmem:[%s1 + $0x15c] sm:$0xf]
  %v407 = vld [vmem:[%s1 + $0x160] sm:$0xf]
  %v408 = vld [vmem:[%s1 + $0x164] sm:$0xf]
  %v409 = vld [vmem:[%s1 + $0x168] sm:$0xf]
  %v410 = vld [vmem:[%s1 + $0x16c] sm:$0xf]
  %v411 = vld [vmem:[%s1 + $0x170] sm:$0xf]
  %v412 = vld [vmem:[%s1 + $0x174] sm:$0xf]
  %v413 = vld [vmem:[%s1 + $0x178] sm:$0xf]
  %v414 = vld [vmem:[%s1 + $0x17c] sm:$0xf]
  %v447 = vunpack.c.l.b16 %v383
  %v448 = vunpack.c.l.b16 %v384
  %v449 = vunpack.c.l.b16 %v385
  %v450 = vunpack.c.l.b16 %v386
  %v451 = vunpack.c.l.b16 %v387
  %v452 = vunpack.c.l.b16 %v388
  %v453 = vunpack.c.l.b16 %v389
  %v454 = vunpack.c.l.b16 %v390
  %v455 = vunpack.c.l.b16 %v391
  %v456 = vunpack.c.l.b16 %v392
  %v457 = vunpack.c.l.b16 %v393
  %v458 = vunpack.c.l.b16 %v394
  %v459 = vunpack.c.l.b16 %v395
  %v460 = vunpack.c.l.b16 %v396
  %v461 = vunpack.c.l.b16 %v397
  %v462 = vunpack.c.l.b16 %v398
  %v463 = vunpack.c.l.b16 %v399
  %v464 = vunpack.c.l.b16 %v400
  %v465 = vunpack.c.l.b16 %v401
  %v466 = vunpack.c.l.b16 %v402
  %v467 = vunpack.c.l.b16 %v403
  %v468 = vunpack.c.l.b16 %v404
  %v469 = vunpack.c.l.b16 %v405
  %v470 = vunpack.c.l.b16 %v406
  %v471 = vunpack.c.l.b16 %v407
  %v472 = vunpack.c.l.b16 %v408
  %v473 = vunpack.c.l.b16 %v409
  %v474 = vunpack.c.l.b16 %v410
  %v475 = vunpack.c.l.b16 %v411
  %v476 = vunpack.c.l.b16 %v412
  %v477 = vunpack.c.l.b16 %v413
  %v478 = vunpack.c.l.b16 %v414
  %v479 = vpack.c.b16 %v448, %v447
  %v480 = vpack.c.b16 %v450, %v449
  %v481 = vpack.c.b16 %v452, %v451
  %v482 = vpack.c.b16 %v454, %v453
  %v483 = vpack.c.b16 %v456, %v455
  %v484 = vpack.c.b16 %v458, %v457
  %v485 = vpack.c.b16 %v460, %v459
  %v486 = vpack.c.b16 %v462, %v461
  %v487 = vpack.c.b16 %v464, %v463
  %v488 = vpack.c.b16 %v466, %v465
  %v489 = vpack.c.b16 %v468, %v467
  %v490 = vpack.c.b16 %v470, %v469
  %v491 = vpack.c.b16 %v472, %v471
  %v492 = vpack.c.b16 %v474, %v473
  %v493 = vpack.c.b16 %v476, %v475
  %v494 = vpack.c.b16 %v478, %v477
  %511 = vmatpush.bf16.msra.mxu0 %v486
  %512 = vmatpush.bf16.msra.mxu0 %v485
  %513 = vmatpush.bf16.msra.mxu0 %v484
  %514 = vmatpush.bf16.msra.mxu0 %v483
  %515 = vmatpush.bf16.msra.mxu0 %v482
  %516 = vmatpush.bf16.msra.mxu0 %v481
  %517 = vmatpush.bf16.msra.mxu0 %v480
  %518 = vmatpush.bf16.msra.mxu0 %v479
  %519 = vmatmul.bf16.gmra.mxu0 %v381
  %v520 = vpop.f32.mrf.mxu0
  %v521 = vadd.f32 0.0, %v520
  %v522 = vpop.f32.mrf.mxu0
  %v523 = vadd.f32 0.0, %v522
  %524 = vdwg.mxu0
  %525 = vmatpush.bf16.msra.mxu0 %v494
  %526 = vmatpush.bf16.msra.mxu0 %v493
  %527 = vmatpush.bf16.msra.mxu0 %v492
  %528 = vmatpush.bf16.msra.mxu0 %v491
  %529 = vmatpush.bf16.msra.mxu0 %v490
  %530 = vmatpush.bf16.msra.mxu0 %v489
  %531 = vmatpush.bf16.msra.mxu0 %v488
  %532 = vmatpush.bf16.msra.mxu0 %v487
  %533 = vmatmul.bf16.gmra.mxu0 %v382
  %v534 = vpop.f32.mrf.mxu0
  %v535 = vadd.f32 %v521, %v534
  %v536 = vpop.f32.mrf.mxu0
  %v537 = vadd.f32 %v523, %v536
  %538 = vdwg.mxu0
  %v539 = vadd.f32 %v359, %v535
  %v540 = vadd.f32 %v361, %v537
  %v541 = vld [vmem:[%s0 + $0x18] sm:$0xff]
  %v542 = vld [vmem:[%s0 + $0x38] sm:$0xff]
  %v543 = vunpack.c.l.bf16 %v541
  %v544 = vunpack.c.h.bf16 %v541
  %v545 = vunpack.c.l.bf16 %v542
  %v546 = vunpack.c.h.bf16 %v542
  %vm547 = vcmp.gt.f32.partialorder %v543, 0.0
  %vm548 = vcmp.gt.f32.partialorder %v544, 0.0
  %vm549 = vcmp.gt.f32.partialorder %v545, 0.0
  %vm550 = vcmp.gt.f32.partialorder %v546, 0.0
  %v551 = vmul.f32 %v543, 0.2
  %v552 = vmul.f32 %v544, 0.2
  %v553 = vmul.f32 %v545, 0.2
  %v554 = vmul.f32 %v546, 0.2
  %v555 = vsel %vm547, %v543, %v551
  %v556 = vsel %vm548, %v544, %v552
  %v557 = vsel %vm549, %v545, %v553
  %v558 = vsel %vm550, %v546, %v554
  %v559 = vpack.c.bf16 %v557, %v555
  %v560 = vpack.c.bf16 %v558, %v556
  %v561 = vld [vmem:[%s1 + $0x180] sm:$0xf]
  %v562 = vld [vmem:[%s1 + $0x184] sm:$0xf]
  %v563 = vld [vmem:[%s1 + $0x188] sm:$0xf]
  %v564 = vld [vmem:[%s1 + $0x18c] sm:$0xf]
  %v565 = vld [vmem:[%s1 + $0x190] sm:$0xf]
  %v566 = vld [vmem:[%s1 + $0x194] sm:$0xf]
  %v567 = vld [vmem:[%s1 + $0x198] sm:$0xf]
  %v568 = vld [vmem:[%s1 + $0x19c] sm:$0xf]
  %v569 = vld [vmem:[%s1 + $0x1a0] sm:$0xf]
  %v570 = vld [vmem:[%s1 + $0x1a4] sm:$0xf]
  %v571 = vld [vmem:[%s1 + $0x1a8] sm:$0xf]
  %v572 = vld [vmem:[%s1 + $0x1ac] sm:$0xf]
  %v573 = vld [vmem:[%s1 + $0x1b0] sm:$0xf]
  %v574 = vld [vmem:[%s1 + $0x1b4] sm:$0xf]
  %v575 = vld [vmem:[%s1 + $0x1b8] sm:$0xf]
  %v576 = vld [vmem:[%s1 + $0x1bc] sm:$0xf]
  %v577 = vld [vmem:[%s1 + $0x1c0] sm:$0xf]
  %v578 = vld [vmem:[%s1 + $0x1c4] sm:$0xf]
  %v579 = vld [vmem:[%s1 + $0x1c8] sm:$0xf]
  %v580 = vld [vmem:[%s1 + $0x1cc] sm:$0xf]
  %v581 = vld [vmem:[%s1 + $0x1d0] sm:$0xf]
  %v582 = vld [vmem:[%s1 + $0x1d4] sm:$0xf]
  %v583 = vld [vmem:[%s1 + $0x1d8] sm:$0xf]
  %v584 = vld [vmem:[%s1 + $0x1dc] sm:$0xf]
  %v585 = vld [vmem:[%s1 + $0x1e0] sm:$0xf]
  %v586 = vld [vmem:[%s1 + $0x1e4] sm:$0xf]
  %v587 = vld [vmem:[%s1 + $0x1e8] sm:$0xf]
  %v588 = vld [vmem:[%s1 + $0x1ec] sm:$0xf]
  %v589 = vld [vmem:[%s1 + $0x1f0] sm:$0xf]
  %v590 = vld [vmem:[%s1 + $0x1f4] sm:$0xf]
  %v591 = vld [vmem:[%s1 + $0x1f8] sm:$0xf]
  %v592 = vld [vmem:[%s1 + $0x1fc] sm:$0xf]
  %v625 = vunpack.c.l.b16 %v561
  %v626 = vunpack.c.l.b16 %v562
  %v627 = vunpack.c.l.b16 %v563
  %v628 = vunpack.c.l.b16 %v564
  %v629 = vunpack.c.l.b16 %v565
  %v630 = vunpack.c.l.b16 %v566
  %v631 = vunpack.c.l.b16 %v567
  %v632 = vunpack.c.l.b16 %v568
  %v633 = vunpack.c.l.b16 %v569
  %v634 = vunpack.c.l.b16 %v570
  %v635 = vunpack.c.l.b16 %v571
  %v636 = vunpack.c.l.b16 %v572
  %v637 = vunpack.c.l.b16 %v573
  %v638 = vunpack.c.l.b16 %v574
  %v639 = vunpack.c.l.b16 %v575
  %v640 = vunpack.c.l.b16 %v576
  %v641 = vunpack.c.l.b16 %v577
  %v642 = vunpack.c.l.b16 %v578
  %v643 = vunpack.c.l.b16 %v579
  %v644 = vunpack.c.l.b16 %v580
  %v645 = vunpack.c.l.b16 %v581
  %v646 = vunpack.c.l.b16 %v582
  %v647 = vunpack.c.l.b16 %v583
  %v648 = vunpack.c.l.b16 %v584
  %v649 = vunpack.c.l.b16 %v585
  %v650 = vunpack.c.l.b16 %v586
  %v651 = vunpack.c.l.b16 %v587
  %v652 = vunpack.c.l.b16 %v588
  %v653 = vunpack.c.l.b16 %v589
  %v654 = vunpack.c.l.b16 %v590
  %v655 = vunpack.c.l.b16 %v591
  %v656 = vunpack.c.l.b16 %v592
  %v657 = vpack.c.b16 %v626, %v625
  %v658 = vpack.c.b16 %v628, %v627
  %v659 = vpack.c.b16 %v630, %v629
  %v660 = vpack.c.b16 %v632, %v631
  %v661 = vpack.c.b16 %v634, %v633
  %v662 = vpack.c.b16 %v636, %v635
  %v663 = vpack.c.b16 %v638, %v637
  %v664 = vpack.c.b16 %v640, %v639
  %v665 = vpack.c.b16 %v642, %v641
  %v666 = vpack.c.b16 %v644, %v643
  %v667 = vpack.c.b16 %v646, %v645
  %v668 = vpack.c.b16 %v648, %v647
  %v669 = vpack.c.b16 %v650, %v649
  %v670 = vpack.c.b16 %v652, %v651
  %v671 = vpack.c.b16 %v654, %v653
  %v672 = vpack.c.b16 %v656, %v655
  %689 = vmatpush.bf16.msra.mxu0 %v664
  %690 = vmatpush.bf16.msra.mxu0 %v663
  %691 = vmatpush.bf16.msra.mxu0 %v662
  %692 = vmatpush.bf16.msra.mxu0 %v661
  %693 = vmatpush.bf16.msra.mxu0 %v660
  %694 = vmatpush.bf16.msra.mxu0 %v659
  %695 = vmatpush.bf16.msra.mxu0 %v658
  %696 = vmatpush.bf16.msra.mxu0 %v657
  %697 = vmatmul.bf16.gmra.mxu0 %v559
  %v698 = vpop.f32.mrf.mxu0
  %v699 = vadd.f32 0.0, %v698
  %v700 = vpop.f32.mrf.mxu0
  %v701 = vadd.f32 0.0, %v700
  %702 = vdwg.mxu0
  %703 = vmatpush.bf16.msra.mxu0 %v672
  %704 = vmatpush.bf16.msra.mxu0 %v671
  %705 = vmatpush.bf16.msra.mxu0 %v670
  %706 = vmatpush.bf16.msra.mxu0 %v669
  %707 = vmatpush.bf16.msra.mxu0 %v668
  %708 = vmatpush.bf16.msra.mxu0 %v667
  %709 = vmatpush.bf16.msra.mxu0 %v666
  %710 = vmatpush.bf16.msra.mxu0 %v665
  %711 = vmatmul.bf16.gmra.mxu0 %v560
  %v712 = vpop.f32.mrf.mxu0
  %v713 = vadd.f32 %v699, %v712
  %v714 = vpop.f32.mrf.mxu0
  %v715 = vadd.f32 %v701, %v714
  %716 = vdwg.mxu0
  %v717 = vadd.f32 %v539, %v713
  %v718 = vadd.f32 %v540, %v715
  %v719 = vxor.u32 %v717, 2147483648
  %v720 = vxor.u32 %v718, 2147483648
  %v721 = vmul.f32 %v719, 1.442695
  %v722 = vpow.pop %v721
  %v723 = vmul.f32 %v720, 1.442695
  %v724 = vpow.pop %v723
  %v725 = vadd.f32 %v722, 1.0
  %v726 = vadd.f32 %v724, 1.0
  %v727 = vrcp.pop %v725
  %v728 = vmul.f32 %v725, %v727
  %v729 = vsub.f32 1.0, %v728
  %v730 = vmul.f32 %v727, %v729
  %v731 = vadd.f32 %v727, %v730
  %vm732 = vweird.f32 %v725
  %vm733 = vweird.f32 %v727
  %vm734 = vmor %vm732, %vm733
  %v735 = vsel %vm734, %v727, %v731
  %v736 = vand.u32 2147483647, %v725
  %vm737 = vcmp.eq.f32.partialorder %v736, 8.507059e+37
  %v738 = vand.u32 %v725, 2147483648
  %v739 = vor.u32 1.1754944e-38, %v738
  %v740 = vsel %vm737, %v739, %v735
  %v741 = vmul.f32 1.0, %v740
  %v742 = vrcp.pop %v726
  %v743 = vmul.f32 %v726, %v742
  %v744 = vsub.f32 1.0, %v743
  %v745 = vmul.f32 %v742, %v744
  %v746 = vadd.f32 %v742, %v745
  %vm747 = vweird.f32 %v726
  %vm748 = vweird.f32 %v742
  %vm749 = vmor %vm747, %vm748
  %v750 = vsel %vm749, %v742, %v746
  %v751 = vand.u32 2147483647, %v726
  %vm752 = vcmp.eq.f32.partialorder %v751, 8.507059e+37
  %v753 = vand.u32 %v726, 2147483648
  %v754 = vor.u32 1.1754944e-38, %v753
  %v755 = vsel %vm752, %v754, %v750
  %v756 = vmul.f32 1.0, %v755
  %757 = vst [vmem:[%s2] sm:$0xff] %v741
  %758 = vst [vmem:[%s2 + $0x8] sm:$0xff] %v756
  // Predicated region
  $region10: #{discriminator_forward.9} parent=0 // pred_check
    _
  $region11: #{discriminator_forward.9} parent=0 // pred_check_branch
    %760 = sbr.rel (0) target = $region13
  $region12: #{discriminator_forward.9} parent=0 // pred_region
    _
  $region13: #{discriminator_forward.9} parent=0 // pred_fallthru
    _
  // Predicated region
  $region14: #{discriminator_forward.9} parent=0 // pred_check
    _
  $region15: #{discriminator_forward.9} parent=0 // pred_check_branch
    %762 = sbr.rel (0) target = $region17
  $region16: #{discriminator_forward.9} parent=0 // pred_region
    _
  $region17: #{discriminator_forward.9} parent=0 // pred_fallthru
    _

</llo_original>
